<compile_context>
chip_gen: v7x
topology: tpu7x:2x2x1
jax: 0.10.0
libtpu: 0.0.40
codegen_flags: <defaults>
</compile_context>

<pallas_src>
import functools
import math

import numpy as np
import jax
import jax.numpy as jnp
from jax import lax
from jax.experimental import pallas as pl
from jax.experimental.pallas import tpu as pltpu


# Parity combination matrix A[parity, effective_tap(2), original_tap(3)]:
#   parity 0: eff tap 0 = w0, eff tap 1 = w1 + w2
#   parity 1: eff tap 0 = w0 + w1, eff tap 1 = w2
_PARITY_COMBINE = np.array(
    [[[1.0, 0.0, 0.0],
      [0.0, 1.0, 1.0]],
     [[1.0, 1.0, 0.0],
      [0.0, 0.0, 1.0]]],
    dtype=np.float32)


def _pick_row_tile(h, w, max_tile_elems=4096):
    """Largest divisor S of h with S*w <= max_tile_elems and (S*w) % 8 == 0 (or S == h)."""
    for s in range(h, 0, -1):
        if h % s:
            continue
        if s * w > max_tile_elems and s != 1:
            continue
        if (s * w) % 8 and s != h:
            continue
        return s
    return h


# ----------------------------------------------------------------------------
# Kernels
# ----------------------------------------------------------------------------

def _upsample_conv3x3_kernel(xp_ref, w_ref, b_ref, o_ref, *, src_rows, src_cols):
    """One (batch, row-tile) grid step of the fused nearest-2x upsample + 3x3 conv.

    xp_ref : (1, H+2, W+2, Cin)  zero-padded source (bf16); VMEM-resident across row tiles
    w_ref  : (16, Cin, Cout)     parity-combined 2x2 effective weights (bf16)
    b_ref  : (1, Cout)           bias (f32)
    o_ref  : (1, 4, S*W, Cout)   output tile, parity-major (axis 1 = py*2 + px)
    """
    S, W = src_rows, src_cols
    cin = xp_ref.shape[-1]
    cout = o_ref.shape[-1]

    r = pl.program_id(1)
    i0 = r * S                                # first padded-source row of this tile

    # Single dynamic-sliced load of the S+2 source rows this tile needs; every shifted
    # view below is a static slice of this VMEM value (no HBM re-reads, no im2col).
    rows = xp_ref[0, pl.ds(i0, S + 2)]        # (S+2, W+2, Cin)

    bias = b_ref[...].astype(jnp.float32)     # (1, Cout)

    # f32 register accumulators, one per output-pixel parity (py, px).
    acc = {(py, px): jnp.zeros((S * W, cout), jnp.float32)
           for py in (0, 1) for px in (0, 1)}

    # Statically unrolled reduction over the 16 effective taps (bf16 x bf16 -> f32 MXU dots).
    for a in range(3):                        # source-row offset
        band = rows[a:a + S]                  # (S, W+2, Cin)
        for b in range(3):                    # source-col offset
            xs = band[:, b:b + W, :].reshape(S * W, cin)     # (S*W, Cin), bf16
            for py in (0, 1):
                ry = a - py
                if ry not in (0, 1):
                    continue
                for px in (0, 1):
                    rx = b - px
                    if rx not in (0, 1):
                        continue
                    widx = ((py * 2 + px) * 2 + ry) * 2 + rx
                    acc[(py, px)] = acc[(py, px)] + jnp.dot(
                        xs, w_ref[widx], preferred_element_type=jnp.float32)

    for py in (0, 1):
        for px in (0, 1):
            p = py * 2 + px
            o_ref[0, p, :, :] = (acc[(py, px)] + bias).astype(o_ref.dtype)


def _nearest2x_kernel(x_ref, o_ref):
    """Nearest-2x upsample only (with_conv=False): each source pixel feeds all 4 parities."""
    c = x_ref.shape[-1]
    v = x_ref[0].reshape(-1, c)               # (S*W, C)
    for p in range(4):
        o_ref[0, p, :, :] = v.astype(o_ref.dtype)


# ----------------------------------------------------------------------------
# Wrappers
# ----------------------------------------------------------------------------

def _parity_major_to_nchw(out, B, H, W, C):
    """(B, 4, H*W, C) parity-major -> (B, C, 2H, 2W).  The parity interleave is fused into
    the NHWC->NCHW transpose that the PyTorch interface needs anyway (single XLA pass)."""
    out = out.reshape(B, 2, 2, H, W, C)                       # (b, py, px, i, j, c)
    out = jnp.transpose(out, (0, 5, 3, 1, 4, 2))              # (b, c, i, py, j, px)
    return out.reshape(B, C, 2 * H, 2 * W)


def upsample_nearest2x_conv3x3(x_nchw, w_oihw, bias, *, row_tile=None,
                               compute_dtype=jnp.bfloat16):
    B, C, H, W = x_nchw.shape
    cout = w_oihw.shape[0]
    S = row_tile if row_tile is not None else _pick_row_tile(H, W)
    assert H % S == 0, (H, S)

    # NCHW -> NHWC, zero-pad by 1 on the *source* grid (padded upsampled pixel (y, x) is
    # padded source pixel ((y+1)//2, (x+1)//2)), cast to bf16 for the MXU.
    x_nhwc = jnp.transpose(x_nchw, (0, 2, 3, 1))
    xp = jnp.pad(x_nhwc, ((0, 0), (1, 1), (1, 1), (0, 0))).astype(compute_dtype)

    # Parity-combined 2x2 effective weights (tiny, computed once per call in plain JAX).
    a = jnp.asarray(_PARITY_COMBINE)                                   # (2, 2, 3)
    w_hwio = jnp.transpose(w_oihw, (2, 3, 1, 0)).astype(jnp.float32)   # (3, 3, Cin, Cout)
    w_eff = jnp.einsum("prd,qse,deio->pqrsio", a, a, w_hwio)           # (2,2,2,2,Cin,Cout)
    w_eff = w_eff.reshape(16, C, cout).astype(compute_dtype)
    bias2 = bias.reshape(1, cout).astype(jnp.float32)

    grid = (B, H // S)
    out = pl.pallas_call(
        functools.partial(_upsample_conv3x3_kernel, src_rows=S, src_cols=W),
        grid=grid,
        in_specs=[
            # Padded source: DMA'd once per batch element; index_map ignores the row-tile
            # index so the block stays resident in VMEM across all row tiles.
            pl.BlockSpec((1, H + 2, W + 2, C), lambda b, r: (b, 0, 0, 0)),
            pl.BlockSpec((16, C, cout), lambda b, r: (0, 0, 0)),
            pl.BlockSpec((1, cout), lambda b, r: (0, 0)),
        ],
        out_specs=pl.BlockSpec((1, 4, S * W, cout), lambda b, r: (b, 0, r, 0)),
        out_shape=jax.ShapeDtypeStruct((B, 4, H * W, cout), jnp.float32),
        compiler_params=pltpu.CompilerParams(
            dimension_semantics=("parallel", "arbitrary")),
    )(xp, w_eff, bias2)

    return _parity_major_to_nchw(out, B, H, W, cout)


def upsample_nearest2x(x_nchw, *, row_tile=None):
    B, C, H, W = x_nchw.shape
    S = row_tile if row_tile is not None else _pick_row_tile(H, W)
    assert H % S == 0, (H, S)
    x_nhwc = jnp.transpose(x_nchw, (0, 2, 3, 1))
    out = pl.pallas_call(
        _nearest2x_kernel,
        grid=(B, H // S),
        in_specs=[pl.BlockSpec((1, S, W, C), lambda b, r: (b, r, 0, 0))],
        out_specs=pl.BlockSpec((1, 4, S * W, C), lambda b, r: (b, 0, r, 0)),
        out_shape=jax.ShapeDtypeStruct((B, 4, H * W, C), x_nchw.dtype),
        compiler_params=pltpu.CompilerParams(
            dimension_semantics=("parallel", "parallel")),
    )(x_nhwc)
    return _parity_major_to_nchw(out, B, H, W, C)


@functools.partial(jax.jit, static_argnames=("with_conv", "row_tile", "compute_dtype"))
def upsample_forward(params, x_nchw, *, with_conv=True, row_tile=None,
                     compute_dtype=jnp.bfloat16):
    """Forward pass of the PyTorch `Upsample` module: nearest 2x upsample + optional 3x3 conv."""
    if with_conv:
        return upsample_nearest2x_conv3x3(
            x_nchw, params["conv_w"], params["conv_b"],
            row_tile=row_tile, compute_dtype=compute_dtype)
    return upsample_nearest2x(x_nchw, row_tile=row_tile)


# ----------------------------------------------------------------------------
# Parameter init (mirrors torch.nn.Conv2d default init) and a pure-JAX reference
# ----------------------------------------------------------------------------

def init_upsample_params(key, in_channels, with_conv=True):
    if not with_conv:
        return {}
    k_w, k_b = jax.random.split(key)
    fan_in = in_channels * 3 * 3
    lim = 1.0 / math.sqrt(fan_in)
    w = jax.random.uniform(k_w, (in_channels, in_channels, 3, 3), jnp.float32, -lim, lim)
    b = jax.random.uniform(k_b, (in_channels,), jnp.float32, -lim, lim)
    return {"conv_w": w, "conv_b": b}      # torch OIHW layout


def reference_upsample_conv(x_nchw, w_oihw, bias):
    """f32 reference matching torch: F.interpolate(scale=2, nearest) -> Conv2d(3x3, pad=1)."""
    x = jnp.transpose(x_nchw, (0, 2, 3, 1)).astype(jnp.float32)
    up = jnp.repeat(jnp.repeat(x, 2, axis=1), 2, axis=2)
    w = jnp.transpose(w_oihw, (2, 3, 1, 0)).astype(jnp.float32)
    y = lax.conv_general_dilated(
        up, w, window_strides=(1, 1), padding=((1, 1), (1, 1)),
        dimension_numbers=("NHWC", "HWIO", "NHWC"),
        precision=lax.Precision.HIGHEST)
    y = y + bias.reshape(1, 1, 1, -1)
    return jnp.transpose(y, (0, 3, 1, 2))


# ----------------------------------------------------------------------------
# main
# ----------------------------------------------------------------------------

if __name__ == "__main__":
    B, C, H, W = 2, 4, 16, 16
    key = jax.random.PRNGKey(0)
    k_x, k_p = jax.random.split(key)
    x = jax.random.normal(k_x, (B, C, H, W), jnp.float32)
    params = init_upsample_params(k_p, C, with_conv=True)

    # with_conv=True (the configuration the diffusion UNet uses)
    out = upsample_forward(params, x, with_conv=True, row_tile=8)
    out = jax.block_until_ready(out)
    assert out.shape == (B, C, 2 * H, 2 * W), out.shape
    assert bool(jnp.all(jnp.isfinite(out)))
    ref = reference_upsample_conv(x, params["conv_w"], params["conv_b"])
    # tolerance covers bf16 rounding of the MXU operands (accumulation is f32)
    np.testing.assert_allclose(np.asarray(out), np.asarray(ref), rtol=5e-2, atol=5e-2)

    # with_conv=False (pure nearest upsample) -- exact
    out_nc = jax.block_until_ready(upsample_forward({}, x, with_conv=False, row_tile=8))
    ref_nc = jnp.repeat(jnp.repeat(x, 2, axis=2), 2, axis=3)
    np.testing.assert_allclose(np.asarray(out_nc), np.asarray(ref_nc), rtol=1e-6, atol=1e-6)

    print("KERNEL_OK")
</pallas_src>

<mosaic_0001>
module attributes {stable_mosaic.version = 11 : i64} {
  func.func @_upsample_conv3x3_kernel(%arg0: i32, %arg1: i32, %arg2: memref<1x18x18x4xbf16, #tpu.memory_space<vmem>>, %arg3: memref<16x4x4xbf16, #tpu.memory_space<vmem>>, %arg4: memref<1x4xf32, #tpu.memory_space<vmem>>, %arg5: memref<1x4x128x4xf32, #tpu.memory_space<vmem>>) attributes {dimension_semantics = [#tpu.dimension_semantics<parallel>, #tpu.dimension_semantics<arbitrary>], iteration_bounds = array<i64: 2, 2>, scalar_prefetch = 0 : i64, scratch_operands = 0 : i64, tpu.core_type = #tpu.core_type<tc>, window_params = [{transform_indices = @transform_0, window_bounds = array<i64: 1, 18, 18, 4>}, {pipeline_mode = #tpu.pipeline_mode<synchronous>, transform_indices = @transform_1, window_bounds = array<i64: 16, 4, 4>}, {pipeline_mode = #tpu.pipeline_mode<synchronous>, transform_indices = @transform_2, window_bounds = array<i64: 1, 4>}, {transform_indices = @transform_3, window_bounds = array<i64: 1, 4, 128, 4>}]} {
    %c8_i32 = arith.constant 8 : i32
    %0 = arith.muli %arg1, %c8_i32 : i32
    %c0 = arith.constant 0 : index
    %1 = arith.index_cast %0 : i32 to index
    %c0_0 = arith.constant 0 : index
    %c0_1 = arith.constant 0 : index
    %2 = vector.load %arg2[%c0, %1, %c0_0, %c0_1] : memref<1x18x18x4xbf16, #tpu.memory_space<vmem>>, vector<1x10x18x4xbf16>
    %3 = vector.shape_cast %2 : vector<1x10x18x4xbf16> to vector<10x18x4xbf16>
    %c0_2 = arith.constant 0 : index
    %c0_3 = arith.constant 0 : index
    %4 = vector.load %arg4[%c0_2, %c0_3] : memref<1x4xf32, #tpu.memory_space<vmem>>, vector<1x4xf32>
    %cst = arith.constant 0.000000e+00 : f32
    %5 = vector.broadcast %cst : f32 to vector<128x4xf32>
    %cst_4 = arith.constant 0.000000e+00 : f32
    %6 = vector.broadcast %cst_4 : f32 to vector<128x4xf32>
    %cst_5 = arith.constant 0.000000e+00 : f32
    %7 = vector.broadcast %cst_5 : f32 to vector<128x4xf32>
    %cst_6 = arith.constant 0.000000e+00 : f32
    %8 = vector.broadcast %cst_6 : f32 to vector<128x4xf32>
    %9 = vector.extract_strided_slice %3 {offsets = [0, 0, 0], sizes = [8, 18, 4], strides = [1, 1, 1]} : vector<10x18x4xbf16> to vector<8x18x4xbf16>
    %10 = vector.extract_strided_slice %9 {offsets = [0, 0, 0], sizes = [8, 16, 4], strides = [1, 1, 1]} : vector<8x18x4xbf16> to vector<8x16x4xbf16>
    %11 = vector.shape_cast %10 : vector<8x16x4xbf16> to vector<128x4xbf16>
    %c0_7 = arith.constant 0 : index
    %c0_8 = arith.constant 0 : index
    %c0_9 = arith.constant 0 : index
    %12 = vector.load %arg3[%c0_7, %c0_8, %c0_9] : memref<16x4x4xbf16, #tpu.memory_space<vmem>>, vector<1x4x4xbf16>
    %13 = vector.shape_cast %12 : vector<1x4x4xbf16> to vector<4x4xbf16>
    %cst_10 = arith.constant dense<0.000000e+00> : vector<128x4xf32>
    %14 = tpu.matmul %11, %13, %cst_10 {dimension_numbers = #tpu.dot_dimension_numbers<[1], [0], [0], [1], [0, 0, 1, 1], [], []>} : vector<128x4xbf16>, vector<4x4xbf16>, vector<128x4xf32> -> vector<128x4xf32>
    %15 = arith.addf %5, %14 : vector<128x4xf32>
    %16 = vector.extract_strided_slice %9 {offsets = [0, 1, 0], sizes = [8, 16, 4], strides = [1, 1, 1]} : vector<8x18x4xbf16> to vector<8x16x4xbf16>
    %17 = vector.shape_cast %16 : vector<8x16x4xbf16> to vector<128x4xbf16>
    %c1 = arith.constant 1 : index
    %c0_11 = arith.constant 0 : index
    %c0_12 = arith.constant 0 : index
    %18 = vector.load %arg3[%c1, %c0_11, %c0_12] : memref<16x4x4xbf16, #tpu.memory_space<vmem>>, vector<1x4x4xbf16>
    %19 = vector.shape_cast %18 : vector<1x4x4xbf16> to vector<4x4xbf16>
    %cst_13 = arith.constant dense<0.000000e+00> : vector<128x4xf32>
    %20 = tpu.matmul %17, %19, %cst_13 {dimension_numbers = #tpu.dot_dimension_numbers<[1], [0], [0], [1], [0, 0, 1, 1], [], []>} : vector<128x4xbf16>, vector<4x4xbf16>, vector<128x4xf32> -> vector<128x4xf32>
    %21 = arith.addf %15, %20 : vector<128x4xf32>
    %c4 = arith.constant 4 : index
    %c0_14 = arith.constant 0 : index
    %c0_15 = arith.constant 0 : index
    %22 = vector.load %arg3[%c4, %c0_14, %c0_15] : memref<16x4x4xbf16, #tpu.memory_space<vmem>>, vector<1x4x4xbf16>
    %23 = vector.shape_cast %22 : vector<1x4x4xbf16> to vector<4x4xbf16>
    %cst_16 = arith.constant dense<0.000000e+00> : vector<128x4xf32>
    %24 = tpu.matmul %17, %23, %cst_16 {dimension_numbers = #tpu.dot_dimension_numbers<[1], [0], [0], [1], [0, 0, 1, 1], [], []>} : vector<128x4xbf16>, vector<4x4xbf16>, vector<128x4xf32> -> vector<128x4xf32>
    %25 = arith.addf %6, %24 : vector<128x4xf32>
    %26 = vector.extract_strided_slice %9 {offsets = [0, 2, 0], sizes = [8, 16, 4], strides = [1, 1, 1]} : vector<8x18x4xbf16> to vector<8x16x4xbf16>
    %27 = vector.shape_cast %26 : vector<8x16x4xbf16> to vector<128x4xbf16>
    %c5 = arith.constant 5 : index
    %c0_17 = arith.constant 0 : index
    %c0_18 = arith.constant 0 : index
    %28 = vector.load %arg3[%c5, %c0_17, %c0_18] : memref<16x4x4xbf16, #tpu.memory_space<vmem>>, vector<1x4x4xbf16>
    %29 = vector.shape_cast %28 : vector<1x4x4xbf16> to vector<4x4xbf16>
    %cst_19 = arith.constant dense<0.000000e+00> : vector<128x4xf32>
    %30 = tpu.matmul %27, %29, %cst_19 {dimension_numbers = #tpu.dot_dimension_numbers<[1], [0], [0], [1], [0, 0, 1, 1], [], []>} : vector<128x4xbf16>, vector<4x4xbf16>, vector<128x4xf32> -> vector<128x4xf32>
    %31 = arith.addf %25, %30 : vector<128x4xf32>
    %32 = vector.extract_strided_slice %3 {offsets = [1, 0, 0], sizes = [8, 18, 4], strides = [1, 1, 1]} : vector<10x18x4xbf16> to vector<8x18x4xbf16>
    %33 = vector.extract_strided_slice %32 {offsets = [0, 0, 0], sizes = [8, 16, 4], strides = [1, 1, 1]} : vector<8x18x4xbf16> to vector<8x16x4xbf16>
    %34 = vector.shape_cast %33 : vector<8x16x4xbf16> to vector<128x4xbf16>
    %c2 = arith.constant 2 : index
    %c0_20 = arith.constant 0 : index
    %c0_21 = arith.constant 0 : index
    %35 = vector.load %arg3[%c2, %c0_20, %c0_21] : memref<16x4x4xbf16, #tpu.memory_space<vmem>>, vector<1x4x4xbf16>
    %36 = vector.shape_cast %35 : vector<1x4x4xbf16> to vector<4x4xbf16>
    %cst_22 = arith.constant dense<0.000000e+00> : vector<128x4xf32>
    %37 = tpu.matmul %34, %36, %cst_22 {dimension_numbers = #tpu.dot_dimension_numbers<[1], [0], [0], [1], [0, 0, 1, 1], [], []>} : vector<128x4xbf16>, vector<4x4xbf16>, vector<128x4xf32> -> vector<128x4xf32>
    %38 = arith.addf %21, %37 : vector<128x4xf32>
    %c8 = arith.constant 8 : index
    %c0_23 = arith.constant 0 : index
    %c0_24 = arith.constant 0 : index
    %39 = vector.load %arg3[%c8, %c0_23, %c0_24] : memref<16x4x4xbf16, #tpu.memory_space<vmem>>, vector<1x4x4xbf16>
    %40 = vector.shape_cast %39 : vector<1x4x4xbf16> to vector<4x4xbf16>
    %cst_25 = arith.constant dense<0.000000e+00> : vector<128x4xf32>
    %41 = tpu.matmul %34, %40, %cst_25 {dimension_numbers = #tpu.dot_dimension_numbers<[1], [0], [0], [1], [0, 0, 1, 1], [], []>} : vector<128x4xbf16>, vector<4x4xbf16>, vector<128x4xf32> -> vector<128x4xf32>
    %42 = arith.addf %7, %41 : vector<128x4xf32>
    %43 = vector.extract_strided_slice %32 {offsets = [0, 1, 0], sizes = [8, 16, 4], strides = [1, 1, 1]} : vector<8x18x4xbf16> to vector<8x16x4xbf16>
    %44 = vector.shape_cast %43 : vector<8x16x4xbf16> to vector<128x4xbf16>
    %c3 = arith.constant 3 : index
    %c0_26 = arith.constant 0 : index
    %c0_27 = arith.constant 0 : index
    %45 = vector.load %arg3[%c3, %c0_26, %c0_27] : memref<16x4x4xbf16, #tpu.memory_space<vmem>>, vector<1x4x4xbf16>
    %46 = vector.shape_cast %45 : vector<1x4x4xbf16> to vector<4x4xbf16>
    %cst_28 = arith.constant dense<0.000000e+00> : vector<128x4xf32>
    %47 = tpu.matmul %44, %46, %cst_28 {dimension_numbers = #tpu.dot_dimension_numbers<[1], [0], [0], [1], [0, 0, 1, 1], [], []>} : vector<128x4xbf16>, vector<4x4xbf16>, vector<128x4xf32> -> vector<128x4xf32>
    %48 = arith.addf %38, %47 : vector<128x4xf32>
    %c6 = arith.constant 6 : index
    %c0_29 = arith.constant 0 : index
    %c0_30 = arith.constant 0 : index
    %49 = vector.load %arg3[%c6, %c0_29, %c0_30] : memref<16x4x4xbf16, #tpu.memory_space<vmem>>, vector<1x4x4xbf16>
    %50 = vector.shape_cast %49 : vector<1x4x4xbf16> to vector<4x4xbf16>
    %cst_31 = arith.constant dense<0.000000e+00> : vector<128x4xf32>
    %51 = tpu.matmul %44, %50, %cst_31 {dimension_numbers = #tpu.dot_dimension_numbers<[1], [0], [0], [1], [0, 0, 1, 1], [], []>} : vector<128x4xbf16>, vector<4x4xbf16>, vector<128x4xf32> -> vector<128x4xf32>
    %52 = arith.addf %31, %51 : vector<128x4xf32>
    %c9 = arith.constant 9 : index
    %c0_32 = arith.constant 0 : index
    %c0_33 = arith.constant 0 : index
    %53 = vector.load %arg3[%c9, %c0_32, %c0_33] : memref<16x4x4xbf16, #tpu.memory_space<vmem>>, vector<1x4x4xbf16>
    %54 = vector.shape_cast %53 : vector<1x4x4xbf16> to vector<4x4xbf16>
    %cst_34 = arith.constant dense<0.000000e+00> : vector<128x4xf32>
    %55 = tpu.matmul %44, %54, %cst_34 {dimension_numbers = #tpu.dot_dimension_numbers<[1], [0], [0], [1], [0, 0, 1, 1], [], []>} : vector<128x4xbf16>, vector<4x4xbf16>, vector<128x4xf32> -> vector<128x4xf32>
    %56 = arith.addf %42, %55 : vector<128x4xf32>
    %c12 = arith.constant 12 : index
    %c0_35 = arith.constant 0 : index
    %c0_36 = arith.constant 0 : index
    %57 = vector.load %arg3[%c12, %c0_35, %c0_36] : memref<16x4x4xbf16, #tpu.memory_space<vmem>>, vector<1x4x4xbf16>
    %58 = vector.shape_cast %57 : vector<1x4x4xbf16> to vector<4x4xbf16>
    %cst_37 = arith.constant dense<0.000000e+00> : vector<128x4xf32>
    %59 = tpu.matmul %44, %58, %cst_37 {dimension_numbers = #tpu.dot_dimension_numbers<[1], [0], [0], [1], [0, 0, 1, 1], [], []>} : vector<128x4xbf16>, vector<4x4xbf16>, vector<128x4xf32> -> vector<128x4xf32>
    %60 = arith.addf %8, %59 : vector<128x4xf32>
    %61 = vector.extract_strided_slice %32 {offsets = [0, 2, 0], sizes = [8, 16, 4], strides = [1, 1, 1]} : vector<8x18x4xbf16> to vector<8x16x4xbf16>
    %62 = vector.shape_cast %61 : vector<8x16x4xbf16> to vector<128x4xbf16>
    %c7 = arith.constant 7 : index
    %c0_38 = arith.constant 0 : index
    %c0_39 = arith.constant 0 : index
    %63 = vector.load %arg3[%c7, %c0_38, %c0_39] : memref<16x4x4xbf16, #tpu.memory_space<vmem>>, vector<1x4x4xbf16>
    %64 = vector.shape_cast %63 : vector<1x4x4xbf16> to vector<4x4xbf16>
    %cst_40 = arith.constant dense<0.000000e+00> : vector<128x4xf32>
    %65 = tpu.matmul %62, %64, %cst_40 {dimension_numbers = #tpu.dot_dimension_numbers<[1], [0], [0], [1], [0, 0, 1, 1], [], []>} : vector<128x4xbf16>, vector<4x4xbf16>, vector<128x4xf32> -> vector<128x4xf32>
    %66 = arith.addf %52, %65 : vector<128x4xf32>
    %c13 = arith.constant 13 : index
    %c0_41 = arith.constant 0 : index
    %c0_42 = arith.constant 0 : index
    %67 = vector.load %arg3[%c13, %c0_41, %c0_42] : memref<16x4x4xbf16, #tpu.memory_space<vmem>>, vector<1x4x4xbf16>
    %68 = vector.shape_cast %67 : vector<1x4x4xbf16> to vector<4x4xbf16>
    %cst_43 = arith.constant dense<0.000000e+00> : vector<128x4xf32>
    %69 = tpu.matmul %62, %68, %cst_43 {dimension_numbers = #tpu.dot_dimension_numbers<[1], [0], [0], [1], [0, 0, 1, 1], [], []>} : vector<128x4xbf16>, vector<4x4xbf16>, vector<128x4xf32> -> vector<128x4xf32>
    %70 = arith.addf %60, %69 : vector<128x4xf32>
    %71 = vector.extract_strided_slice %3 {offsets = [2, 0, 0], sizes = [8, 18, 4], strides = [1, 1, 1]} : vector<10x18x4xbf16> to vector<8x18x4xbf16>
    %72 = vector.extract_strided_slice %71 {offsets = [0, 0, 0], sizes = [8, 16, 4], strides = [1, 1, 1]} : vector<8x18x4xbf16> to vector<8x16x4xbf16>
    %73 = vector.shape_cast %72 : vector<8x16x4xbf16> to vector<128x4xbf16>
    %c10 = arith.constant 10 : index
    %c0_44 = arith.constant 0 : index
    %c0_45 = arith.constant 0 : index
    %74 = vector.load %arg3[%c10, %c0_44, %c0_45] : memref<16x4x4xbf16, #tpu.memory_space<vmem>>, vector<1x4x4xbf16>
    %75 = vector.shape_cast %74 : vector<1x4x4xbf16> to vector<4x4xbf16>
    %cst_46 = arith.constant dense<0.000000e+00> : vector<128x4xf32>
    %76 = tpu.matmul %73, %75, %cst_46 {dimension_numbers = #tpu.dot_dimension_numbers<[1], [0], [0], [1], [0, 0, 1, 1], [], []>} : vector<128x4xbf16>, vector<4x4xbf16>, vector<128x4xf32> -> vector<128x4xf32>
    %77 = arith.addf %56, %76 : vector<128x4xf32>
    %78 = vector.extract_strided_slice %71 {offsets = [0, 1, 0], sizes = [8, 16, 4], strides = [1, 1, 1]} : vector<8x18x4xbf16> to vector<8x16x4xbf16>
    %79 = vector.shape_cast %78 : vector<8x16x4xbf16> to vector<128x4xbf16>
    %c11 = arith.constant 11 : index
    %c0_47 = arith.constant 0 : index
    %c0_48 = arith.constant 0 : index
    %80 = vector.load %arg3[%c11, %c0_47, %c0_48] : memref<16x4x4xbf16, #tpu.memory_space<vmem>>, vector<1x4x4xbf16>
    %81 = vector.shape_cast %80 : vector<1x4x4xbf16> to vector<4x4xbf16>
    %cst_49 = arith.constant dense<0.000000e+00> : vector<128x4xf32>
    %82 = tpu.matmul %79, %81, %cst_49 {dimension_numbers = #tpu.dot_dimension_numbers<[1], [0], [0], [1], [0, 0, 1, 1], [], []>} : vector<128x4xbf16>, vector<4x4xbf16>, vector<128x4xf32> -> vector<128x4xf32>
    %83 = arith.addf %77, %82 : vector<128x4xf32>
    %c14 = arith.constant 14 : index
    %c0_50 = arith.constant 0 : index
    %c0_51 = arith.constant 0 : index
    %84 = vector.load %arg3[%c14, %c0_50, %c0_51] : memref<16x4x4xbf16, #tpu.memory_space<vmem>>, vector<1x4x4xbf16>
    %85 = vector.shape_cast %84 : vector<1x4x4xbf16> to vector<4x4xbf16>
    %cst_52 = arith.constant dense<0.000000e+00> : vector<128x4xf32>
    %86 = tpu.matmul %79, %85, %cst_52 {dimension_numbers = #tpu.dot_dimension_numbers<[1], [0], [0], [1], [0, 0, 1, 1], [], []>} : vector<128x4xbf16>, vector<4x4xbf16>, vector<128x4xf32> -> vector<128x4xf32>
    %87 = arith.addf %70, %86 : vector<128x4xf32>
    %88 = vector.extract_strided_slice %71 {offsets = [0, 2, 0], sizes = [8, 16, 4], strides = [1, 1, 1]} : vector<8x18x4xbf16> to vector<8x16x4xbf16>
    %89 = vector.shape_cast %88 : vector<8x16x4xbf16> to vector<128x4xbf16>
    %c15 = arith.constant 15 : index
    %c0_53 = arith.constant 0 : index
    %c0_54 = arith.constant 0 : index
    %90 = vector.load %arg3[%c15, %c0_53, %c0_54] : memref<16x4x4xbf16, #tpu.memory_space<vmem>>, vector<1x4x4xbf16>
    %91 = vector.shape_cast %90 : vector<1x4x4xbf16> to vector<4x4xbf16>
    %cst_55 = arith.constant dense<0.000000e+00> : vector<128x4xf32>
    %92 = tpu.matmul %89, %91, %cst_55 {dimension_numbers = #tpu.dot_dimension_numbers<[1], [0], [0], [1], [0, 0, 1, 1], [], []>} : vector<128x4xbf16>, vector<4x4xbf16>, vector<128x4xf32> -> vector<128x4xf32>
    %93 = arith.addf %87, %92 : vector<128x4xf32>
    %94 = vector.broadcast %4 : vector<1x4xf32> to vector<128x4xf32>
    %95 = arith.addf %48, %94 : vector<128x4xf32>
    %c0_56 = arith.constant 0 : index
    %c0_57 = arith.constant 0 : index
    %c0_58 = arith.constant 0 : index
    %c0_59 = arith.constant 0 : index
    %96 = vector.load %arg5[%c0_56, %c0_57, %c0_58, %c0_59] : memref<1x4x128x4xf32, #tpu.memory_space<vmem>>, vector<1x1x128x4xf32>
    %97 = vector.shape_cast %96 : vector<1x1x128x4xf32> to vector<128x4xf32>
    %98 = vector.shape_cast %95 : vector<128x4xf32> to vector<1x1x128x4xf32>
    tpu.vector_store %arg5[%c0_56, %c0_57, %c0_58, %c0_59], %98 {strides = array<i32>} : memref<1x4x128x4xf32, #tpu.memory_space<vmem>>, vector<1x1x128x4xf32>,
    %99 = vector.broadcast %4 : vector<1x4xf32> to vector<128x4xf32>
    %100 = arith.addf %66, %99 : vector<128x4xf32>
    %c0_60 = arith.constant 0 : index
    %c1_61 = arith.constant 1 : index
    %c0_62 = arith.constant 0 : index
    %c0_63 = arith.constant 0 : index
    %101 = vector.load %arg5[%c0_60, %c1_61, %c0_62, %c0_63] : memref<1x4x128x4xf32, #tpu.memory_space<vmem>>, vector<1x1x128x4xf32>
    %102 = vector.shape_cast %101 : vector<1x1x128x4xf32> to vector<128x4xf32>
    %103 = vector.shape_cast %100 : vector<128x4xf32> to vector<1x1x128x4xf32>
    tpu.vector_store %arg5[%c0_60, %c1_61, %c0_62, %c0_63], %103 {strides = array<i32>} : memref<1x4x128x4xf32, #tpu.memory_space<vmem>>, vector<1x1x128x4xf32>,
    %104 = vector.broadcast %4 : vector<1x4xf32> to vector<128x4xf32>
    %105 = arith.addf %83, %104 : vector<128x4xf32>
    %c0_64 = arith.constant 0 : index
    %c2_65 = arith.constant 2 : index
    %c0_66 = arith.constant 0 : index
    %c0_67 = arith.constant 0 : index
    %106 = vector.load %arg5[%c0_64, %c2_65, %c0_66, %c0_67] : memref<1x4x128x4xf32, #tpu.memory_space<vmem>>, vector<1x1x128x4xf32>
    %107 = vector.shape_cast %106 : vector<1x1x128x4xf32> to vector<128x4xf32>
    %108 = vector.shape_cast %105 : vector<128x4xf32> to vector<1x1x128x4xf32>
    tpu.vector_store %arg5[%c0_64, %c2_65, %c0_66, %c0_67], %108 {strides = array<i32>} : memref<1x4x128x4xf32, #tpu.memory_space<vmem>>, vector<1x1x128x4xf32>,
    %109 = vector.broadcast %4 : vector<1x4xf32> to vector<128x4xf32>
    %110 = arith.addf %93, %109 : vector<128x4xf32>
    %c0_68 = arith.constant 0 : index
    %c3_69 = arith.constant 3 : index
    %c0_70 = arith.constant 0 : index
    %c0_71 = arith.constant 0 : index
    %111 = vector.load %arg5[%c0_68, %c3_69, %c0_70, %c0_71] : memref<1x4x128x4xf32, #tpu.memory_space<vmem>>, vector<1x1x128x4xf32>
    %112 = vector.shape_cast %111 : vector<1x1x128x4xf32> to vector<128x4xf32>
    %113 = vector.shape_cast %110 : vector<128x4xf32> to vector<1x1x128x4xf32>
    tpu.vector_store %arg5[%c0_68, %c3_69, %c0_70, %c0_71], %113 {strides = array<i32>} : memref<1x4x128x4xf32, #tpu.memory_space<vmem>>, vector<1x1x128x4xf32>,
    return
  }
  func.func @transform_0(%arg0: i32, %arg1: i32) -> (i32, i32, i32, i32) {
    %c0_i32 = arith.constant 0 : i32
    %c0_i32_0 = arith.constant 0 : i32
    %c0_i32_1 = arith.constant 0 : i32
    %c0_i32_2 = arith.constant 0 : i32
    return %arg0, %c0_i32, %c0_i32_0, %c0_i32_1 : i32, i32, i32, i32
  }
  func.func @transform_1(%arg0: i32, %arg1: i32) -> (i32, i32, i32) {
    %c0_i32 = arith.constant 0 : i32
    %c0_i32_0 = arith.constant 0 : i32
    %c0_i32_1 = arith.constant 0 : i32
    %c0_i32_2 = arith.constant 0 : i32
    return %c0_i32, %c0_i32_0, %c0_i32_1 : i32, i32, i32
  }
  func.func @transform_2(%arg0: i32, %arg1: i32) -> (i32, i32) {
    %c0_i32 = arith.constant 0 : i32
    %c0_i32_0 = arith.constant 0 : i32
    %c0_i32_1 = arith.constant 0 : i32
    return %c0_i32, %c0_i32_0 : i32, i32
  }
  func.func @transform_3(%arg0: i32, %arg1: i32) -> (i32, i32, i32, i32) {
    %c0_i32 = arith.constant 0 : i32
    %c0_i32_0 = arith.constant 0 : i32
    %c0_i32_1 = arith.constant 0 : i32
    return %arg0, %c0_i32, %arg1, %c0_i32_0 : i32, i32, i32, i32
  }
}

</mosaic_0001>

<llo_original>
// kernel: upsample_forward.1
$region0: #{upsample_forward.1}
  #allocation0 [shape = 'u32[]', space=smem, size = 0x4, offset = 0x4, fixed_abs, tag = 'smem constant byte address 0x4 - core index']
  #allocation1 [shape = 'u32[144,128]{1,0:T(1,128)}', space=vmem, size = 0x12000, scoped, tag = 'internal scratch']
  %s0 = inlined_call_operand.vmem [shape: bf16[2,18,18,4], index: 0, kind: input, shape index: {}]
  %s1 = inlined_call_operand.vmem [shape: bf16[16,4,4], index: 1, kind: input, shape index: {}]
  %s2 = inlined_call_operand.vmem [shape: f32[1,4], index: 2, kind: input, shape index: {}]
  %s3 = inlined_call_operand.vmem [shape: f32[2,4,256,4], index: 3, kind: output, shape index: {}]
  %s4 = sld [smem:[#allocation0]]
  $region79: #{upsample_forward.1} parent=0
    _
  %s6 = ssub.s32 1, %s4
  %s7 = scalar_select 0, %s6, %s4
  $region1: #{upsample_forward.1} parent=0
    #allocation2 [shape = 'u8[524288]{0}', space=vmem, size = 0x80000, scoped, tag = 'output window, operand 0']
    loop: start=0, step=1, limit=6
    $region2: #{upsample_forward.1} parent=1 // loop_pre_header
      _
    $region3: #{upsample_forward.1} parent=1 // loop_header
      %s9 = sphi 0, %s13
      %p10 = scmp.ge.s32.totalorder %s9, 6
      %s16 = sphi 0, %s28
      %s17 = sphi 0, %s24
      %s18 = sphi 0, %s16
      %s19 = sphi 0, %s17
      %s20 = sphi 0, %s18
      %s21 = sphi 0, %s19
      %s31 = sphi 0, %s33
      %s34 = sphi 0, %s31
      %s35 = sphi 0, %s34
      %s51 = sphi 0, %s35
      %s55 = sphi 0, %s55
      %s57 = sphi 0, %s55
      %s58 = sphi 0, %s57
      %s72 = sphi 0, %s58
      %s76 = sphi 0, %s76
      %s78 = sphi 0, %s76
      %s79 = sphi 0, %s78
      %s93 = sphi 0, %s79
      %s101 = sphi 0, %s103
      %s104 = sphi 0, %s101
      %s105 = sphi 0, %s104
      %s121 = sphi 0, %s105
    $region4: #{upsample_forward.1} parent=1 // loop_header_branch
      %12 = sbr.rel (%p10) target = $region8
    $region5: #{upsample_forward.1} parent=1 // loop_body
      %s14 = ssub.s32 %s9, 1
      %s15 = ssub.s32 %s9, 2
      %s22 = sadd.s32 1, %s17
      %p23 = scmp.ge.s32.totalorder %s22, 2
      %s24 = scalar_select %p23, 0, %s22
      %s25 = sadd.s32 1, %s16
      %s26 = scalar_select %p23, %s25, %s16
      %p27 = scmp.ge.s32.totalorder %s26, 2
      %s28 = scalar_select %p27, 0, %s26
      %s29 = ssub.s32 %s16, %s28
      %p30 = scmp.eq.s32.totalorder %s29, 0
      %s32 = sadd.s32 %s31, 1
      %s33 = scalar_select %p30, %s31, %s32
      %p36 = pneg %p30
      %p37 = scmp.eq.s32.totalorder %s9, 3
      %p38 = por %p36, %p37
      %p39 = scmp.ne.s32.totalorder %s31, %s34
      %p40 = scmp.eq.s32.totalorder %s9, 0
      %p41 = por %p39, %p40
      %p42 = scmp.ne.s32.totalorder %s31, %s34
      %p43 = scmp.eq.s32.totalorder %s14, 3
      %p44 = por %p42, %p43
      %p45 = scmp.ne.s32.totalorder %s34, %s35
      %p46 = scmp.eq.s32.totalorder %s14, 0
      %p47 = por %p45, %p46
      %p48 = scmp.ne.s32.totalorder %s34, %s35
      %p49 = scmp.eq.s32.totalorder %s15, 3
      %p50 = por %p48, %p49
      %p52 = scmp.ne.s32.totalorder %s35, %s51
      %p53 = scmp.eq.s32.totalorder %s15, 0
      %p54 = por %p52, %p53
      %s56 = sadd.s32 %s55, 1
      %p59 = scmp.eq.s32.totalorder %s9, 3
      %p60 = scmp.ne.s32.totalorder %s55, %s57
      %p61 = scmp.eq.s32.totalorder %s9, 0
      %p62 = por %p60, %p61
      %p63 = scmp.ne.s32.totalorder %s55, %s57
      %p64 = scmp.eq.s32.totalorder %s14, 3
      %p65 = por %p63, %p64
      %p66 = scmp.ne.s32.totalorder %s57, %s58
      %p67 = scmp.eq.s32.totalorder %s14, 0
      %p68 = por %p66, %p67
      %p69 = scmp.ne.s32.totalorder %s57, %s58
      %p70 = scmp.eq.s32.totalorder %s15, 3
      %p71 = por %p69, %p70
      %p73 = scmp.ne.s32.totalorder %s58, %s72
      %p74 = scmp.eq.s32.totalorder %s15, 0
      %p75 = por %p73, %p74
      %s77 = sadd.s32 %s76, 1
      %p80 = scmp.eq.s32.totalorder %s9, 3
      %p81 = scmp.ne.s32.totalorder %s76, %s78
      %p82 = scmp.eq.s32.totalorder %s9, 0
      %p83 = por %p81, %p82
      %p84 = scmp.ne.s32.totalorder %s76, %s78
      %p85 = scmp.eq.s32.totalorder %s14, 3
      %p86 = por %p84, %p85
      %p87 = scmp.ne.s32.totalorder %s78, %s79
      %p88 = scmp.eq.s32.totalorder %s14, 0
      %p89 = por %p87, %p88
      %p90 = scmp.ne.s32.totalorder %s78, %s79
      %p91 = scmp.eq.s32.totalorder %s15, 3
      %p92 = por %p90, %p91
      %p94 = scmp.ne.s32.totalorder %s79, %s93
      %p95 = scmp.eq.s32.totalorder %s15, 0
      %p96 = por %p94, %p95
      %s97 = ssub.s32 %s16, %s28
      %s98 = ssub.s32 %s17, %s24
      %s99 = sor.u32 %s97, %s98
      %p100 = scmp.eq.s32.totalorder %s99, 0
      %s102 = sadd.s32 %s101, 1
      %s103 = scalar_select %p100, %s101, %s102
      %p106 = pneg %p100
      %p107 = scmp.eq.s32.totalorder %s9, 3
      %p108 = por %p106, %p107
      %p109 = scmp.ne.s32.totalorder %s101, %s104
      %p110 = scmp.eq.s32.totalorder %s9, 0
      %p111 = por %p109, %p110
      %p112 = scmp.ne.s32.totalorder %s101, %s104
      %p113 = scmp.eq.s32.totalorder %s14, 3
      %p114 = por %p112, %p113
      %p115 = scmp.ne.s32.totalorder %s104, %s105
      %p116 = scmp.eq.s32.totalorder %s14, 0
      %p117 = por %p115, %p116
      %p118 = scmp.ne.s32.totalorder %s104, %s105
      %p119 = scmp.eq.s32.totalorder %s15, 3
      %p120 = por %p118, %p119
      %p122 = scmp.ne.s32.totalorder %s105, %s121
      %p123 = scmp.eq.s32.totalorder %s15, 0
      %p124 = por %p122, %p123
      %p125 = scmp.le.s32.totalorder 1, %s9
      %p126 = scmp.lt.s32.totalorder %s9, 5
      %p127 = pnand %p125, %p126
      %p128 = pneg %p127
      // Predicated region
      $region9: #{upsample_forward.1} parent=5 // pred_check
        _
      $region10: #{upsample_forward.1} parent=5 // pred_check_branch
        %130 = sbr.rel (%p127) target = $region12
      $region11: #{upsample_forward.1} parent=5 // pred_region
        %s131 = ssub.s32 %s9, 1
        // Predicated region
        $region13: #{upsample_forward.1} parent=11 // pred_check
          %p132 = pneg %p68
        $region14: #{upsample_forward.1} parent=11 // pred_check_branch
          %134 = sbr.rel (%p132) target = $region16
        $region15: #{upsample_forward.1} parent=11 // pred_region
          _
        $region16: #{upsample_forward.1} parent=11 // pred_fallthru
          _
        // Predicated region
        $region17: #{upsample_forward.1} parent=11 // pred_check
          %p135 = pneg %p89
        $region18: #{upsample_forward.1} parent=11 // pred_check_branch
          %137 = sbr.rel (%p135) target = $region20
        $region19: #{upsample_forward.1} parent=11 // pred_region
          _
        $region20: #{upsample_forward.1} parent=11 // pred_fallthru
          _
      $region12: #{upsample_forward.1} parent=5 // pred_fallthru
        _
      %p138 = scmp.lt.s32.totalorder %s9, 4
      // Predicated region
      $region21: #{upsample_forward.1} parent=5 // pred_check
        %p139 = pneg %p138
      $region22: #{upsample_forward.1} parent=5 // pred_check_branch
        %141 = sbr.rel (%p139) target = $region24
      $region23: #{upsample_forward.1} parent=5 // pred_region
        // Predicated region
        $region25: #{upsample_forward.1} parent=23 // pred_check
          %p142 = pneg %p41
        $region26: #{upsample_forward.1} parent=23 // pred_check_branch
          %144 = sbr.rel (%p142) target = $region28
        $region27: #{upsample_forward.1} parent=23 // pred_region
          %p145 = scmp.lt.s32.totalorder %s16, 1
          %s146 = scalar_select %p145, %s16, 1
          %s147 = smul.addr %s146, 54
          %s148 = smul.addr %s147, 4
          %s149 = scalar_lea.vmem %s0, %s148
        $region28: #{upsample_forward.1} parent=23 // pred_fallthru
          _
      $region24: #{upsample_forward.1} parent=5 // pred_fallthru
        _
      %p150 = scmp.le.s32.totalorder 1, %s9
      %p151 = scmp.lt.s32.totalorder %s9, 5
      %p152 = pnand %p150, %p151
      %p153 = pneg %p152
      // Predicated region
      $region29: #{upsample_forward.1} parent=5 // pred_check
        _
      $region30: #{upsample_forward.1} parent=5 // pred_check_branch
        %155 = sbr.rel (%p152) target = $region32
      $region31: #{upsample_forward.1} parent=5 // pred_region
        %s156 = ssub.s32 %s9, 1
        %p157 = scmp.lt.s32.totalorder %s18, 1
        %s158 = scalar_select %p157, %s18, 1
        %s159 = smul.addr %s158, 54
        %s160 = smul.addr %s159, 4
        %s161 = scalar_lea.vmem %s0, %s160
        %p162 = pneg %p47
        %p163 = pneg %p44
        %p164 = pneg %p68
        %p165 = pneg %p65
        %p166 = pneg %p89
        %p167 = pneg %p86
        %p168 = pneg %p117
        %p169 = pneg %p114
        %s170 = sand.u32 %s104, 1
        %s171 = sand.u32 %s104, 1
        %s172 = smul.addr %s171, 512
        %s173 = scalar_lea.vmem [#allocation2], %s172
        %p174 = scmp.lt.s32.totalorder %s18, 1
        %s175 = scalar_select %p174, %s18, 1
        %s176 = smul.addr %s175, 54
        %s177 = smul.addr %s176, 4
        %s178 = scalar_lea.vmem %s0, %s177
        %s179 = smul.u32 16, %s19
        %s181 = smul.u32 %s19, 8
        %s182 = smul.u32 %s181, 3
        %s183 = smul.addr %s182, 4
        %s184 = scalar_lea.vmem %s178, %s183
        %v185 = vld [vmem:[%s184] sm:$0xf]
        %v186 = vld [vmem:[%s184 + $0x4] sm:$0xf]
        %v187 = vld [vmem:[%s184 + $0x8] sm:$0x1]
        %v188 = vld [vmem:[%s184 + $0xc] sm:$0xf]
        %v189 = vld [vmem:[%s184 + $0x10] sm:$0xf]
        %v190 = vld [vmem:[%s184 + $0x14] sm:$0x1]
        %v191 = vld [vmem:[%s184 + $0x18] sm:$0xf]
        %v192 = vld [vmem:[%s184 + $0x1c] sm:$0xf]
        %v193 = vld [vmem:[%s184 + $0x20] sm:$0x1]
        %v194 = vld [vmem:[%s184 + $0x24] sm:$0xf]
        %v195 = vld [vmem:[%s184 + $0x28] sm:$0xf]
        %v196 = vld [vmem:[%s184 + $0x2c] sm:$0x1]
        %v197 = vld [vmem:[%s184 + $0x30] sm:$0xf]
        %v198 = vld [vmem:[%s184 + $0x34] sm:$0xf]
        %v199 = vld [vmem:[%s184 + $0x38] sm:$0x1]
        %v200 = vld [vmem:[%s184 + $0x3c] sm:$0xf]
        %v201 = vld [vmem:[%s184 + $0x40] sm:$0xf]
        %v202 = vld [vmem:[%s184 + $0x44] sm:$0x1]
        %v203 = vld [vmem:[%s184 + $0x48] sm:$0xf]
        %v204 = vld [vmem:[%s184 + $0x4c] sm:$0xf]
        %v205 = vld [vmem:[%s184 + $0x50] sm:$0x1]
        %v206 = vld [vmem:[%s184 + $0x54] sm:$0xf]
        %v207 = vld [vmem:[%s184 + $0x58] sm:$0xf]
        %v208 = vld [vmem:[%s184 + $0x5c] sm:$0x1]
        %v209 = vld [vmem:[%s184 + $0x60] sm:$0xf]
        %v210 = vld [vmem:[%s184 + $0x64] sm:$0xf]
        %v211 = vld [vmem:[%s184 + $0x68] sm:$0x1]
        %v212 = vld [vmem:[%s184 + $0x6c] sm:$0xf]
        %v213 = vld [vmem:[%s184 + $0x70] sm:$0xf]
        %v214 = vld [vmem:[%s184 + $0x74] sm:$0x1]
        %v215 = vld [vmem:[%s2] sm:$0x1]
        %v216 = vld [vmem:[%s1] sm:$0x3]
        %vm217 = vsmask.f32 3328
        %vm218 = vsmask.f32 7440
        %vm219 = vmor %vm217, %vm218
        %v221 = vshrl.u32 %v185, 16
        %v223 = vrot.slane %v221, 4
        %v224 = vshll.u32 %v185, 16
        %v226 = vrot.slane %v224, 5
        %v227 = vor.u32 %v223, %v226
        %v228 = vrot.slane %v227, 4
        %v230 = vshll.u32 %v186, 16
        %v232 = vrot.slane %v230, 5
        %v233 = vsel %vm219, %v228, %v232
        %v234 = vshrl.u32 %v186, 16
        %v236 = vrot.slane %v234, 4
        %v237 = vor.u32 %v236, %v232
        %v238 = vrot.slane %v237, 4
        %v240 = vshll.u32 %v187, 16
        %v242 = vrot.slane %v240, 5
        %v243 = vsel %vm219, %v238, %v242
        %v245 = vshrl.u32 %v188, 16
        %v247 = vrot.slane %v245, 4
        %v248 = vshll.u32 %v188, 16
        %v250 = vrot.slane %v248, 5
        %v251 = vor.u32 %v247, %v250
        %v252 = vrot.slane %v251, 4
        %v254 = vshll.u32 %v189, 16
        %v256 = vrot.slane %v254, 5
        %v257 = vsel %vm219, %v252, %v256
        %v258 = vshrl.u32 %v189, 16
        %v260 = vrot.slane %v258, 4
        %v261 = vor.u32 %v260, %v256
        %v262 = vrot.slane %v261, 4
        %v264 = vshll.u32 %v190, 16
        %v266 = vrot.slane %v264, 5
        %v267 = vsel %vm219, %v262, %v266
        %v269 = vshrl.u32 %v191, 16
        %v271 = vrot.slane %v269, 4
        %v272 = vshll.u32 %v191, 16
        %v274 = vrot.slane %v272, 5
        %v275 = vor.u32 %v271, %v274
        %v276 = vrot.slane %v275, 4
        %v278 = vshll.u32 %v192, 16
        %v280 = vrot.slane %v278, 5
        %v281 = vsel %vm219, %v276, %v280
        %v282 = vshrl.u32 %v192, 16
        %v284 = vrot.slane %v282, 4
        %v285 = vor.u32 %v284, %v280
        %v286 = vrot.slane %v285, 4
        %v288 = vshll.u32 %v193, 16
        %v290 = vrot.slane %v288, 5
        %v291 = vsel %vm219, %v286, %v290
        %v293 = vshrl.u32 %v194, 16
        %v295 = vrot.slane %v293, 4
        %v296 = vshll.u32 %v194, 16
        %v298 = vrot.slane %v296, 5
        %v299 = vor.u32 %v295, %v298
        %v300 = vrot.slane %v299, 4
        %v302 = vshll.u32 %v195, 16
        %v304 = vrot.slane %v302, 5
        %v305 = vsel %vm219, %v300, %v304
        %v306 = vshrl.u32 %v195, 16
        %v308 = vrot.slane %v306, 4
        %v309 = vor.u32 %v308, %v304
        %v310 = vrot.slane %v309, 4
        %v312 = vshll.u32 %v196, 16
        %v314 = vrot.slane %v312, 5
        %v315 = vsel %vm219, %v310, %v314
        %v317 = vshrl.u32 %v197, 16
        %v319 = vrot.slane %v317, 4
        %v320 = vshll.u32 %v197, 16
        %v322 = vrot.slane %v320, 5
        %v323 = vor.u32 %v319, %v322
        %v324 = vrot.slane %v323, 4
        %v326 = vshll.u32 %v198, 16
        %v328 = vrot.slane %v326, 5
        %v329 = vsel %vm219, %v324, %v328
        %v330 = vshrl.u32 %v198, 16
        %v332 = vrot.slane %v330, 4
        %v333 = vor.u32 %v332, %v328
        %v334 = vrot.slane %v333, 4
        %v336 = vshll.u32 %v199, 16
        %v338 = vrot.slane %v336, 5
        %v339 = vsel %vm219, %v334, %v338
        %v341 = vshrl.u32 %v200, 16
        %v343 = vrot.slane %v341, 4
        %v344 = vshll.u32 %v200, 16
        %v346 = vrot.slane %v344, 5
        %v347 = vor.u32 %v343, %v346
        %v348 = vrot.slane %v347, 4
        %v350 = vshll.u32 %v201, 16
        %v352 = vrot.slane %v350, 5
        %v353 = vsel %vm219, %v348, %v352
        %v354 = vshrl.u32 %v201, 16
        %v356 = vrot.slane %v354, 4
        %v357 = vor.u32 %v356, %v352
        %v358 = vrot.slane %v357, 4
        %v360 = vshll.u32 %v202, 16
        %v362 = vrot.slane %v360, 5
        %v363 = vsel %vm219, %v358, %v362
        %v365 = vshrl.u32 %v203, 16
        %v367 = vrot.slane %v365, 4
        %v368 = vshll.u32 %v203, 16
        %v370 = vrot.slane %v368, 5
        %v371 = vor.u32 %v367, %v370
        %v372 = vrot.slane %v371, 4
        %v374 = vshll.u32 %v204, 16
        %v376 = vrot.slane %v374, 5
        %v377 = vsel %vm219, %v372, %v376
        %v378 = vshrl.u32 %v204, 16
        %v380 = vrot.slane %v378, 4
        %v381 = vor.u32 %v380, %v376
        %v382 = vrot.slane %v381, 4
        %v384 = vshll.u32 %v205, 16
        %v386 = vrot.slane %v384, 5
        %v387 = vsel %vm219, %v382, %v386
        %v389 = vshrl.u32 %v206, 16
        %v391 = vrot.slane %v389, 4
        %v392 = vshll.u32 %v206, 16
        %v394 = vrot.slane %v392, 5
        %v395 = vor.u32 %v391, %v394
        %v396 = vrot.slane %v395, 4
        %v398 = vshll.u32 %v207, 16
        %v400 = vrot.slane %v398, 5
        %v401 = vsel %vm219, %v396, %v400
        %v402 = vshrl.u32 %v207, 16
        %v404 = vrot.slane %v402, 4
        %v405 = vor.u32 %v404, %v400
        %v406 = vrot.slane %v405, 4
        %v408 = vshll.u32 %v208, 16
        %v410 = vrot.slane %v408, 5
        %v411 = vsel %vm219, %v406, %v410
        %s412 = scalar_lea.vmem %s1, 2
        %v413 = vld [vmem:[%s412] sm:$0x3]
        %v414 = vunpack.c.l.b16 %v233
        %v415 = vunpack.c.l.b16 %v243
        %v416 = vunpack.c.l.b16 %v257
        %v417 = vunpack.c.l.b16 %v267
        %v418 = vunpack.c.l.b16 %v281
        %v419 = vunpack.c.l.b16 %v291
        %v420 = vunpack.c.l.b16 %v305
        %v421 = vunpack.c.l.b16 %v315
        %v422 = vunpack.c.l.b16 %v329
        %v423 = vunpack.c.l.b16 %v339
        %v424 = vunpack.c.l.b16 %v353
        %v425 = vunpack.c.l.b16 %v363
        %v426 = vunpack.c.l.b16 %v377
        %v427 = vunpack.c.l.b16 %v387
        %v428 = vunpack.c.l.b16 %v401
        %v429 = vunpack.c.l.b16 %v411
        %v430 = vpack.c.b16 %v415, %v414
        %v431 = vpack.c.b16 %v417, %v416
        %v432 = vpack.c.b16 %v419, %v418
        %v433 = vpack.c.b16 %v421, %v420
        %v434 = vpack.c.b16 %v423, %v422
        %v435 = vpack.c.b16 %v425, %v424
        %v436 = vpack.c.b16 %v427, %v426
        %v437 = vpack.c.b16 %v429, %v428
        %vm438 = vcmask 31744
        %v440 = vsel %vm438, %v430, 0
        %v443 = vsel %vm438, %v431, 0
        %v446 = vsel %vm438, %v432, 0
        %v449 = vsel %vm438, %v433, 0
        %v452 = vsel %vm438, %v434, 0
        %v455 = vsel %vm438, %v435, 0
        %v458 = vsel %vm438, %v436, 0
        %v461 = vsel %vm438, %v437, 0
        %vm463 = vcmask 1041408
        %v465 = vsel %vm463, %v413, 0
        %467 = vmatprep.subr.bf16.mxu0 0
        %468 = vmatpush1.bf16.msra.mxu0 %v465
        %469 = vmatprep.subr.bf16.mxu0 0
        %470 = vmatpush1.bf16.msra.mxu0 0
        %471 = vmatprep.subr.bf16.mxu0 0
        %472 = vmatpush1.bf16.msra.mxu0 0
        %473 = vmatprep.subr.bf16.mxu0 0
        %474 = vmatpush1.bf16.msra.mxu0 0
        %475 = vmatprep.subr.bf16.mxu0 0
        %476 = vmatpush1.bf16.msra.mxu0 0
        %477 = vmatprep.subr.bf16.mxu0 0
        %478 = vmatpush1.bf16.msra.mxu0 0
        %479 = vmatprep.subr.bf16.mxu0 0
        %480 = vmatpush1.bf16.msra.mxu0 0
        %481 = vmatprep.subr.bf16.mxu0 0
        %482 = vmatpush1.bf16.msra.mxu0 0
        %483 = vmatprep.subr.bf16.mxu0 0
        %484 = vmatpush1.bf16.msra.mxu0 0
        %485 = vmatprep.subr.bf16.mxu0 0
        %486 = vmatpush1.bf16.msra.mxu0 0
        %487 = vmatprep.subr.bf16.mxu0 0
        %488 = vmatpush1.bf16.msra.mxu0 0
        %489 = vmatprep.subr.bf16.mxu0 0
        %490 = vmatpush1.bf16.msra.mxu0 0
        %491 = vmatprep.subr.bf16.mxu0 0
        %492 = vmatpush1.bf16.msra.mxu0 0
        %493 = vmatprep.subr.bf16.mxu0 0
        %494 = vmatpush1.bf16.msra.mxu0 0
        %495 = vmatprep.subr.bf16.mxu0 0
        %496 = vmatpush1.bf16.msra.mxu0 0
        %497 = vmatprep.subr.bf16.mxu0 0
        %498 = vmatpush1.bf16.msra.mxu0 0
        %499 = vmatprep.mubr.bf16.mxu0 0
        %500 = vmatmul.mubr.bf16.gmra.mrb[0].mxu0 %v440
        %v501 = vpop.f32.mrb[0].mxu0
        %v502 = vadd.f32 0.0, %v501
        %v503 = vpop.f32.mrb[0].mxu0
        %v504 = vpop.f32.mrb[0].mxu0
        %v505 = vadd.f32 0.0, %v504
        %v506 = vpop.f32.mrb[0].mxu0
        %507 = vmatprep.mubr.bf16.mxu0 0
        %508 = vmatmul.mubr.bf16.gmra.mrb[0].mxu0 %v443
        %v509 = vpop.f32.mrb[0].mxu0
        %v510 = vadd.f32 0.0, %v509
        %v511 = vpop.f32.mrb[0].mxu0
        %v512 = vpop.f32.mrb[0].mxu0
        %v513 = vadd.f32 0.0, %v512
        %v514 = vpop.f32.mrb[0].mxu0
        %515 = vmatprep.mubr.bf16.mxu0 0
        %516 = vmatmul.mubr.bf16.gmra.mrb[0].mxu0 %v446
        %v517 = vpop.f32.mrb[0].mxu0
        %v518 = vadd.f32 0.0, %v517
        %v519 = vpop.f32.mrb[0].mxu0
        %v520 = vpop.f32.mrb[0].mxu0
        %v521 = vadd.f32 0.0, %v520
        %v522 = vpop.f32.mrb[0].mxu0
        %523 = vmatprep.mubr.bf16.mxu0 0
        %524 = vmatmul.mubr.bf16.gmra.mrb[0].mxu0 %v449
        %v525 = vpop.f32.mrb[0].mxu0
        %v526 = vadd.f32 0.0, %v525
        %v527 = vpop.f32.mrb[0].mxu0
        %v528 = vpop.f32.mrb[0].mxu0
        %v529 = vadd.f32 0.0, %v528
        %v530 = vpop.f32.mrb[0].mxu0
        %531 = vmatprep.mubr.bf16.mxu0 0
        %532 = vmatmul.mubr.bf16.gmra.mrb[0].mxu0 %v452
        %v533 = vpop.f32.mrb[0].mxu0
        %v534 = vadd.f32 0.0, %v533
        %v535 = vpop.f32.mrb[0].mxu0
        %v536 = vpop.f32.mrb[0].mxu0
        %v537 = vadd.f32 0.0, %v536
        %v538 = vpop.f32.mrb[0].mxu0
        %539 = vmatprep.mubr.bf16.mxu0 0
        %540 = vmatmul.mubr.bf16.gmra.mrb[0].mxu0 %v455
        %v541 = vpop.f32.mrb[0].mxu0
        %v542 = vadd.f32 0.0, %v541
        %v543 = vpop.f32.mrb[0].mxu0
        %v544 = vpop.f32.mrb[0].mxu0
        %v545 = vadd.f32 0.0, %v544
        %v546 = vpop.f32.mrb[0].mxu0
        %547 = vmatprep.mubr.bf16.mxu0 0
        %548 = vmatmul.mubr.bf16.gmra.mrb[0].mxu0 %v458
        %v549 = vpop.f32.mrb[0].mxu0
        %v550 = vadd.f32 0.0, %v549
        %v551 = vpop.f32.mrb[0].mxu0
        %v552 = vpop.f32.mrb[0].mxu0
        %v553 = vadd.f32 0.0, %v552
        %v554 = vpop.f32.mrb[0].mxu0
        %555 = vmatprep.mubr.bf16.mxu0 0
        %556 = vmatmul.mubr.bf16.gmra.mrb[0].mxu0 %v461
        %v557 = vpop.f32.mrb[0].mxu0
        %v558 = vadd.f32 0.0, %v557
        %v559 = vpop.f32.mrb[0].mxu0
        %v560 = vpop.f32.mrb[0].mxu0
        %v561 = vadd.f32 0.0, %v560
        %v562 = vpop.f32.mrb[0].mxu0
        %563 = vdwg.mxu0
        %v580 = vunpack.c.l.b16 %v185
        %v581 = vunpack.c.l.b16 %v186
        %v582 = vunpack.c.l.b16 %v188
        %v583 = vunpack.c.l.b16 %v189
        %v584 = vunpack.c.l.b16 %v191
        %v585 = vunpack.c.l.b16 %v192
        %v586 = vunpack.c.l.b16 %v194
        %v587 = vunpack.c.l.b16 %v195
        %v588 = vunpack.c.l.b16 %v197
        %v589 = vunpack.c.l.b16 %v198
        %v590 = vunpack.c.l.b16 %v200
        %v591 = vunpack.c.l.b16 %v201
        %v592 = vunpack.c.l.b16 %v203
        %v593 = vunpack.c.l.b16 %v204
        %v594 = vunpack.c.l.b16 %v206
        %v595 = vunpack.c.l.b16 %v207
        %v596 = vpack.c.b16 %v581, %v580
        %v597 = vpack.c.b16 %v583, %v582
        %v598 = vpack.c.b16 %v585, %v584
        %v599 = vpack.c.b16 %v587, %v586
        %v600 = vpack.c.b16 %v589, %v588
        %v601 = vpack.c.b16 %v591, %v590
        %v602 = vpack.c.b16 %v593, %v592
        %v603 = vpack.c.b16 %v595, %v594
        %v605 = vsel %vm438, %v596, 0
        %v608 = vsel %vm438, %v597, 0
        %v611 = vsel %vm438, %v598, 0
        %v614 = vsel %vm438, %v599, 0
        %v617 = vsel %vm438, %v600, 0
        %v620 = vsel %vm438, %v601, 0
        %v623 = vsel %vm438, %v602, 0
        %v626 = vsel %vm438, %v603, 0
        %v629 = vsel %vm463, %v216, 0
        %631 = vmatprep.subr.bf16.mxu0 0
        %632 = vmatpush1.bf16.msra.mxu0 %v629
        %633 = vmatprep.subr.bf16.mxu0 0
        %634 = vmatpush1.bf16.msra.mxu0 0
        %635 = vmatprep.subr.bf16.mxu0 0
        %636 = vmatpush1.bf16.msra.mxu0 0
        %637 = vmatprep.subr.bf16.mxu0 0
        %638 = vmatpush1.bf16.msra.mxu0 0
        %639 = vmatprep.subr.bf16.mxu0 0
        %640 = vmatpush1.bf16.msra.mxu0 0
        %641 = vmatprep.subr.bf16.mxu0 0
        %642 = vmatpush1.bf16.msra.mxu0 0
        %643 = vmatprep.subr.bf16.mxu0 0
        %644 = vmatpush1.bf16.msra.mxu0 0
        %645 = vmatprep.subr.bf16.mxu0 0
        %646 = vmatpush1.bf16.msra.mxu0 0
        %647 = vmatprep.subr.bf16.mxu0 0
        %648 = vmatpush1.bf16.msra.mxu0 0
        %649 = vmatprep.subr.bf16.mxu0 0
        %650 = vmatpush1.bf16.msra.mxu0 0
        %651 = vmatprep.subr.bf16.mxu0 0
        %652 = vmatpush1.bf16.msra.mxu0 0
        %653 = vmatprep.subr.bf16.mxu0 0
        %654 = vmatpush1.bf16.msra.mxu0 0
        %655 = vmatprep.subr.bf16.mxu0 0
        %656 = vmatpush1.bf16.msra.mxu0 0
        %657 = vmatprep.subr.bf16.mxu0 0
        %658 = vmatpush1.bf16.msra.mxu0 0
        %659 = vmatprep.subr.bf16.mxu0 0
        %660 = vmatpush1.bf16.msra.mxu0 0
        %661 = vmatprep.subr.bf16.mxu0 0
        %662 = vmatpush1.bf16.msra.mxu0 0
        %663 = vmatprep.mubr.bf16.mxu0 0
        %664 = vmatmul.mubr.bf16.gmra.mrb[0].mxu0 %v605
        %v665 = vpop.f32.mrb[0].mxu0
        %v666 = vadd.f32 %v502, %v665
        %v667 = vpop.f32.mrb[0].mxu0
        %v668 = vpop.f32.mrb[0].mxu0
        %v669 = vadd.f32 %v505, %v668
        %v670 = vpop.f32.mrb[0].mxu0
        %671 = vmatprep.mubr.bf16.mxu0 0
        %672 = vmatmul.mubr.bf16.gmra.mrb[0].mxu0 %v608
        %v673 = vpop.f32.mrb[0].mxu0
        %v674 = vadd.f32 %v510, %v673
        %v675 = vpop.f32.mrb[0].mxu0
        %v676 = vpop.f32.mrb[0].mxu0
        %v677 = vadd.f32 %v513, %v676
        %v678 = vpop.f32.mrb[0].mxu0
        %679 = vmatprep.mubr.bf16.mxu0 0
        %680 = vmatmul.mubr.bf16.gmra.mrb[0].mxu0 %v611
        %v681 = vpop.f32.mrb[0].mxu0
        %v682 = vadd.f32 %v518, %v681
        %v683 = vpop.f32.mrb[0].mxu0
        %v684 = vpop.f32.mrb[0].mxu0
        %v685 = vadd.f32 %v521, %v684
        %v686 = vpop.f32.mrb[0].mxu0
        %687 = vmatprep.mubr.bf16.mxu0 0
        %688 = vmatmul.mubr.bf16.gmra.mrb[0].mxu0 %v614
        %v689 = vpop.f32.mrb[0].mxu0
        %v690 = vadd.f32 %v526, %v689
        %v691 = vpop.f32.mrb[0].mxu0
        %v692 = vpop.f32.mrb[0].mxu0
        %v693 = vadd.f32 %v529, %v692
        %v694 = vpop.f32.mrb[0].mxu0
        %695 = vmatprep.mubr.bf16.mxu0 0
        %696 = vmatmul.mubr.bf16.gmra.mrb[0].mxu0 %v617
        %v697 = vpop.f32.mrb[0].mxu0
        %v698 = vadd.f32 %v534, %v697
        %v699 = vpop.f32.mrb[0].mxu0
        %v700 = vpop.f32.mrb[0].mxu0
        %v701 = vadd.f32 %v537, %v700
        %v702 = vpop.f32.mrb[0].mxu0
        %703 = vmatprep.mubr.bf16.mxu0 0
        %704 = vmatmul.mubr.bf16.gmra.mrb[0].mxu0 %v620
        %v705 = vpop.f32.mrb[0].mxu0
        %v706 = vadd.f32 %v542, %v705
        %v707 = vpop.f32.mrb[0].mxu0
        %v708 = vpop.f32.mrb[0].mxu0
        %v709 = vadd.f32 %v545, %v708
        %v710 = vpop.f32.mrb[0].mxu0
        %711 = vmatprep.mubr.bf16.mxu0 0
        %712 = vmatmul.mubr.bf16.gmra.mrb[0].mxu0 %v623
        %v713 = vpop.f32.mrb[0].mxu0
        %v714 = vadd.f32 %v550, %v713
        %v715 = vpop.f32.mrb[0].mxu0
        %v716 = vpop.f32.mrb[0].mxu0
        %v717 = vadd.f32 %v553, %v716
        %v718 = vpop.f32.mrb[0].mxu0
        %719 = vmatprep.mubr.bf16.mxu0 0
        %720 = vmatmul.mubr.bf16.gmra.mrb[0].mxu0 %v626
        %v721 = vpop.f32.mrb[0].mxu0
        %v722 = vadd.f32 %v558, %v721
        %v723 = vpop.f32.mrb[0].mxu0
        %v724 = vpop.f32.mrb[0].mxu0
        %v725 = vadd.f32 %v561, %v724
        %v726 = vpop.f32.mrb[0].mxu0
        %727 = vdwg.mxu0
        %s728 = scalar_lea.vmem %s1, 8
        %v729 = vld [vmem:[%s728] sm:$0x3]
        %vm738 = vcmask 1042432
        %vm739 = vcmask 1046532
        %vm740 = vmor %vm738, %vm739
        %v741 = vrot.slane %v185, 5
        %v742 = vrot.slane %v741, 4
        %v743 = vrot.slane %v186, 5
        %v744 = vsel %vm740, %v742, %v743
        %v745 = vrot.slane %v743, 4
        %v746 = vrot.slane %v187, 5
        %v747 = vsel %vm740, %v745, %v746
        %v748 = vrot.slane %v188, 5
        %v749 = vrot.slane %v748, 4
        %v750 = vrot.slane %v189, 5
        %v751 = vsel %vm740, %v749, %v750
        %v752 = vrot.slane %v750, 4
        %v753 = vrot.slane %v190, 5
        %v754 = vsel %vm740, %v752, %v753
        %v755 = vrot.slane %v191, 5
        %v756 = vrot.slane %v755, 4
        %v757 = vrot.slane %v192, 5
        %v758 = vsel %vm740, %v756, %v757
        %v759 = vrot.slane %v757, 4
        %v760 = vrot.slane %v193, 5
        %v761 = vsel %vm740, %v759, %v760
        %v762 = vrot.slane %v194, 5
        %v763 = vrot.slane %v762, 4
        %v764 = vrot.slane %v195, 5
        %v765 = vsel %vm740, %v763, %v764
        %v766 = vrot.slane %v764, 4
        %v767 = vrot.slane %v196, 5
        %v768 = vsel %vm740, %v766, %v767
        %v769 = vrot.slane %v197, 5
        %v770 = vrot.slane %v769, 4
        %v771 = vrot.slane %v198, 5
        %v772 = vsel %vm740, %v770, %v771
        %v773 = vrot.slane %v771, 4
        %v774 = vrot.slane %v199, 5
        %v775 = vsel %vm740, %v773, %v774
        %v776 = vrot.slane %v200, 5
        %v777 = vrot.slane %v776, 4
        %v778 = vrot.slane %v201, 5
        %v779 = vsel %vm740, %v777, %v778
        %v780 = vrot.slane %v778, 4
        %v781 = vrot.slane %v202, 5
        %v782 = vsel %vm740, %v780, %v781
        %v783 = vrot.slane %v203, 5
        %v784 = vrot.slane %v783, 4
        %v785 = vrot.slane %v204, 5
        %v786 = vsel %vm740, %v784, %v785
        %v787 = vrot.slane %v785, 4
        %v788 = vrot.slane %v205, 5
        %v789 = vsel %vm740, %v787, %v788
        %v790 = vrot.slane %v206, 5
        %v791 = vrot.slane %v790, 4
        %v792 = vrot.slane %v207, 5
        %v793 = vsel %vm740, %v791, %v792
        %v794 = vrot.slane %v792, 4
        %v795 = vrot.slane %v208, 5
        %v796 = vsel %vm740, %v794, %v795
        %s797 = scalar_lea.vmem %s1, 10
        %v798 = vld [vmem:[%s797] sm:$0x3]
        %v799 = vunpack.c.l.b16 %v744
        %v800 = vunpack.c.l.b16 %v747
        %v801 = vunpack.c.l.b16 %v751
        %v802 = vunpack.c.l.b16 %v754
        %v803 = vunpack.c.l.b16 %v758
        %v804 = vunpack.c.l.b16 %v761
        %v805 = vunpack.c.l.b16 %v765
        %v806 = vunpack.c.l.b16 %v768
        %v807 = vunpack.c.l.b16 %v772
        %v808 = vunpack.c.l.b16 %v775
        %v809 = vunpack.c.l.b16 %v779
        %v810 = vunpack.c.l.b16 %v782
        %v811 = vunpack.c.l.b16 %v786
        %v812 = vunpack.c.l.b16 %v789
        %v813 = vunpack.c.l.b16 %v793
        %v814 = vunpack.c.l.b16 %v796
        %v815 = vpack.c.b16 %v800, %v799
        %v816 = vpack.c.b16 %v802, %v801
        %v817 = vpack.c.b16 %v804, %v803
        %v818 = vpack.c.b16 %v806, %v805
        %v819 = vpack.c.b16 %v808, %v807
        %v820 = vpack.c.b16 %v810, %v809
        %v821 = vpack.c.b16 %v812, %v811
        %v822 = vpack.c.b16 %v814, %v813
        %v824 = vsel %vm438, %v815, 0
        %v827 = vsel %vm438, %v816, 0
        %v830 = vsel %vm438, %v817, 0
        %v833 = vsel %vm438, %v818, 0
        %v836 = vsel %vm438, %v819, 0
        %v839 = vsel %vm438, %v820, 0
        %v842 = vsel %vm438, %v821, 0
        %v845 = vsel %vm438, %v822, 0
        %v848 = vsel %vm463, %v798, 0
        %850 = vmatprep.subr.bf16.mxu0 0
        %851 = vmatpush1.bf16.msra.mxu0 %v848
        %852 = vmatprep.subr.bf16.mxu0 0
        %853 = vmatpush1.bf16.msra.mxu0 0
        %854 = vmatprep.subr.bf16.mxu0 0
        %855 = vmatpush1.bf16.msra.mxu0 0
        %856 = vmatprep.subr.bf16.mxu0 0
        %857 = vmatpush1.bf16.msra.mxu0 0
        %858 = vmatprep.subr.bf16.mxu0 0
        %859 = vmatpush1.bf16.msra.mxu0 0
        %860 = vmatprep.subr.bf16.mxu0 0
        %861 = vmatpush1.bf16.msra.mxu0 0
        %862 = vmatprep.subr.bf16.mxu0 0
        %863 = vmatpush1.bf16.msra.mxu0 0
        %864 = vmatprep.subr.bf16.mxu0 0
        %865 = vmatpush1.bf16.msra.mxu0 0
        %866 = vmatprep.subr.bf16.mxu0 0
        %867 = vmatpush1.bf16.msra.mxu0 0
        %868 = vmatprep.subr.bf16.mxu0 0
        %869 = vmatpush1.bf16.msra.mxu0 0
        %870 = vmatprep.subr.bf16.mxu0 0
        %871 = vmatpush1.bf16.msra.mxu0 0
        %872 = vmatprep.subr.bf16.mxu0 0
        %873 = vmatpush1.bf16.msra.mxu0 0
        %874 = vmatprep.subr.bf16.mxu0 0
        %875 = vmatpush1.bf16.msra.mxu0 0
        %876 = vmatprep.subr.bf16.mxu0 0
        %877 = vmatpush1.bf16.msra.mxu0 0
        %878 = vmatprep.subr.bf16.mxu0 0
        %879 = vmatpush1.bf16.msra.mxu0 0
        %880 = vmatprep.subr.bf16.mxu0 0
        %881 = vmatpush1.bf16.msra.mxu0 0
        %882 = vmatprep.mubr.bf16.mxu0 0
        %883 = vmatmul.mubr.bf16.gmra.mrb[0].mxu0 %v824
        %v884 = vpop.f32.mrb[0].mxu0
        %v885 = vadd.f32 0.0, %v884
        %v886 = vpop.f32.mrb[0].mxu0
        %v887 = vpop.f32.mrb[0].mxu0
        %v888 = vadd.f32 0.0, %v887
        %v889 = vpop.f32.mrb[0].mxu0
        %890 = vmatprep.mubr.bf16.mxu0 0
        %891 = vmatmul.mubr.bf16.gmra.mrb[0].mxu0 %v827
        %v892 = vpop.f32.mrb[0].mxu0
        %v893 = vadd.f32 0.0, %v892
        %v894 = vpop.f32.mrb[0].mxu0
        %v895 = vpop.f32.mrb[0].mxu0
        %v896 = vadd.f32 0.0, %v895
        %v897 = vpop.f32.mrb[0].mxu0
        %898 = vmatprep.mubr.bf16.mxu0 0
        %899 = vmatmul.mubr.bf16.gmra.mrb[0].mxu0 %v830
        %v900 = vpop.f32.mrb[0].mxu0
        %v901 = vadd.f32 0.0, %v900
        %v902 = vpop.f32.mrb[0].mxu0
        %v903 = vpop.f32.mrb[0].mxu0
        %v904 = vadd.f32 0.0, %v903
        %v905 = vpop.f32.mrb[0].mxu0
        %906 = vmatprep.mubr.bf16.mxu0 0
        %907 = vmatmul.mubr.bf16.gmra.mrb[0].mxu0 %v833
        %v908 = vpop.f32.mrb[0].mxu0
        %v909 = vadd.f32 0.0, %v908
        %v910 = vpop.f32.mrb[0].mxu0
        %v911 = vpop.f32.mrb[0].mxu0
        %v912 = vadd.f32 0.0, %v911
        %v913 = vpop.f32.mrb[0].mxu0
        %914 = vmatprep.mubr.bf16.mxu0 0
        %915 = vmatmul.mubr.bf16.gmra.mrb[0].mxu0 %v836
        %v916 = vpop.f32.mrb[0].mxu0
        %v917 = vadd.f32 0.0, %v916
        %v918 = vpop.f32.mrb[0].mxu0
        %v919 = vpop.f32.mrb[0].mxu0
        %v920 = vadd.f32 0.0, %v919
        %v921 = vpop.f32.mrb[0].mxu0
        %922 = vmatprep.mubr.bf16.mxu0 0
        %923 = vmatmul.mubr.bf16.gmra.mrb[0].mxu0 %v839
        %v924 = vpop.f32.mrb[0].mxu0
        %v925 = vadd.f32 0.0, %v924
        %v926 = vpop.f32.mrb[0].mxu0
        %v927 = vpop.f32.mrb[0].mxu0
        %v928 = vadd.f32 0.0, %v927
        %v929 = vpop.f32.mrb[0].mxu0
        %930 = vmatprep.mubr.bf16.mxu0 0
        %931 = vmatmul.mubr.bf16.gmra.mrb[0].mxu0 %v842
        %v932 = vpop.f32.mrb[0].mxu0
        %v933 = vadd.f32 0.0, %v932
        %v934 = vpop.f32.mrb[0].mxu0
        %v935 = vpop.f32.mrb[0].mxu0
        %v936 = vadd.f32 0.0, %v935
        %v937 = vpop.f32.mrb[0].mxu0
        %938 = vmatprep.mubr.bf16.mxu0 0
        %939 = vmatmul.mubr.bf16.gmra.mrb[0].mxu0 %v845
        %v940 = vpop.f32.mrb[0].mxu0
        %v941 = vadd.f32 0.0, %v940
        %v942 = vpop.f32.mrb[0].mxu0
        %v943 = vpop.f32.mrb[0].mxu0
        %v944 = vadd.f32 0.0, %v943
        %v945 = vpop.f32.mrb[0].mxu0
        %946 = vdwg.mxu0
        %v948 = vsel %vm463, %v729, 0
        %950 = vmatprep.subr.bf16.mxu0 0
        %951 = vmatpush1.bf16.msra.mxu0 %v948
        %952 = vmatprep.subr.bf16.mxu0 0
        %953 = vmatpush1.bf16.msra.mxu0 0
        %954 = vmatprep.subr.bf16.mxu0 0
        %955 = vmatpush1.bf16.msra.mxu0 0
        %956 = vmatprep.subr.bf16.mxu0 0
        %957 = vmatpush1.bf16.msra.mxu0 0
        %958 = vmatprep.subr.bf16.mxu0 0
        %959 = vmatpush1.bf16.msra.mxu0 0
        %960 = vmatprep.subr.bf16.mxu0 0
        %961 = vmatpush1.bf16.msra.mxu0 0
        %962 = vmatprep.subr.bf16.mxu0 0
        %963 = vmatpush1.bf16.msra.mxu0 0
        %964 = vmatprep.subr.bf16.mxu0 0
        %965 = vmatpush1.bf16.msra.mxu0 0
        %966 = vmatprep.subr.bf16.mxu0 0
        %967 = vmatpush1.bf16.msra.mxu0 0
        %968 = vmatprep.subr.bf16.mxu0 0
        %969 = vmatpush1.bf16.msra.mxu0 0
        %970 = vmatprep.subr.bf16.mxu0 0
        %971 = vmatpush1.bf16.msra.mxu0 0
        %972 = vmatprep.subr.bf16.mxu0 0
        %973 = vmatpush1.bf16.msra.mxu0 0
        %974 = vmatprep.subr.bf16.mxu0 0
        %975 = vmatpush1.bf16.msra.mxu0 0
        %976 = vmatprep.subr.bf16.mxu0 0
        %977 = vmatpush1.bf16.msra.mxu0 0
        %978 = vmatprep.subr.bf16.mxu0 0
        %979 = vmatpush1.bf16.msra.mxu0 0
        %980 = vmatprep.subr.bf16.mxu0 0
        %981 = vmatpush1.bf16.msra.mxu0 0
        %982 = vmatprep.mubr.bf16.mxu0 0
        %983 = vmatmul.mubr.bf16.gmra.mrb[0].mxu0 %v440
        %v984 = vpop.f32.mrb[0].mxu0
        %v985 = vadd.f32 %v885, %v984
        %v986 = vpop.f32.mrb[0].mxu0
        %v987 = vpop.f32.mrb[0].mxu0
        %v988 = vadd.f32 %v888, %v987
        %v989 = vpop.f32.mrb[0].mxu0
        %990 = vmatprep.mubr.bf16.mxu0 0
        %991 = vmatmul.mubr.bf16.gmra.mrb[0].mxu0 %v443
        %v992 = vpop.f32.mrb[0].mxu0
        %v993 = vadd.f32 %v893, %v992
        %v994 = vpop.f32.mrb[0].mxu0
        %v995 = vpop.f32.mrb[0].mxu0
        %v996 = vadd.f32 %v896, %v995
        %v997 = vpop.f32.mrb[0].mxu0
        %998 = vmatprep.mubr.bf16.mxu0 0
        %999 = vmatmul.mubr.bf16.gmra.mrb[0].mxu0 %v446
        %v1000 = vpop.f32.mrb[0].mxu0
        %v1001 = vadd.f32 %v901, %v1000
        %v1002 = vpop.f32.mrb[0].mxu0
        %v1003 = vpop.f32.mrb[0].mxu0
        %v1004 = vadd.f32 %v904, %v1003
        %v1005 = vpop.f32.mrb[0].mxu0
        %1006 = vmatprep.mubr.bf16.mxu0 0
        %1007 = vmatmul.mubr.bf16.gmra.mrb[0].mxu0 %v449
        %v1008 = vpop.f32.mrb[0].mxu0
        %v1009 = vadd.f32 %v909, %v1008
        %v1010 = vpop.f32.mrb[0].mxu0
        %v1011 = vpop.f32.mrb[0].mxu0
        %v1012 = vadd.f32 %v912, %v1011
        %v1013 = vpop.f32.mrb[0].mxu0
        %1014 = vmatprep.mubr.bf16.mxu0 0
        %1015 = vmatmul.mubr.bf16.gmra.mrb[0].mxu0 %v452
        %v1016 = vpop.f32.mrb[0].mxu0
        %v1017 = vadd.f32 %v917, %v1016
        %v1018 = vpop.f32.mrb[0].mxu0
        %v1019 = vpop.f32.mrb[0].mxu0
        %v1020 = vadd.f32 %v920, %v1019
        %v1021 = vpop.f32.mrb[0].mxu0
        %1022 = vmatprep.mubr.bf16.mxu0 0
        %1023 = vmatmul.mubr.bf16.gmra.mrb[0].mxu0 %v455
        %v1024 = vpop.f32.mrb[0].mxu0
        %v1025 = vadd.f32 %v925, %v1024
        %v1026 = vpop.f32.mrb[0].mxu0
        %v1027 = vpop.f32.mrb[0].mxu0
        %v1028 = vadd.f32 %v928, %v1027
        %v1029 = vpop.f32.mrb[0].mxu0
        %1030 = vmatprep.mubr.bf16.mxu0 0
        %1031 = vmatmul.mubr.bf16.gmra.mrb[0].mxu0 %v458
        %v1032 = vpop.f32.mrb[0].mxu0
        %v1033 = vadd.f32 %v933, %v1032
        %v1034 = vpop.f32.mrb[0].mxu0
        %v1035 = vpop.f32.mrb[0].mxu0
        %v1036 = vadd.f32 %v936, %v1035
        %v1037 = vpop.f32.mrb[0].mxu0
        %1038 = vmatprep.mubr.bf16.mxu0 0
        %1039 = vmatmul.mubr.bf16.gmra.mrb[0].mxu0 %v461
        %v1040 = vpop.f32.mrb[0].mxu0
        %v1041 = vadd.f32 %v941, %v1040
        %v1042 = vpop.f32.mrb[0].mxu0
        %v1043 = vpop.f32.mrb[0].mxu0
        %v1044 = vadd.f32 %v944, %v1043
        %v1045 = vpop.f32.mrb[0].mxu0
        %1046 = vdwg.mxu0
        %s1047 = scalar_lea.vmem %s1, 4
        %v1048 = vld [vmem:[%s1047] sm:$0x3]
        %v1051 = vunpack.c.l.b16 %v209
        %v1052 = vunpack.c.l.b16 %v210
        %v1053 = vpack.c.b16 %v1052, %v1051
        %v1055 = vsel %vm438, %v1053, 0
        %v1058 = vsel %vm463, %v1048, 0
        %1060 = vmatprep.subr.bf16.mxu0 0
        %1061 = vmatpush1.bf16.msra.mxu0 %v1058
        %1062 = vmatprep.subr.bf16.mxu0 0
        %1063 = vmatpush1.bf16.msra.mxu0 0
        %1064 = vmatprep.subr.bf16.mxu0 0
        %1065 = vmatpush1.bf16.msra.mxu0 0
        %1066 = vmatprep.subr.bf16.mxu0 0
        %1067 = vmatpush1.bf16.msra.mxu0 0
        %1068 = vmatprep.subr.bf16.mxu0 0
        %1069 = vmatpush1.bf16.msra.mxu0 0
        %1070 = vmatprep.subr.bf16.mxu0 0
        %1071 = vmatpush1.bf16.msra.mxu0 0
        %1072 = vmatprep.subr.bf16.mxu0 0
        %1073 = vmatpush1.bf16.msra.mxu0 0
        %1074 = vmatprep.subr.bf16.mxu0 0
        %1075 = vmatpush1.bf16.msra.mxu0 0
        %1076 = vmatprep.subr.bf16.mxu0 0
        %1077 = vmatpush1.bf16.msra.mxu0 0
        %1078 = vmatprep.subr.bf16.mxu0 0
        %1079 = vmatpush1.bf16.msra.mxu0 0
        %1080 = vmatprep.subr.bf16.mxu0 0
        %1081 = vmatpush1.bf16.msra.mxu0 0
        %1082 = vmatprep.subr.bf16.mxu0 0
        %1083 = vmatpush1.bf16.msra.mxu0 0
        %1084 = vmatprep.subr.bf16.mxu0 0
        %1085 = vmatpush1.bf16.msra.mxu0 0
        %1086 = vmatprep.subr.bf16.mxu0 0
        %1087 = vmatpush1.bf16.msra.mxu0 0
        %1088 = vmatprep.subr.bf16.mxu0 0
        %1089 = vmatpush1.bf16.msra.mxu0 0
        %1090 = vmatprep.subr.bf16.mxu0 0
        %1091 = vmatpush1.bf16.msra.mxu0 0
        %1092 = vmatprep.mubr.bf16.mxu0 0
        %1093 = vmatmul.mubr.bf16.gmra.mrb[0].mxu0 %v608
        %v1094 = vpop.f32.mrb[0].mxu0
        %v1095 = vadd.f32 0.0, %v1094
        %v1096 = vpop.f32.mrb[0].mxu0
        %v1097 = vpop.f32.mrb[0].mxu0
        %v1098 = vadd.f32 0.0, %v1097
        %v1099 = vpop.f32.mrb[0].mxu0
        %1100 = vmatprep.mubr.bf16.mxu0 0
        %1101 = vmatmul.mubr.bf16.gmra.mrb[0].mxu0 %v611
        %v1102 = vpop.f32.mrb[0].mxu0
        %v1103 = vadd.f32 0.0, %v1102
        %v1104 = vpop.f32.mrb[0].mxu0
        %v1105 = vpop.f32.mrb[0].mxu0
        %v1106 = vadd.f32 0.0, %v1105
        %v1107 = vpop.f32.mrb[0].mxu0
        %1108 = vmatprep.mubr.bf16.mxu0 0
        %1109 = vmatmul.mubr.bf16.gmra.mrb[0].mxu0 %v614
        %v1110 = vpop.f32.mrb[0].mxu0
        %v1111 = vadd.f32 0.0, %v1110
        %v1112 = vpop.f32.mrb[0].mxu0
        %v1113 = vpop.f32.mrb[0].mxu0
        %v1114 = vadd.f32 0.0, %v1113
        %v1115 = vpop.f32.mrb[0].mxu0
        %1116 = vmatprep.mubr.bf16.mxu0 0
        %1117 = vmatmul.mubr.bf16.gmra.mrb[0].mxu0 %v617
        %v1118 = vpop.f32.mrb[0].mxu0
        %v1119 = vadd.f32 0.0, %v1118
        %v1120 = vpop.f32.mrb[0].mxu0
        %v1121 = vpop.f32.mrb[0].mxu0
        %v1122 = vadd.f32 0.0, %v1121
        %v1123 = vpop.f32.mrb[0].mxu0
        %1124 = vmatprep.mubr.bf16.mxu0 0
        %1125 = vmatmul.mubr.bf16.gmra.mrb[0].mxu0 %v620
        %v1126 = vpop.f32.mrb[0].mxu0
        %v1127 = vadd.f32 0.0, %v1126
        %v1128 = vpop.f32.mrb[0].mxu0
        %v1129 = vpop.f32.mrb[0].mxu0
        %v1130 = vadd.f32 0.0, %v1129
        %v1131 = vpop.f32.mrb[0].mxu0
        %1132 = vmatprep.mubr.bf16.mxu0 0
        %1133 = vmatmul.mubr.bf16.gmra.mrb[0].mxu0 %v623
        %v1134 = vpop.f32.mrb[0].mxu0
        %v1135 = vadd.f32 0.0, %v1134
        %v1136 = vpop.f32.mrb[0].mxu0
        %v1137 = vpop.f32.mrb[0].mxu0
        %v1138 = vadd.f32 0.0, %v1137
        %v1139 = vpop.f32.mrb[0].mxu0
        %1140 = vmatprep.mubr.bf16.mxu0 0
        %1141 = vmatmul.mubr.bf16.gmra.mrb[0].mxu0 %v626
        %v1142 = vpop.f32.mrb[0].mxu0
        %v1143 = vadd.f32 0.0, %v1142
        %v1144 = vpop.f32.mrb[0].mxu0
        %v1145 = vpop.f32.mrb[0].mxu0
        %v1146 = vadd.f32 0.0, %v1145
        %v1147 = vpop.f32.mrb[0].mxu0
        %1148 = vmatprep.mubr.bf16.mxu0 0
        %1149 = vmatmul.mubr.bf16.gmra.mrb[0].mxu0 %v1055
        %v1150 = vpop.f32.mrb[0].mxu0
        %v1151 = vadd.f32 0.0, %v1150
        %v1152 = vpop.f32.mrb[0].mxu0
        %v1153 = vpop.f32.mrb[0].mxu0
        %v1154 = vadd.f32 0.0, %v1153
        %v1155 = vpop.f32.mrb[0].mxu0
        %1156 = vdwg.mxu0
        %v1157 = vadd.f32 %v666, %v1095
        %v1158 = vadd.f32 %v669, %v1098
        %v1159 = vadd.f32 %v674, %v1103
        %v1160 = vadd.f32 %v677, %v1106
        %v1161 = vadd.f32 %v682, %v1111
        %v1162 = vadd.f32 %v685, %v1114
        %v1163 = vadd.f32 %v690, %v1119
        %v1164 = vadd.f32 %v693, %v1122
        %v1165 = vadd.f32 %v698, %v1127
        %v1166 = vadd.f32 %v701, %v1130
        %v1167 = vadd.f32 %v706, %v1135
        %v1168 = vadd.f32 %v709, %v1138
        %v1169 = vadd.f32 %v714, %v1143
        %v1170 = vadd.f32 %v717, %v1146
        %v1171 = vadd.f32 %v722, %v1151
        %v1172 = vadd.f32 %v725, %v1154
        %s1173 = scalar_lea.vmem %s1, 16
        %v1174 = vld [vmem:[%s1173] sm:$0x3]
        %v1176 = vshrl.u32 %v209, 16
        %v1178 = vrot.slane %v1176, 4
        %v1179 = vshll.u32 %v209, 16
        %v1181 = vrot.slane %v1179, 5
        %v1182 = vor.u32 %v1178, %v1181
        %v1183 = vrot.slane %v1182, 4
        %v1185 = vshll.u32 %v210, 16
        %v1187 = vrot.slane %v1185, 5
        %v1188 = vsel %vm219, %v1183, %v1187
        %v1189 = vshrl.u32 %v210, 16
        %v1191 = vrot.slane %v1189, 4
        %v1192 = vor.u32 %v1191, %v1187
        %v1193 = vrot.slane %v1192, 4
        %v1195 = vshll.u32 %v211, 16
        %v1197 = vrot.slane %v1195, 5
        %v1198 = vsel %vm219, %v1193, %v1197
        %s1199 = scalar_lea.vmem %s1, 6
        %v1200 = vld [vmem:[%s1199] sm:$0x3]
        %v1201 = vunpack.c.l.b16 %v1188
        %v1202 = vunpack.c.l.b16 %v1198
        %v1203 = vpack.c.b16 %v1202, %v1201
        %v1205 = vsel %vm438, %v1203, 0
        %v1208 = vsel %vm463, %v1200, 0
        %1210 = vmatprep.subr.bf16.mxu0 0
        %1211 = vmatpush1.bf16.msra.mxu0 %v1208
        %1212 = vmatprep.subr.bf16.mxu0 0
        %1213 = vmatpush1.bf16.msra.mxu0 0
        %1214 = vmatprep.subr.bf16.mxu0 0
        %1215 = vmatpush1.bf16.msra.mxu0 0
        %1216 = vmatprep.subr.bf16.mxu0 0
        %1217 = vmatpush1.bf16.msra.mxu0 0
        %1218 = vmatprep.subr.bf16.mxu0 0
        %1219 = vmatpush1.bf16.msra.mxu0 0
        %1220 = vmatprep.subr.bf16.mxu0 0
        %1221 = vmatpush1.bf16.msra.mxu0 0
        %1222 = vmatprep.subr.bf16.mxu0 0
        %1223 = vmatpush1.bf16.msra.mxu0 0
        %1224 = vmatprep.subr.bf16.mxu0 0
        %1225 = vmatpush1.bf16.msra.mxu0 0
        %1226 = vmatprep.subr.bf16.mxu0 0
        %1227 = vmatpush1.bf16.msra.mxu0 0
        %1228 = vmatprep.subr.bf16.mxu0 0
        %1229 = vmatpush1.bf16.msra.mxu0 0
        %1230 = vmatprep.subr.bf16.mxu0 0
        %1231 = vmatpush1.bf16.msra.mxu0 0
        %1232 = vmatprep.subr.bf16.mxu0 0
        %1233 = vmatpush1.bf16.msra.mxu0 0
        %1234 = vmatprep.subr.bf16.mxu0 0
        %1235 = vmatpush1.bf16.msra.mxu0 0
        %1236 = vmatprep.subr.bf16.mxu0 0
        %1237 = vmatpush1.bf16.msra.mxu0 0
        %1238 = vmatprep.subr.bf16.mxu0 0
        %1239 = vmatpush1.bf16.msra.mxu0 0
        %1240 = vmatprep.subr.bf16.mxu0 0
        %1241 = vmatpush1.bf16.msra.mxu0 0
        %1242 = vmatprep.mubr.bf16.mxu0 0
        %1243 = vmatmul.mubr.bf16.gmra.mrb[0].mxu0 %v443
        %v1244 = vpop.f32.mrb[0].mxu0
        %v1245 = vadd.f32 0.0, %v1244
        %v1246 = vpop.f32.mrb[0].mxu0
        %v1247 = vpop.f32.mrb[0].mxu0
        %v1248 = vadd.f32 0.0, %v1247
        %v1249 = vpop.f32.mrb[0].mxu0
        %1250 = vmatprep.mubr.bf16.mxu0 0
        %1251 = vmatmul.mubr.bf16.gmra.mrb[0].mxu0 %v446
        %v1252 = vpop.f32.mrb[0].mxu0
        %v1253 = vadd.f32 0.0, %v1252
        %v1254 = vpop.f32.mrb[0].mxu0
        %v1255 = vpop.f32.mrb[0].mxu0
        %v1256 = vadd.f32 0.0, %v1255
        %v1257 = vpop.f32.mrb[0].mxu0
        %1258 = vmatprep.mubr.bf16.mxu0 0
        %1259 = vmatmul.mubr.bf16.gmra.mrb[0].mxu0 %v449
        %v1260 = vpop.f32.mrb[0].mxu0
        %v1261 = vadd.f32 0.0, %v1260
        %v1262 = vpop.f32.mrb[0].mxu0
        %v1263 = vpop.f32.mrb[0].mxu0
        %v1264 = vadd.f32 0.0, %v1263
        %v1265 = vpop.f32.mrb[0].mxu0
        %1266 = vmatprep.mubr.bf16.mxu0 0
        %1267 = vmatmul.mubr.bf16.gmra.mrb[0].mxu0 %v452
        %v1268 = vpop.f32.mrb[0].mxu0
        %v1269 = vadd.f32 0.0, %v1268
        %v1270 = vpop.f32.mrb[0].mxu0
        %v1271 = vpop.f32.mrb[0].mxu0
        %v1272 = vadd.f32 0.0, %v1271
        %v1273 = vpop.f32.mrb[0].mxu0
        %1274 = vmatprep.mubr.bf16.mxu0 0
        %1275 = vmatmul.mubr.bf16.gmra.mrb[0].mxu0 %v455
        %v1276 = vpop.f32.mrb[0].mxu0
        %v1277 = vadd.f32 0.0, %v1276
        %v1278 = vpop.f32.mrb[0].mxu0
        %v1279 = vpop.f32.mrb[0].mxu0
        %v1280 = vadd.f32 0.0, %v1279
        %v1281 = vpop.f32.mrb[0].mxu0
        %1282 = vmatprep.mubr.bf16.mxu0 0
        %1283 = vmatmul.mubr.bf16.gmra.mrb[0].mxu0 %v458
        %v1284 = vpop.f32.mrb[0].mxu0
        %v1285 = vadd.f32 0.0, %v1284
        %v1286 = vpop.f32.mrb[0].mxu0
        %v1287 = vpop.f32.mrb[0].mxu0
        %v1288 = vadd.f32 0.0, %v1287
        %v1289 = vpop.f32.mrb[0].mxu0
        %1290 = vmatprep.mubr.bf16.mxu0 0
        %1291 = vmatmul.mubr.bf16.gmra.mrb[0].mxu0 %v461
        %v1292 = vpop.f32.mrb[0].mxu0
        %v1293 = vadd.f32 0.0, %v1292
        %v1294 = vpop.f32.mrb[0].mxu0
        %v1295 = vpop.f32.mrb[0].mxu0
        %v1296 = vadd.f32 0.0, %v1295
        %v1297 = vpop.f32.mrb[0].mxu0
        %1298 = vmatprep.mubr.bf16.mxu0 0
        %1299 = vmatmul.mubr.bf16.gmra.mrb[0].mxu0 %v1205
        %v1300 = vpop.f32.mrb[0].mxu0
        %v1301 = vadd.f32 0.0, %v1300
        %v1302 = vpop.f32.mrb[0].mxu0
        %v1303 = vpop.f32.mrb[0].mxu0
        %v1304 = vadd.f32 0.0, %v1303
        %v1305 = vpop.f32.mrb[0].mxu0
        %1306 = vdwg.mxu0
        %v1307 = vadd.f32 %v1157, %v1245
        %v1308 = vadd.f32 %v1158, %v1248
        %v1309 = vadd.f32 %v1159, %v1253
        %v1310 = vadd.f32 %v1160, %v1256
        %v1311 = vadd.f32 %v1161, %v1261
        %v1312 = vadd.f32 %v1162, %v1264
        %v1313 = vadd.f32 %v1163, %v1269
        %v1314 = vadd.f32 %v1164, %v1272
        %v1315 = vadd.f32 %v1165, %v1277
        %v1316 = vadd.f32 %v1166, %v1280
        %v1317 = vadd.f32 %v1167, %v1285
        %v1318 = vadd.f32 %v1168, %v1288
        %v1319 = vadd.f32 %v1169, %v1293
        %v1320 = vadd.f32 %v1170, %v1296
        %v1321 = vadd.f32 %v1171, %v1301
        %v1322 = vadd.f32 %v1172, %v1304
        %s1323 = scalar_lea.vmem %s1, 12
        %v1324 = vld [vmem:[%s1323] sm:$0x3]
        %v1326 = vsel %vm463, %v1324, 0
        %1328 = vmatprep.subr.bf16.mxu0 0
        %1329 = vmatpush1.bf16.msra.mxu0 %v1326
        %1330 = vmatprep.subr.bf16.mxu0 0
        %1331 = vmatpush1.bf16.msra.mxu0 0
        %1332 = vmatprep.subr.bf16.mxu0 0
        %1333 = vmatpush1.bf16.msra.mxu0 0
        %1334 = vmatprep.subr.bf16.mxu0 0
        %1335 = vmatpush1.bf16.msra.mxu0 0
        %1336 = vmatprep.subr.bf16.mxu0 0
        %1337 = vmatpush1.bf16.msra.mxu0 0
        %1338 = vmatprep.subr.bf16.mxu0 0
        %1339 = vmatpush1.bf16.msra.mxu0 0
        %1340 = vmatprep.subr.bf16.mxu0 0
        %1341 = vmatpush1.bf16.msra.mxu0 0
        %1342 = vmatprep.subr.bf16.mxu0 0
        %1343 = vmatpush1.bf16.msra.mxu0 0
        %1344 = vmatprep.subr.bf16.mxu0 0
        %1345 = vmatpush1.bf16.msra.mxu0 0
        %1346 = vmatprep.subr.bf16.mxu0 0
        %1347 = vmatpush1.bf16.msra.mxu0 0
        %1348 = vmatprep.subr.bf16.mxu0 0
        %1349 = vmatpush1.bf16.msra.mxu0 0
        %1350 = vmatprep.subr.bf16.mxu0 0
        %1351 = vmatpush1.bf16.msra.mxu0 0
        %1352 = vmatprep.subr.bf16.mxu0 0
        %1353 = vmatpush1.bf16.msra.mxu0 0
        %1354 = vmatprep.subr.bf16.mxu0 0
        %1355 = vmatpush1.bf16.msra.mxu0 0
        %1356 = vmatprep.subr.bf16.mxu0 0
        %1357 = vmatpush1.bf16.msra.mxu0 0
        %1358 = vmatprep.subr.bf16.mxu0 0
        %1359 = vmatpush1.bf16.msra.mxu0 0
        %1360 = vmatprep.mubr.bf16.mxu0 0
        %1361 = vmatmul.mubr.bf16.gmra.mrb[0].mxu0 %v443
        %v1362 = vpop.f32.mrb[0].mxu0
        %v1363 = vadd.f32 0.0, %v1362
        %v1364 = vpop.f32.mrb[0].mxu0
        %v1365 = vpop.f32.mrb[0].mxu0
        %v1366 = vadd.f32 0.0, %v1365
        %v1367 = vpop.f32.mrb[0].mxu0
        %1368 = vmatprep.mubr.bf16.mxu0 0
        %1369 = vmatmul.mubr.bf16.gmra.mrb[0].mxu0 %v446
        %v1370 = vpop.f32.mrb[0].mxu0
        %v1371 = vadd.f32 0.0, %v1370
        %v1372 = vpop.f32.mrb[0].mxu0
        %v1373 = vpop.f32.mrb[0].mxu0
        %v1374 = vadd.f32 0.0, %v1373
        %v1375 = vpop.f32.mrb[0].mxu0
        %1376 = vmatprep.mubr.bf16.mxu0 0
        %1377 = vmatmul.mubr.bf16.gmra.mrb[0].mxu0 %v449
        %v1378 = vpop.f32.mrb[0].mxu0
        %v1379 = vadd.f32 0.0, %v1378
        %v1380 = vpop.f32.mrb[0].mxu0
        %v1381 = vpop.f32.mrb[0].mxu0
        %v1382 = vadd.f32 0.0, %v1381
        %v1383 = vpop.f32.mrb[0].mxu0
        %1384 = vmatprep.mubr.bf16.mxu0 0
        %1385 = vmatmul.mubr.bf16.gmra.mrb[0].mxu0 %v452
        %v1386 = vpop.f32.mrb[0].mxu0
        %v1387 = vadd.f32 0.0, %v1386
        %v1388 = vpop.f32.mrb[0].mxu0
        %v1389 = vpop.f32.mrb[0].mxu0
        %v1390 = vadd.f32 0.0, %v1389
        %v1391 = vpop.f32.mrb[0].mxu0
        %1392 = vmatprep.mubr.bf16.mxu0 0
        %1393 = vmatmul.mubr.bf16.gmra.mrb[0].mxu0 %v455
        %v1394 = vpop.f32.mrb[0].mxu0
        %v1395 = vadd.f32 0.0, %v1394
        %v1396 = vpop.f32.mrb[0].mxu0
        %v1397 = vpop.f32.mrb[0].mxu0
        %v1398 = vadd.f32 0.0, %v1397
        %v1399 = vpop.f32.mrb[0].mxu0
        %1400 = vmatprep.mubr.bf16.mxu0 0
        %1401 = vmatmul.mubr.bf16.gmra.mrb[0].mxu0 %v458
        %v1402 = vpop.f32.mrb[0].mxu0
        %v1403 = vadd.f32 0.0, %v1402
        %v1404 = vpop.f32.mrb[0].mxu0
        %v1405 = vpop.f32.mrb[0].mxu0
        %v1406 = vadd.f32 0.0, %v1405
        %v1407 = vpop.f32.mrb[0].mxu0
        %1408 = vmatprep.mubr.bf16.mxu0 0
        %1409 = vmatmul.mubr.bf16.gmra.mrb[0].mxu0 %v461
        %v1410 = vpop.f32.mrb[0].mxu0
        %v1411 = vadd.f32 0.0, %v1410
        %v1412 = vpop.f32.mrb[0].mxu0
        %v1413 = vpop.f32.mrb[0].mxu0
        %v1414 = vadd.f32 0.0, %v1413
        %v1415 = vpop.f32.mrb[0].mxu0
        %1416 = vmatprep.mubr.bf16.mxu0 0
        %1417 = vmatmul.mubr.bf16.gmra.mrb[0].mxu0 %v1205
        %v1418 = vpop.f32.mrb[0].mxu0
        %v1419 = vadd.f32 0.0, %v1418
        %v1420 = vpop.f32.mrb[0].mxu0
        %v1421 = vpop.f32.mrb[0].mxu0
        %v1422 = vadd.f32 0.0, %v1421
        %v1423 = vpop.f32.mrb[0].mxu0
        %1424 = vdwg.mxu0
        %v1425 = vadd.f32 %v985, %v1363
        %v1426 = vadd.f32 %v988, %v1366
        %v1427 = vadd.f32 %v993, %v1371
        %v1428 = vadd.f32 %v996, %v1374
        %v1429 = vadd.f32 %v1001, %v1379
        %v1430 = vadd.f32 %v1004, %v1382
        %v1431 = vadd.f32 %v1009, %v1387
        %v1432 = vadd.f32 %v1012, %v1390
        %v1433 = vadd.f32 %v1017, %v1395
        %v1434 = vadd.f32 %v1020, %v1398
        %v1435 = vadd.f32 %v1025, %v1403
        %v1436 = vadd.f32 %v1028, %v1406
        %v1437 = vadd.f32 %v1033, %v1411
        %v1438 = vadd.f32 %v1036, %v1414
        %v1439 = vadd.f32 %v1041, %v1419
        %v1440 = vadd.f32 %v1044, %v1422
        %s1441 = scalar_lea.vmem %s1, 18
        %v1442 = vld [vmem:[%s1441] sm:$0x3]
        %v1444 = vsel %vm463, %v1442, 0
        %1446 = vmatprep.subr.bf16.mxu0 0
        %1447 = vmatpush1.bf16.msra.mxu0 %v1444
        %1448 = vmatprep.subr.bf16.mxu0 0
        %1449 = vmatpush1.bf16.msra.mxu0 0
        %1450 = vmatprep.subr.bf16.mxu0 0
        %1451 = vmatpush1.bf16.msra.mxu0 0
        %1452 = vmatprep.subr.bf16.mxu0 0
        %1453 = vmatpush1.bf16.msra.mxu0 0
        %1454 = vmatprep.subr.bf16.mxu0 0
        %1455 = vmatpush1.bf16.msra.mxu0 0
        %1456 = vmatprep.subr.bf16.mxu0 0
        %1457 = vmatpush1.bf16.msra.mxu0 0
        %1458 = vmatprep.subr.bf16.mxu0 0
        %1459 = vmatpush1.bf16.msra.mxu0 0
        %1460 = vmatprep.subr.bf16.mxu0 0
        %1461 = vmatpush1.bf16.msra.mxu0 0
        %1462 = vmatprep.subr.bf16.mxu0 0
        %1463 = vmatpush1.bf16.msra.mxu0 0
        %1464 = vmatprep.subr.bf16.mxu0 0
        %1465 = vmatpush1.bf16.msra.mxu0 0
        %1466 = vmatprep.subr.bf16.mxu0 0
        %1467 = vmatpush1.bf16.msra.mxu0 0
        %1468 = vmatprep.subr.bf16.mxu0 0
        %1469 = vmatpush1.bf16.msra.mxu0 0
        %1470 = vmatprep.subr.bf16.mxu0 0
        %1471 = vmatpush1.bf16.msra.mxu0 0
        %1472 = vmatprep.subr.bf16.mxu0 0
        %1473 = vmatpush1.bf16.msra.mxu0 0
        %1474 = vmatprep.subr.bf16.mxu0 0
        %1475 = vmatpush1.bf16.msra.mxu0 0
        %1476 = vmatprep.subr.bf16.mxu0 0
        %1477 = vmatpush1.bf16.msra.mxu0 0
        %1478 = vmatprep.mubr.bf16.mxu0 0
        %1479 = vmatmul.mubr.bf16.gmra.mrb[0].mxu0 %v443
        %v1480 = vpop.f32.mrb[0].mxu0
        %v1481 = vadd.f32 0.0, %v1480
        %v1482 = vpop.f32.mrb[0].mxu0
        %v1483 = vpop.f32.mrb[0].mxu0
        %v1484 = vadd.f32 0.0, %v1483
        %v1485 = vpop.f32.mrb[0].mxu0
        %1486 = vmatprep.mubr.bf16.mxu0 0
        %1487 = vmatmul.mubr.bf16.gmra.mrb[0].mxu0 %v446
        %v1488 = vpop.f32.mrb[0].mxu0
        %v1489 = vadd.f32 0.0, %v1488
        %v1490 = vpop.f32.mrb[0].mxu0
        %v1491 = vpop.f32.mrb[0].mxu0
        %v1492 = vadd.f32 0.0, %v1491
        %v1493 = vpop.f32.mrb[0].mxu0
        %1494 = vmatprep.mubr.bf16.mxu0 0
        %1495 = vmatmul.mubr.bf16.gmra.mrb[0].mxu0 %v449
        %v1496 = vpop.f32.mrb[0].mxu0
        %v1497 = vadd.f32 0.0, %v1496
        %v1498 = vpop.f32.mrb[0].mxu0
        %v1499 = vpop.f32.mrb[0].mxu0
        %v1500 = vadd.f32 0.0, %v1499
        %v1501 = vpop.f32.mrb[0].mxu0
        %1502 = vmatprep.mubr.bf16.mxu0 0
        %1503 = vmatmul.mubr.bf16.gmra.mrb[0].mxu0 %v452
        %v1504 = vpop.f32.mrb[0].mxu0
        %v1505 = vadd.f32 0.0, %v1504
        %v1506 = vpop.f32.mrb[0].mxu0
        %v1507 = vpop.f32.mrb[0].mxu0
        %v1508 = vadd.f32 0.0, %v1507
        %v1509 = vpop.f32.mrb[0].mxu0
        %1510 = vmatprep.mubr.bf16.mxu0 0
        %1511 = vmatmul.mubr.bf16.gmra.mrb[0].mxu0 %v455
        %v1512 = vpop.f32.mrb[0].mxu0
        %v1513 = vadd.f32 0.0, %v1512
        %v1514 = vpop.f32.mrb[0].mxu0
        %v1515 = vpop.f32.mrb[0].mxu0
        %v1516 = vadd.f32 0.0, %v1515
        %v1517 = vpop.f32.mrb[0].mxu0
        %1518 = vmatprep.mubr.bf16.mxu0 0
        %1519 = vmatmul.mubr.bf16.gmra.mrb[0].mxu0 %v458
        %v1520 = vpop.f32.mrb[0].mxu0
        %v1521 = vadd.f32 0.0, %v1520
        %v1522 = vpop.f32.mrb[0].mxu0
        %v1523 = vpop.f32.mrb[0].mxu0
        %v1524 = vadd.f32 0.0, %v1523
        %v1525 = vpop.f32.mrb[0].mxu0
        %1526 = vmatprep.mubr.bf16.mxu0 0
        %1527 = vmatmul.mubr.bf16.gmra.mrb[0].mxu0 %v461
        %v1528 = vpop.f32.mrb[0].mxu0
        %v1529 = vadd.f32 0.0, %v1528
        %v1530 = vpop.f32.mrb[0].mxu0
        %v1531 = vpop.f32.mrb[0].mxu0
        %v1532 = vadd.f32 0.0, %v1531
        %v1533 = vpop.f32.mrb[0].mxu0
        %1534 = vmatprep.mubr.bf16.mxu0 0
        %1535 = vmatmul.mubr.bf16.gmra.mrb[0].mxu0 %v1205
        %v1536 = vpop.f32.mrb[0].mxu0
        %v1537 = vadd.f32 0.0, %v1536
        %v1538 = vpop.f32.mrb[0].mxu0
        %v1539 = vpop.f32.mrb[0].mxu0
        %v1540 = vadd.f32 0.0, %v1539
        %v1541 = vpop.f32.mrb[0].mxu0
        %1542 = vdwg.mxu0
        %v1544 = vsel %vm463, %v1174, 0
        %1546 = vmatprep.subr.bf16.mxu0 0
        %1547 = vmatpush1.bf16.msra.mxu0 %v1544
        %1548 = vmatprep.subr.bf16.mxu0 0
        %1549 = vmatpush1.bf16.msra.mxu0 0
        %1550 = vmatprep.subr.bf16.mxu0 0
        %1551 = vmatpush1.bf16.msra.mxu0 0
        %1552 = vmatprep.subr.bf16.mxu0 0
        %1553 = vmatpush1.bf16.msra.mxu0 0
        %1554 = vmatprep.subr.bf16.mxu0 0
        %1555 = vmatpush1.bf16.msra.mxu0 0
        %1556 = vmatprep.subr.bf16.mxu0 0
        %1557 = vmatpush1.bf16.msra.mxu0 0
        %1558 = vmatprep.subr.bf16.mxu0 0
        %1559 = vmatpush1.bf16.msra.mxu0 0
        %1560 = vmatprep.subr.bf16.mxu0 0
        %1561 = vmatpush1.bf16.msra.mxu0 0
        %1562 = vmatprep.subr.bf16.mxu0 0
        %1563 = vmatpush1.bf16.msra.mxu0 0
        %1564 = vmatprep.subr.bf16.mxu0 0
        %1565 = vmatpush1.bf16.msra.mxu0 0
        %1566 = vmatprep.subr.bf16.mxu0 0
        %1567 = vmatpush1.bf16.msra.mxu0 0
        %1568 = vmatprep.subr.bf16.mxu0 0
        %1569 = vmatpush1.bf16.msra.mxu0 0
        %1570 = vmatprep.subr.bf16.mxu0 0
        %1571 = vmatpush1.bf16.msra.mxu0 0
        %1572 = vmatprep.subr.bf16.mxu0 0
        %1573 = vmatpush1.bf16.msra.mxu0 0
        %1574 = vmatprep.subr.bf16.mxu0 0
        %1575 = vmatpush1.bf16.msra.mxu0 0
        %1576 = vmatprep.subr.bf16.mxu0 0
        %1577 = vmatpush1.bf16.msra.mxu0 0
        %1578 = vmatprep.mubr.bf16.mxu0 0
        %1579 = vmatmul.mubr.bf16.gmra.mrb[0].mxu0 %v608
        %v1580 = vpop.f32.mrb[0].mxu0
        %v1581 = vadd.f32 %v1481, %v1580
        %v1582 = vpop.f32.mrb[0].mxu0
        %v1583 = vpop.f32.mrb[0].mxu0
        %v1584 = vadd.f32 %v1484, %v1583
        %v1585 = vpop.f32.mrb[0].mxu0
        %1586 = vmatprep.mubr.bf16.mxu0 0
        %1587 = vmatmul.mubr.bf16.gmra.mrb[0].mxu0 %v611
        %v1588 = vpop.f32.mrb[0].mxu0
        %v1589 = vadd.f32 %v1489, %v1588
        %v1590 = vpop.f32.mrb[0].mxu0
        %v1591 = vpop.f32.mrb[0].mxu0
        %v1592 = vadd.f32 %v1492, %v1591
        %v1593 = vpop.f32.mrb[0].mxu0
        %1594 = vmatprep.mubr.bf16.mxu0 0
        %1595 = vmatmul.mubr.bf16.gmra.mrb[0].mxu0 %v614
        %v1596 = vpop.f32.mrb[0].mxu0
        %v1597 = vadd.f32 %v1497, %v1596
        %v1598 = vpop.f32.mrb[0].mxu0
        %v1599 = vpop.f32.mrb[0].mxu0
        %v1600 = vadd.f32 %v1500, %v1599
        %v1601 = vpop.f32.mrb[0].mxu0
        %1602 = vmatprep.mubr.bf16.mxu0 0
        %1603 = vmatmul.mubr.bf16.gmra.mrb[0].mxu0 %v617
        %v1604 = vpop.f32.mrb[0].mxu0
        %v1605 = vadd.f32 %v1505, %v1604
        %v1606 = vpop.f32.mrb[0].mxu0
        %v1607 = vpop.f32.mrb[0].mxu0
        %v1608 = vadd.f32 %v1508, %v1607
        %v1609 = vpop.f32.mrb[0].mxu0
        %1610 = vmatprep.mubr.bf16.mxu0 0
        %1611 = vmatmul.mubr.bf16.gmra.mrb[0].mxu0 %v620
        %v1612 = vpop.f32.mrb[0].mxu0
        %v1613 = vadd.f32 %v1513, %v1612
        %v1614 = vpop.f32.mrb[0].mxu0
        %v1615 = vpop.f32.mrb[0].mxu0
        %v1616 = vadd.f32 %v1516, %v1615
        %v1617 = vpop.f32.mrb[0].mxu0
        %1618 = vmatprep.mubr.bf16.mxu0 0
        %1619 = vmatmul.mubr.bf16.gmra.mrb[0].mxu0 %v623
        %v1620 = vpop.f32.mrb[0].mxu0
        %v1621 = vadd.f32 %v1521, %v1620
        %v1622 = vpop.f32.mrb[0].mxu0
        %v1623 = vpop.f32.mrb[0].mxu0
        %v1624 = vadd.f32 %v1524, %v1623
        %v1625 = vpop.f32.mrb[0].mxu0
        %1626 = vmatprep.mubr.bf16.mxu0 0
        %1627 = vmatmul.mubr.bf16.gmra.mrb[0].mxu0 %v626
        %v1628 = vpop.f32.mrb[0].mxu0
        %v1629 = vadd.f32 %v1529, %v1628
        %v1630 = vpop.f32.mrb[0].mxu0
        %v1631 = vpop.f32.mrb[0].mxu0
        %v1632 = vadd.f32 %v1532, %v1631
        %v1633 = vpop.f32.mrb[0].mxu0
        %1634 = vmatprep.mubr.bf16.mxu0 0
        %1635 = vmatmul.mubr.bf16.gmra.mrb[0].mxu0 %v1055
        %v1636 = vpop.f32.mrb[0].mxu0
        %v1637 = vadd.f32 %v1537, %v1636
        %v1638 = vpop.f32.mrb[0].mxu0
        %v1639 = vpop.f32.mrb[0].mxu0
        %v1640 = vadd.f32 %v1540, %v1639
        %v1641 = vpop.f32.mrb[0].mxu0
        %1642 = vdwg.mxu0
        %s1643 = scalar_lea.vmem %s1, 24
        %v1644 = vld [vmem:[%s1643] sm:$0x3]
        %v1646 = vrot.slane %v209, 5
        %v1647 = vrot.slane %v1646, 4
        %v1648 = vrot.slane %v210, 5
        %v1649 = vsel %vm740, %v1647, %v1648
        %v1650 = vrot.slane %v1648, 4
        %v1651 = vrot.slane %v211, 5
        %v1652 = vsel %vm740, %v1650, %v1651
        %s1653 = scalar_lea.vmem %s1, 14
        %v1654 = vld [vmem:[%s1653] sm:$0x3]
        %v1655 = vunpack.c.l.b16 %v1649
        %v1656 = vunpack.c.l.b16 %v1652
        %v1657 = vpack.c.b16 %v1656, %v1655
        %v1659 = vsel %vm438, %v1657, 0
        %v1662 = vsel %vm463, %v1654, 0
        %1664 = vmatprep.subr.bf16.mxu0 0
        %1665 = vmatpush1.bf16.msra.mxu0 %v1662
        %1666 = vmatprep.subr.bf16.mxu0 0
        %1667 = vmatpush1.bf16.msra.mxu0 0
        %1668 = vmatprep.subr.bf16.mxu0 0
        %1669 = vmatpush1.bf16.msra.mxu0 0
        %1670 = vmatprep.subr.bf16.mxu0 0
        %1671 = vmatpush1.bf16.msra.mxu0 0
        %1672 = vmatprep.subr.bf16.mxu0 0
        %1673 = vmatpush1.bf16.msra.mxu0 0
        %1674 = vmatprep.subr.bf16.mxu0 0
        %1675 = vmatpush1.bf16.msra.mxu0 0
        %1676 = vmatprep.subr.bf16.mxu0 0
        %1677 = vmatpush1.bf16.msra.mxu0 0
        %1678 = vmatprep.subr.bf16.mxu0 0
        %1679 = vmatpush1.bf16.msra.mxu0 0
        %1680 = vmatprep.subr.bf16.mxu0 0
        %1681 = vmatpush1.bf16.msra.mxu0 0
        %1682 = vmatprep.subr.bf16.mxu0 0
        %1683 = vmatpush1.bf16.msra.mxu0 0
        %1684 = vmatprep.subr.bf16.mxu0 0
        %1685 = vmatpush1.bf16.msra.mxu0 0
        %1686 = vmatprep.subr.bf16.mxu0 0
        %1687 = vmatpush1.bf16.msra.mxu0 0
        %1688 = vmatprep.subr.bf16.mxu0 0
        %1689 = vmatpush1.bf16.msra.mxu0 0
        %1690 = vmatprep.subr.bf16.mxu0 0
        %1691 = vmatpush1.bf16.msra.mxu0 0
        %1692 = vmatprep.subr.bf16.mxu0 0
        %1693 = vmatpush1.bf16.msra.mxu0 0
        %1694 = vmatprep.subr.bf16.mxu0 0
        %1695 = vmatpush1.bf16.msra.mxu0 0
        %1696 = vmatprep.mubr.bf16.mxu0 0
        %1697 = vmatmul.mubr.bf16.gmra.mrb[0].mxu0 %v827
        %v1698 = vpop.f32.mrb[0].mxu0
        %v1699 = vadd.f32 0.0, %v1698
        %v1700 = vpop.f32.mrb[0].mxu0
        %v1701 = vpop.f32.mrb[0].mxu0
        %v1702 = vadd.f32 0.0, %v1701
        %v1703 = vpop.f32.mrb[0].mxu0
        %1704 = vmatprep.mubr.bf16.mxu0 0
        %1705 = vmatmul.mubr.bf16.gmra.mrb[0].mxu0 %v830
        %v1706 = vpop.f32.mrb[0].mxu0
        %v1707 = vadd.f32 0.0, %v1706
        %v1708 = vpop.f32.mrb[0].mxu0
        %v1709 = vpop.f32.mrb[0].mxu0
        %v1710 = vadd.f32 0.0, %v1709
        %v1711 = vpop.f32.mrb[0].mxu0
        %1712 = vmatprep.mubr.bf16.mxu0 0
        %1713 = vmatmul.mubr.bf16.gmra.mrb[0].mxu0 %v833
        %v1714 = vpop.f32.mrb[0].mxu0
        %v1715 = vadd.f32 0.0, %v1714
        %v1716 = vpop.f32.mrb[0].mxu0
        %v1717 = vpop.f32.mrb[0].mxu0
        %v1718 = vadd.f32 0.0, %v1717
        %v1719 = vpop.f32.mrb[0].mxu0
        %1720 = vmatprep.mubr.bf16.mxu0 0
        %1721 = vmatmul.mubr.bf16.gmra.mrb[0].mxu0 %v836
        %v1722 = vpop.f32.mrb[0].mxu0
        %v1723 = vadd.f32 0.0, %v1722
        %v1724 = vpop.f32.mrb[0].mxu0
        %v1725 = vpop.f32.mrb[0].mxu0
        %v1726 = vadd.f32 0.0, %v1725
        %v1727 = vpop.f32.mrb[0].mxu0
        %1728 = vmatprep.mubr.bf16.mxu0 0
        %1729 = vmatmul.mubr.bf16.gmra.mrb[0].mxu0 %v839
        %v1730 = vpop.f32.mrb[0].mxu0
        %v1731 = vadd.f32 0.0, %v1730
        %v1732 = vpop.f32.mrb[0].mxu0
        %v1733 = vpop.f32.mrb[0].mxu0
        %v1734 = vadd.f32 0.0, %v1733
        %v1735 = vpop.f32.mrb[0].mxu0
        %1736 = vmatprep.mubr.bf16.mxu0 0
        %1737 = vmatmul.mubr.bf16.gmra.mrb[0].mxu0 %v842
        %v1738 = vpop.f32.mrb[0].mxu0
        %v1739 = vadd.f32 0.0, %v1738
        %v1740 = vpop.f32.mrb[0].mxu0
        %v1741 = vpop.f32.mrb[0].mxu0
        %v1742 = vadd.f32 0.0, %v1741
        %v1743 = vpop.f32.mrb[0].mxu0
        %1744 = vmatprep.mubr.bf16.mxu0 0
        %1745 = vmatmul.mubr.bf16.gmra.mrb[0].mxu0 %v845
        %v1746 = vpop.f32.mrb[0].mxu0
        %v1747 = vadd.f32 0.0, %v1746
        %v1748 = vpop.f32.mrb[0].mxu0
        %v1749 = vpop.f32.mrb[0].mxu0
        %v1750 = vadd.f32 0.0, %v1749
        %v1751 = vpop.f32.mrb[0].mxu0
        %1752 = vmatprep.mubr.bf16.mxu0 0
        %1753 = vmatmul.mubr.bf16.gmra.mrb[0].mxu0 %v1659
        %v1754 = vpop.f32.mrb[0].mxu0
        %v1755 = vadd.f32 0.0, %v1754
        %v1756 = vpop.f32.mrb[0].mxu0
        %v1757 = vpop.f32.mrb[0].mxu0
        %v1758 = vadd.f32 0.0, %v1757
        %v1759 = vpop.f32.mrb[0].mxu0
        %1760 = vdwg.mxu0
        %v1761 = vadd.f32 %v1425, %v1699
        %v1762 = vadd.f32 %v1426, %v1702
        %v1763 = vadd.f32 %v1427, %v1707
        %v1764 = vadd.f32 %v1428, %v1710
        %v1765 = vadd.f32 %v1429, %v1715
        %v1766 = vadd.f32 %v1430, %v1718
        %v1767 = vadd.f32 %v1431, %v1723
        %v1768 = vadd.f32 %v1432, %v1726
        %v1769 = vadd.f32 %v1433, %v1731
        %v1770 = vadd.f32 %v1434, %v1734
        %v1771 = vadd.f32 %v1435, %v1739
        %v1772 = vadd.f32 %v1436, %v1742
        %v1773 = vadd.f32 %v1437, %v1747
        %v1774 = vadd.f32 %v1438, %v1750
        %v1775 = vadd.f32 %v1439, %v1755
        %v1776 = vadd.f32 %v1440, %v1758
        %s1777 = scalar_lea.vmem %s1, 26
        %v1778 = vld [vmem:[%s1777] sm:$0x3]
        %v1780 = vsel %vm463, %v1778, 0
        %1782 = vmatprep.subr.bf16.mxu0 0
        %1783 = vmatpush1.bf16.msra.mxu0 %v1780
        %1784 = vmatprep.subr.bf16.mxu0 0
        %1785 = vmatpush1.bf16.msra.mxu0 0
        %1786 = vmatprep.subr.bf16.mxu0 0
        %1787 = vmatpush1.bf16.msra.mxu0 0
        %1788 = vmatprep.subr.bf16.mxu0 0
        %1789 = vmatpush1.bf16.msra.mxu0 0
        %1790 = vmatprep.subr.bf16.mxu0 0
        %1791 = vmatpush1.bf16.msra.mxu0 0
        %1792 = vmatprep.subr.bf16.mxu0 0
        %1793 = vmatpush1.bf16.msra.mxu0 0
        %1794 = vmatprep.subr.bf16.mxu0 0
        %1795 = vmatpush1.bf16.msra.mxu0 0
        %1796 = vmatprep.subr.bf16.mxu0 0
        %1797 = vmatpush1.bf16.msra.mxu0 0
        %1798 = vmatprep.subr.bf16.mxu0 0
        %1799 = vmatpush1.bf16.msra.mxu0 0
        %1800 = vmatprep.subr.bf16.mxu0 0
        %1801 = vmatpush1.bf16.msra.mxu0 0
        %1802 = vmatprep.subr.bf16.mxu0 0
        %1803 = vmatpush1.bf16.msra.mxu0 0
        %1804 = vmatprep.subr.bf16.mxu0 0
        %1805 = vmatpush1.bf16.msra.mxu0 0
        %1806 = vmatprep.subr.bf16.mxu0 0
        %1807 = vmatpush1.bf16.msra.mxu0 0
        %1808 = vmatprep.subr.bf16.mxu0 0
        %1809 = vmatpush1.bf16.msra.mxu0 0
        %1810 = vmatprep.subr.bf16.mxu0 0
        %1811 = vmatpush1.bf16.msra.mxu0 0
        %1812 = vmatprep.subr.bf16.mxu0 0
        %1813 = vmatpush1.bf16.msra.mxu0 0
        %1814 = vmatprep.mubr.bf16.mxu0 0
        %1815 = vmatmul.mubr.bf16.gmra.mrb[0].mxu0 %v827
        %v1816 = vpop.f32.mrb[0].mxu0
        %v1817 = vadd.f32 0.0, %v1816
        %v1818 = vpop.f32.mrb[0].mxu0
        %v1819 = vpop.f32.mrb[0].mxu0
        %v1820 = vadd.f32 0.0, %v1819
        %v1821 = vpop.f32.mrb[0].mxu0
        %1822 = vmatprep.mubr.bf16.mxu0 0
        %1823 = vmatmul.mubr.bf16.gmra.mrb[0].mxu0 %v830
        %v1824 = vpop.f32.mrb[0].mxu0
        %v1825 = vadd.f32 0.0, %v1824
        %v1826 = vpop.f32.mrb[0].mxu0
        %v1827 = vpop.f32.mrb[0].mxu0
        %v1828 = vadd.f32 0.0, %v1827
        %v1829 = vpop.f32.mrb[0].mxu0
        %1830 = vmatprep.mubr.bf16.mxu0 0
        %1831 = vmatmul.mubr.bf16.gmra.mrb[0].mxu0 %v833
        %v1832 = vpop.f32.mrb[0].mxu0
        %v1833 = vadd.f32 0.0, %v1832
        %v1834 = vpop.f32.mrb[0].mxu0
        %v1835 = vpop.f32.mrb[0].mxu0
        %v1836 = vadd.f32 0.0, %v1835
        %v1837 = vpop.f32.mrb[0].mxu0
        %1838 = vmatprep.mubr.bf16.mxu0 0
        %1839 = vmatmul.mubr.bf16.gmra.mrb[0].mxu0 %v836
        %v1840 = vpop.f32.mrb[0].mxu0
        %v1841 = vadd.f32 0.0, %v1840
        %v1842 = vpop.f32.mrb[0].mxu0
        %v1843 = vpop.f32.mrb[0].mxu0
        %v1844 = vadd.f32 0.0, %v1843
        %v1845 = vpop.f32.mrb[0].mxu0
        %1846 = vmatprep.mubr.bf16.mxu0 0
        %1847 = vmatmul.mubr.bf16.gmra.mrb[0].mxu0 %v839
        %v1848 = vpop.f32.mrb[0].mxu0
        %v1849 = vadd.f32 0.0, %v1848
        %v1850 = vpop.f32.mrb[0].mxu0
        %v1851 = vpop.f32.mrb[0].mxu0
        %v1852 = vadd.f32 0.0, %v1851
        %v1853 = vpop.f32.mrb[0].mxu0
        %1854 = vmatprep.mubr.bf16.mxu0 0
        %1855 = vmatmul.mubr.bf16.gmra.mrb[0].mxu0 %v842
        %v1856 = vpop.f32.mrb[0].mxu0
        %v1857 = vadd.f32 0.0, %v1856
        %v1858 = vpop.f32.mrb[0].mxu0
        %v1859 = vpop.f32.mrb[0].mxu0
        %v1860 = vadd.f32 0.0, %v1859
        %v1861 = vpop.f32.mrb[0].mxu0
        %1862 = vmatprep.mubr.bf16.mxu0 0
        %1863 = vmatmul.mubr.bf16.gmra.mrb[0].mxu0 %v845
        %v1864 = vpop.f32.mrb[0].mxu0
        %v1865 = vadd.f32 0.0, %v1864
        %v1866 = vpop.f32.mrb[0].mxu0
        %v1867 = vpop.f32.mrb[0].mxu0
        %v1868 = vadd.f32 0.0, %v1867
        %v1869 = vpop.f32.mrb[0].mxu0
        %1870 = vmatprep.mubr.bf16.mxu0 0
        %1871 = vmatmul.mubr.bf16.gmra.mrb[0].mxu0 %v1659
        %v1872 = vpop.f32.mrb[0].mxu0
        %v1873 = vadd.f32 0.0, %v1872
        %v1874 = vpop.f32.mrb[0].mxu0
        %v1875 = vpop.f32.mrb[0].mxu0
        %v1876 = vadd.f32 0.0, %v1875
        %v1877 = vpop.f32.mrb[0].mxu0
        %1878 = vdwg.mxu0
        %v1880 = vsel %vm463, %v1644, 0
        %1882 = vmatprep.subr.bf16.mxu0 0
        %1883 = vmatpush1.bf16.msra.mxu0 %v1880
        %1884 = vmatprep.subr.bf16.mxu0 0
        %1885 = vmatpush1.bf16.msra.mxu0 0
        %1886 = vmatprep.subr.bf16.mxu0 0
        %1887 = vmatpush1.bf16.msra.mxu0 0
        %1888 = vmatprep.subr.bf16.mxu0 0
        %1889 = vmatpush1.bf16.msra.mxu0 0
        %1890 = vmatprep.subr.bf16.mxu0 0
        %1891 = vmatpush1.bf16.msra.mxu0 0
        %1892 = vmatprep.subr.bf16.mxu0 0
        %1893 = vmatpush1.bf16.msra.mxu0 0
        %1894 = vmatprep.subr.bf16.mxu0 0
        %1895 = vmatpush1.bf16.msra.mxu0 0
        %1896 = vmatprep.subr.bf16.mxu0 0
        %1897 = vmatpush1.bf16.msra.mxu0 0
        %1898 = vmatprep.subr.bf16.mxu0 0
        %1899 = vmatpush1.bf16.msra.mxu0 0
        %1900 = vmatprep.subr.bf16.mxu0 0
        %1901 = vmatpush1.bf16.msra.mxu0 0
        %1902 = vmatprep.subr.bf16.mxu0 0
        %1903 = vmatpush1.bf16.msra.mxu0 0
        %1904 = vmatprep.subr.bf16.mxu0 0
        %1905 = vmatpush1.bf16.msra.mxu0 0
        %1906 = vmatprep.subr.bf16.mxu0 0
        %1907 = vmatpush1.bf16.msra.mxu0 0
        %1908 = vmatprep.subr.bf16.mxu0 0
        %1909 = vmatpush1.bf16.msra.mxu0 0
        %1910 = vmatprep.subr.bf16.mxu0 0
        %1911 = vmatpush1.bf16.msra.mxu0 0
        %1912 = vmatprep.subr.bf16.mxu0 0
        %1913 = vmatpush1.bf16.msra.mxu0 0
        %1914 = vmatprep.mubr.bf16.mxu0 0
        %1915 = vmatmul.mubr.bf16.gmra.mrb[0].mxu0 %v443
        %v1916 = vpop.f32.mrb[0].mxu0
        %v1917 = vadd.f32 %v1817, %v1916
        %v1918 = vpop.f32.mrb[0].mxu0
        %v1919 = vpop.f32.mrb[0].mxu0
        %v1920 = vadd.f32 %v1820, %v1919
        %v1921 = vpop.f32.mrb[0].mxu0
        %1922 = vmatprep.mubr.bf16.mxu0 0
        %1923 = vmatmul.mubr.bf16.gmra.mrb[0].mxu0 %v446
        %v1924 = vpop.f32.mrb[0].mxu0
        %v1925 = vadd.f32 %v1825, %v1924
        %v1926 = vpop.f32.mrb[0].mxu0
        %v1927 = vpop.f32.mrb[0].mxu0
        %v1928 = vadd.f32 %v1828, %v1927
        %v1929 = vpop.f32.mrb[0].mxu0
        %1930 = vmatprep.mubr.bf16.mxu0 0
        %1931 = vmatmul.mubr.bf16.gmra.mrb[0].mxu0 %v449
        %v1932 = vpop.f32.mrb[0].mxu0
        %v1933 = vadd.f32 %v1833, %v1932
        %v1934 = vpop.f32.mrb[0].mxu0
        %v1935 = vpop.f32.mrb[0].mxu0
        %v1936 = vadd.f32 %v1836, %v1935
        %v1937 = vpop.f32.mrb[0].mxu0
        %1938 = vmatprep.mubr.bf16.mxu0 0
        %1939 = vmatmul.mubr.bf16.gmra.mrb[0].mxu0 %v452
        %v1940 = vpop.f32.mrb[0].mxu0
        %v1941 = vadd.f32 %v1841, %v1940
        %v1942 = vpop.f32.mrb[0].mxu0
        %v1943 = vpop.f32.mrb[0].mxu0
        %v1944 = vadd.f32 %v1844, %v1943
        %v1945 = vpop.f32.mrb[0].mxu0
        %1946 = vmatprep.mubr.bf16.mxu0 0
        %1947 = vmatmul.mubr.bf16.gmra.mrb[0].mxu0 %v455
        %v1948 = vpop.f32.mrb[0].mxu0
        %v1949 = vadd.f32 %v1849, %v1948
        %v1950 = vpop.f32.mrb[0].mxu0
        %v1951 = vpop.f32.mrb[0].mxu0
        %v1952 = vadd.f32 %v1852, %v1951
        %v1953 = vpop.f32.mrb[0].mxu0
        %1954 = vmatprep.mubr.bf16.mxu0 0
        %1955 = vmatmul.mubr.bf16.gmra.mrb[0].mxu0 %v458
        %v1956 = vpop.f32.mrb[0].mxu0
        %v1957 = vadd.f32 %v1857, %v1956
        %v1958 = vpop.f32.mrb[0].mxu0
        %v1959 = vpop.f32.mrb[0].mxu0
        %v1960 = vadd.f32 %v1860, %v1959
        %v1961 = vpop.f32.mrb[0].mxu0
        %1962 = vmatprep.mubr.bf16.mxu0 0
        %1963 = vmatmul.mubr.bf16.gmra.mrb[0].mxu0 %v461
        %v1964 = vpop.f32.mrb[0].mxu0
        %v1965 = vadd.f32 %v1865, %v1964
        %v1966 = vpop.f32.mrb[0].mxu0
        %v1967 = vpop.f32.mrb[0].mxu0
        %v1968 = vadd.f32 %v1868, %v1967
        %v1969 = vpop.f32.mrb[0].mxu0
        %1970 = vmatprep.mubr.bf16.mxu0 0
        %1971 = vmatmul.mubr.bf16.gmra.mrb[0].mxu0 %v1205
        %v1972 = vpop.f32.mrb[0].mxu0
        %v1973 = vadd.f32 %v1873, %v1972
        %v1974 = vpop.f32.mrb[0].mxu0
        %v1975 = vpop.f32.mrb[0].mxu0
        %v1976 = vadd.f32 %v1876, %v1975
        %v1977 = vpop.f32.mrb[0].mxu0
        %1978 = vdwg.mxu0
        %s1979 = scalar_lea.vmem %s1, 20
        %v1980 = vld [vmem:[%s1979] sm:$0x3]
        %v1983 = vunpack.c.l.b16 %v212
        %v1984 = vunpack.c.l.b16 %v213
        %v1985 = vpack.c.b16 %v1984, %v1983
        %v1987 = vsel %vm438, %v1985, 0
        %v1990 = vsel %vm463, %v1980, 0
        %1992 = vmatprep.subr.bf16.mxu0 0
        %1993 = vmatpush1.bf16.msra.mxu0 %v1990
        %1994 = vmatprep.subr.bf16.mxu0 0
        %1995 = vmatpush1.bf16.msra.mxu0 0
        %1996 = vmatprep.subr.bf16.mxu0 0
        %1997 = vmatpush1.bf16.msra.mxu0 0
        %1998 = vmatprep.subr.bf16.mxu0 0
        %1999 = vmatpush1.bf16.msra.mxu0 0
        %2000 = vmatprep.subr.bf16.mxu0 0
        %2001 = vmatpush1.bf16.msra.mxu0 0
        %2002 = vmatprep.subr.bf16.mxu0 0
        %2003 = vmatpush1.bf16.msra.mxu0 0
        %2004 = vmatprep.subr.bf16.mxu0 0
        %2005 = vmatpush1.bf16.msra.mxu0 0
        %2006 = vmatprep.subr.bf16.mxu0 0
        %2007 = vmatpush1.bf16.msra.mxu0 0
        %2008 = vmatprep.subr.bf16.mxu0 0
        %2009 = vmatpush1.bf16.msra.mxu0 0
        %2010 = vmatprep.subr.bf16.mxu0 0
        %2011 = vmatpush1.bf16.msra.mxu0 0
        %2012 = vmatprep.subr.bf16.mxu0 0
        %2013 = vmatpush1.bf16.msra.mxu0 0
        %2014 = vmatprep.subr.bf16.mxu0 0
        %2015 = vmatpush1.bf16.msra.mxu0 0
        %2016 = vmatprep.subr.bf16.mxu0 0
        %2017 = vmatpush1.bf16.msra.mxu0 0
        %2018 = vmatprep.subr.bf16.mxu0 0
        %2019 = vmatpush1.bf16.msra.mxu0 0
        %2020 = vmatprep.subr.bf16.mxu0 0
        %2021 = vmatpush1.bf16.msra.mxu0 0
        %2022 = vmatprep.subr.bf16.mxu0 0
        %2023 = vmatpush1.bf16.msra.mxu0 0
        %2024 = vmatprep.mubr.bf16.mxu0 0
        %2025 = vmatmul.mubr.bf16.gmra.mrb[0].mxu0 %v611
        %v2026 = vpop.f32.mrb[0].mxu0
        %v2027 = vadd.f32 0.0, %v2026
        %v2028 = vpop.f32.mrb[0].mxu0
        %v2029 = vpop.f32.mrb[0].mxu0
        %v2030 = vadd.f32 0.0, %v2029
        %v2031 = vpop.f32.mrb[0].mxu0
        %2032 = vmatprep.mubr.bf16.mxu0 0
        %2033 = vmatmul.mubr.bf16.gmra.mrb[0].mxu0 %v614
        %v2034 = vpop.f32.mrb[0].mxu0
        %v2035 = vadd.f32 0.0, %v2034
        %v2036 = vpop.f32.mrb[0].mxu0
        %v2037 = vpop.f32.mrb[0].mxu0
        %v2038 = vadd.f32 0.0, %v2037
        %v2039 = vpop.f32.mrb[0].mxu0
        %2040 = vmatprep.mubr.bf16.mxu0 0
        %2041 = vmatmul.mubr.bf16.gmra.mrb[0].mxu0 %v617
        %v2042 = vpop.f32.mrb[0].mxu0
        %v2043 = vadd.f32 0.0, %v2042
        %v2044 = vpop.f32.mrb[0].mxu0
        %v2045 = vpop.f32.mrb[0].mxu0
        %v2046 = vadd.f32 0.0, %v2045
        %v2047 = vpop.f32.mrb[0].mxu0
        %2048 = vmatprep.mubr.bf16.mxu0 0
        %2049 = vmatmul.mubr.bf16.gmra.mrb[0].mxu0 %v620
        %v2050 = vpop.f32.mrb[0].mxu0
        %v2051 = vadd.f32 0.0, %v2050
        %v2052 = vpop.f32.mrb[0].mxu0
        %v2053 = vpop.f32.mrb[0].mxu0
        %v2054 = vadd.f32 0.0, %v2053
        %v2055 = vpop.f32.mrb[0].mxu0
        %2056 = vmatprep.mubr.bf16.mxu0 0
        %2057 = vmatmul.mubr.bf16.gmra.mrb[0].mxu0 %v623
        %v2058 = vpop.f32.mrb[0].mxu0
        %v2059 = vadd.f32 0.0, %v2058
        %v2060 = vpop.f32.mrb[0].mxu0
        %v2061 = vpop.f32.mrb[0].mxu0
        %v2062 = vadd.f32 0.0, %v2061
        %v2063 = vpop.f32.mrb[0].mxu0
        %2064 = vmatprep.mubr.bf16.mxu0 0
        %2065 = vmatmul.mubr.bf16.gmra.mrb[0].mxu0 %v626
        %v2066 = vpop.f32.mrb[0].mxu0
        %v2067 = vadd.f32 0.0, %v2066
        %v2068 = vpop.f32.mrb[0].mxu0
        %v2069 = vpop.f32.mrb[0].mxu0
        %v2070 = vadd.f32 0.0, %v2069
        %v2071 = vpop.f32.mrb[0].mxu0
        %2072 = vmatprep.mubr.bf16.mxu0 0
        %2073 = vmatmul.mubr.bf16.gmra.mrb[0].mxu0 %v1055
        %v2074 = vpop.f32.mrb[0].mxu0
        %v2075 = vadd.f32 0.0, %v2074
        %v2076 = vpop.f32.mrb[0].mxu0
        %v2077 = vpop.f32.mrb[0].mxu0
        %v2078 = vadd.f32 0.0, %v2077
        %v2079 = vpop.f32.mrb[0].mxu0
        %2080 = vmatprep.mubr.bf16.mxu0 0
        %2081 = vmatmul.mubr.bf16.gmra.mrb[0].mxu0 %v1987
        %v2082 = vpop.f32.mrb[0].mxu0
        %v2083 = vadd.f32 0.0, %v2082
        %v2084 = vpop.f32.mrb[0].mxu0
        %v2085 = vpop.f32.mrb[0].mxu0
        %v2086 = vadd.f32 0.0, %v2085
        %v2087 = vpop.f32.mrb[0].mxu0
        %2088 = vdwg.mxu0
        %v2089 = vadd.f32 %v1581, %v2027
        %v2090 = vadd.f32 %v1584, %v2030
        %v2091 = vadd.f32 %v1589, %v2035
        %v2092 = vadd.f32 %v1592, %v2038
        %v2093 = vadd.f32 %v1597, %v2043
        %v2094 = vadd.f32 %v1600, %v2046
        %v2095 = vadd.f32 %v1605, %v2051
        %v2096 = vadd.f32 %v1608, %v2054
        %v2097 = vadd.f32 %v1613, %v2059
        %v2098 = vadd.f32 %v1616, %v2062
        %v2099 = vadd.f32 %v1621, %v2067
        %v2100 = vadd.f32 %v1624, %v2070
        %v2101 = vadd.f32 %v1629, %v2075
        %v2102 = vadd.f32 %v1632, %v2078
        %v2103 = vadd.f32 %v1637, %v2083
        %v2104 = vadd.f32 %v1640, %v2086
        %v2106 = vshrl.u32 %v212, 16
        %v2108 = vrot.slane %v2106, 4
        %v2109 = vshll.u32 %v212, 16
        %v2111 = vrot.slane %v2109, 5
        %v2112 = vor.u32 %v2108, %v2111
        %v2113 = vrot.slane %v2112, 4
        %v2115 = vshll.u32 %v213, 16
        %v2117 = vrot.slane %v2115, 5
        %v2118 = vsel %vm219, %v2113, %v2117
        %v2119 = vshrl.u32 %v213, 16
        %v2121 = vrot.slane %v2119, 4
        %v2122 = vor.u32 %v2121, %v2117
        %v2123 = vrot.slane %v2122, 4
        %v2125 = vshll.u32 %v214, 16
        %v2127 = vrot.slane %v2125, 5
        %v2128 = vsel %vm219, %v2123, %v2127
        %s2129 = scalar_lea.vmem %s1, 22
        %v2130 = vld [vmem:[%s2129] sm:$0x3]
        %v2131 = vunpack.c.l.b16 %v2118
        %v2132 = vunpack.c.l.b16 %v2128
        %v2133 = vpack.c.b16 %v2132, %v2131
        %v2135 = vsel %vm438, %v2133, 0
        %v2138 = vsel %vm463, %v2130, 0
        %2140 = vmatprep.subr.bf16.mxu0 0
        %2141 = vmatpush1.bf16.msra.mxu0 %v2138
        %2142 = vmatprep.subr.bf16.mxu0 0
        %2143 = vmatpush1.bf16.msra.mxu0 0
        %2144 = vmatprep.subr.bf16.mxu0 0
        %2145 = vmatpush1.bf16.msra.mxu0 0
        %2146 = vmatprep.subr.bf16.mxu0 0
        %2147 = vmatpush1.bf16.msra.mxu0 0
        %2148 = vmatprep.subr.bf16.mxu0 0
        %2149 = vmatpush1.bf16.msra.mxu0 0
        %2150 = vmatprep.subr.bf16.mxu0 0
        %2151 = vmatpush1.bf16.msra.mxu0 0
        %2152 = vmatprep.subr.bf16.mxu0 0
        %2153 = vmatpush1.bf16.msra.mxu0 0
        %2154 = vmatprep.subr.bf16.mxu0 0
        %2155 = vmatpush1.bf16.msra.mxu0 0
        %2156 = vmatprep.subr.bf16.mxu0 0
        %2157 = vmatpush1.bf16.msra.mxu0 0
        %2158 = vmatprep.subr.bf16.mxu0 0
        %2159 = vmatpush1.bf16.msra.mxu0 0
        %2160 = vmatprep.subr.bf16.mxu0 0
        %2161 = vmatpush1.bf16.msra.mxu0 0
        %2162 = vmatprep.subr.bf16.mxu0 0
        %2163 = vmatpush1.bf16.msra.mxu0 0
        %2164 = vmatprep.subr.bf16.mxu0 0
        %2165 = vmatpush1.bf16.msra.mxu0 0
        %2166 = vmatprep.subr.bf16.mxu0 0
        %2167 = vmatpush1.bf16.msra.mxu0 0
        %2168 = vmatprep.subr.bf16.mxu0 0
        %2169 = vmatpush1.bf16.msra.mxu0 0
        %2170 = vmatprep.subr.bf16.mxu0 0
        %2171 = vmatpush1.bf16.msra.mxu0 0
        %2172 = vmatprep.mubr.bf16.mxu0 0
        %2173 = vmatmul.mubr.bf16.gmra.mrb[0].mxu0 %v446
        %v2174 = vpop.f32.mrb[0].mxu0
        %v2175 = vadd.f32 0.0, %v2174
        %v2176 = vpop.f32.mrb[0].mxu0
        %v2177 = vpop.f32.mrb[0].mxu0
        %v2178 = vadd.f32 0.0, %v2177
        %v2179 = vpop.f32.mrb[0].mxu0
        %2180 = vmatprep.mubr.bf16.mxu0 0
        %2181 = vmatmul.mubr.bf16.gmra.mrb[0].mxu0 %v449
        %v2182 = vpop.f32.mrb[0].mxu0
        %v2183 = vadd.f32 0.0, %v2182
        %v2184 = vpop.f32.mrb[0].mxu0
        %v2185 = vpop.f32.mrb[0].mxu0
        %v2186 = vadd.f32 0.0, %v2185
        %v2187 = vpop.f32.mrb[0].mxu0
        %2188 = vmatprep.mubr.bf16.mxu0 0
        %2189 = vmatmul.mubr.bf16.gmra.mrb[0].mxu0 %v452
        %v2190 = vpop.f32.mrb[0].mxu0
        %v2191 = vadd.f32 0.0, %v2190
        %v2192 = vpop.f32.mrb[0].mxu0
        %v2193 = vpop.f32.mrb[0].mxu0
        %v2194 = vadd.f32 0.0, %v2193
        %v2195 = vpop.f32.mrb[0].mxu0
        %2196 = vmatprep.mubr.bf16.mxu0 0
        %2197 = vmatmul.mubr.bf16.gmra.mrb[0].mxu0 %v455
        %v2198 = vpop.f32.mrb[0].mxu0
        %v2199 = vadd.f32 0.0, %v2198
        %v2200 = vpop.f32.mrb[0].mxu0
        %v2201 = vpop.f32.mrb[0].mxu0
        %v2202 = vadd.f32 0.0, %v2201
        %v2203 = vpop.f32.mrb[0].mxu0
        %2204 = vmatprep.mubr.bf16.mxu0 0
        %2205 = vmatmul.mubr.bf16.gmra.mrb[0].mxu0 %v458
        %v2206 = vpop.f32.mrb[0].mxu0
        %v2207 = vadd.f32 0.0, %v2206
        %v2208 = vpop.f32.mrb[0].mxu0
        %v2209 = vpop.f32.mrb[0].mxu0
        %v2210 = vadd.f32 0.0, %v2209
        %v2211 = vpop.f32.mrb[0].mxu0
        %2212 = vmatprep.mubr.bf16.mxu0 0
        %2213 = vmatmul.mubr.bf16.gmra.mrb[0].mxu0 %v461
        %v2214 = vpop.f32.mrb[0].mxu0
        %v2215 = vadd.f32 0.0, %v2214
        %v2216 = vpop.f32.mrb[0].mxu0
        %v2217 = vpop.f32.mrb[0].mxu0
        %v2218 = vadd.f32 0.0, %v2217
        %v2219 = vpop.f32.mrb[0].mxu0
        %2220 = vmatprep.mubr.bf16.mxu0 0
        %2221 = vmatmul.mubr.bf16.gmra.mrb[0].mxu0 %v1205
        %v2222 = vpop.f32.mrb[0].mxu0
        %v2223 = vadd.f32 0.0, %v2222
        %v2224 = vpop.f32.mrb[0].mxu0
        %v2225 = vpop.f32.mrb[0].mxu0
        %v2226 = vadd.f32 0.0, %v2225
        %v2227 = vpop.f32.mrb[0].mxu0
        %2228 = vmatprep.mubr.bf16.mxu0 0
        %2229 = vmatmul.mubr.bf16.gmra.mrb[0].mxu0 %v2135
        %v2230 = vpop.f32.mrb[0].mxu0
        %v2231 = vadd.f32 0.0, %v2230
        %v2232 = vpop.f32.mrb[0].mxu0
        %v2233 = vpop.f32.mrb[0].mxu0
        %v2234 = vadd.f32 0.0, %v2233
        %v2235 = vpop.f32.mrb[0].mxu0
        %2236 = vdwg.mxu0
        %v2237 = vadd.f32 %v2089, %v2175
        %v2238 = vadd.f32 %v2090, %v2178
        %v2239 = vadd.f32 %v2091, %v2183
        %v2240 = vadd.f32 %v2092, %v2186
        %v2241 = vadd.f32 %v2093, %v2191
        %v2242 = vadd.f32 %v2094, %v2194
        %v2243 = vadd.f32 %v2095, %v2199
        %v2244 = vadd.f32 %v2096, %v2202
        %v2245 = vadd.f32 %v2097, %v2207
        %v2246 = vadd.f32 %v2098, %v2210
        %v2247 = vadd.f32 %v2099, %v2215
        %v2248 = vadd.f32 %v2100, %v2218
        %v2249 = vadd.f32 %v2101, %v2223
        %v2250 = vadd.f32 %v2102, %v2226
        %v2251 = vadd.f32 %v2103, %v2231
        %v2252 = vadd.f32 %v2104, %v2234
        %s2253 = scalar_lea.vmem %s1, 28
        %v2254 = vld [vmem:[%s2253] sm:$0x3]
        %v2256 = vsel %vm463, %v2254, 0
        %2258 = vmatprep.subr.bf16.mxu0 0
        %2259 = vmatpush1.bf16.msra.mxu0 %v2256
        %2260 = vmatprep.subr.bf16.mxu0 0
        %2261 = vmatpush1.bf16.msra.mxu0 0
        %2262 = vmatprep.subr.bf16.mxu0 0
        %2263 = vmatpush1.bf16.msra.mxu0 0
        %2264 = vmatprep.subr.bf16.mxu0 0
        %2265 = vmatpush1.bf16.msra.mxu0 0
        %2266 = vmatprep.subr.bf16.mxu0 0
        %2267 = vmatpush1.bf16.msra.mxu0 0
        %2268 = vmatprep.subr.bf16.mxu0 0
        %2269 = vmatpush1.bf16.msra.mxu0 0
        %2270 = vmatprep.subr.bf16.mxu0 0
        %2271 = vmatpush1.bf16.msra.mxu0 0
        %2272 = vmatprep.subr.bf16.mxu0 0
        %2273 = vmatpush1.bf16.msra.mxu0 0
        %2274 = vmatprep.subr.bf16.mxu0 0
        %2275 = vmatpush1.bf16.msra.mxu0 0
        %2276 = vmatprep.subr.bf16.mxu0 0
        %2277 = vmatpush1.bf16.msra.mxu0 0
        %2278 = vmatprep.subr.bf16.mxu0 0
        %2279 = vmatpush1.bf16.msra.mxu0 0
        %2280 = vmatprep.subr.bf16.mxu0 0
        %2281 = vmatpush1.bf16.msra.mxu0 0
        %2282 = vmatprep.subr.bf16.mxu0 0
        %2283 = vmatpush1.bf16.msra.mxu0 0
        %2284 = vmatprep.subr.bf16.mxu0 0
        %2285 = vmatpush1.bf16.msra.mxu0 0
        %2286 = vmatprep.subr.bf16.mxu0 0
        %2287 = vmatpush1.bf16.msra.mxu0 0
        %2288 = vmatprep.subr.bf16.mxu0 0
        %2289 = vmatpush1.bf16.msra.mxu0 0
        %2290 = vmatprep.mubr.bf16.mxu0 0
        %2291 = vmatmul.mubr.bf16.gmra.mrb[0].mxu0 %v446
        %v2292 = vpop.f32.mrb[0].mxu0
        %v2293 = vadd.f32 0.0, %v2292
        %v2294 = vpop.f32.mrb[0].mxu0
        %v2295 = vpop.f32.mrb[0].mxu0
        %v2296 = vadd.f32 0.0, %v2295
        %v2297 = vpop.f32.mrb[0].mxu0
        %2298 = vmatprep.mubr.bf16.mxu0 0
        %2299 = vmatmul.mubr.bf16.gmra.mrb[0].mxu0 %v449
        %v2300 = vpop.f32.mrb[0].mxu0
        %v2301 = vadd.f32 0.0, %v2300
        %v2302 = vpop.f32.mrb[0].mxu0
        %v2303 = vpop.f32.mrb[0].mxu0
        %v2304 = vadd.f32 0.0, %v2303
        %v2305 = vpop.f32.mrb[0].mxu0
        %2306 = vmatprep.mubr.bf16.mxu0 0
        %2307 = vmatmul.mubr.bf16.gmra.mrb[0].mxu0 %v452
        %v2308 = vpop.f32.mrb[0].mxu0
        %v2309 = vadd.f32 0.0, %v2308
        %v2310 = vpop.f32.mrb[0].mxu0
        %v2311 = vpop.f32.mrb[0].mxu0
        %v2312 = vadd.f32 0.0, %v2311
        %v2313 = vpop.f32.mrb[0].mxu0
        %2314 = vmatprep.mubr.bf16.mxu0 0
        %2315 = vmatmul.mubr.bf16.gmra.mrb[0].mxu0 %v455
        %v2316 = vpop.f32.mrb[0].mxu0
        %v2317 = vadd.f32 0.0, %v2316
        %v2318 = vpop.f32.mrb[0].mxu0
        %v2319 = vpop.f32.mrb[0].mxu0
        %v2320 = vadd.f32 0.0, %v2319
        %v2321 = vpop.f32.mrb[0].mxu0
        %2322 = vmatprep.mubr.bf16.mxu0 0
        %2323 = vmatmul.mubr.bf16.gmra.mrb[0].mxu0 %v458
        %v2324 = vpop.f32.mrb[0].mxu0
        %v2325 = vadd.f32 0.0, %v2324
        %v2326 = vpop.f32.mrb[0].mxu0
        %v2327 = vpop.f32.mrb[0].mxu0
        %v2328 = vadd.f32 0.0, %v2327
        %v2329 = vpop.f32.mrb[0].mxu0
        %2330 = vmatprep.mubr.bf16.mxu0 0
        %2331 = vmatmul.mubr.bf16.gmra.mrb[0].mxu0 %v461
        %v2332 = vpop.f32.mrb[0].mxu0
        %v2333 = vadd.f32 0.0, %v2332
        %v2334 = vpop.f32.mrb[0].mxu0
        %v2335 = vpop.f32.mrb[0].mxu0
        %v2336 = vadd.f32 0.0, %v2335
        %v2337 = vpop.f32.mrb[0].mxu0
        %2338 = vmatprep.mubr.bf16.mxu0 0
        %2339 = vmatmul.mubr.bf16.gmra.mrb[0].mxu0 %v1205
        %v2340 = vpop.f32.mrb[0].mxu0
        %v2341 = vadd.f32 0.0, %v2340
        %v2342 = vpop.f32.mrb[0].mxu0
        %v2343 = vpop.f32.mrb[0].mxu0
        %v2344 = vadd.f32 0.0, %v2343
        %v2345 = vpop.f32.mrb[0].mxu0
        %2346 = vmatprep.mubr.bf16.mxu0 0
        %2347 = vmatmul.mubr.bf16.gmra.mrb[0].mxu0 %v2135
        %v2348 = vpop.f32.mrb[0].mxu0
        %v2349 = vadd.f32 0.0, %v2348
        %v2350 = vpop.f32.mrb[0].mxu0
        %v2351 = vpop.f32.mrb[0].mxu0
        %v2352 = vadd.f32 0.0, %v2351
        %v2353 = vpop.f32.mrb[0].mxu0
        %2354 = vdwg.mxu0
        %v2355 = vadd.f32 %v1917, %v2293
        %v2356 = vadd.f32 %v1920, %v2296
        %v2357 = vadd.f32 %v1925, %v2301
        %v2358 = vadd.f32 %v1928, %v2304
        %v2359 = vadd.f32 %v1933, %v2309
        %v2360 = vadd.f32 %v1936, %v2312
        %v2361 = vadd.f32 %v1941, %v2317
        %v2362 = vadd.f32 %v1944, %v2320
        %v2363 = vadd.f32 %v1949, %v2325
        %v2364 = vadd.f32 %v1952, %v2328
        %v2365 = vadd.f32 %v1957, %v2333
        %v2366 = vadd.f32 %v1960, %v2336
        %v2367 = vadd.f32 %v1965, %v2341
        %v2368 = vadd.f32 %v1968, %v2344
        %v2369 = vadd.f32 %v1973, %v2349
        %v2370 = vadd.f32 %v1976, %v2352
        %v2372 = vrot.slane %v212, 5
        %v2373 = vrot.slane %v2372, 4
        %v2374 = vrot.slane %v213, 5
        %v2375 = vsel %vm740, %v2373, %v2374
        %v2376 = vrot.slane %v2374, 4
        %v2377 = vrot.slane %v214, 5
        %v2378 = vsel %vm740, %v2376, %v2377
        %s2379 = scalar_lea.vmem %s1, 30
        %v2380 = vld [vmem:[%s2379] sm:$0x3]
        %v2381 = vunpack.c.l.b16 %v2375
        %v2382 = vunpack.c.l.b16 %v2378
        %v2383 = vpack.c.b16 %v2382, %v2381
        %v2385 = vsel %vm438, %v2383, 0
        %v2388 = vsel %vm463, %v2380, 0
        %2390 = vmatprep.subr.bf16.mxu0 0
        %2391 = vmatpush1.bf16.msra.mxu0 %v2388
        %2392 = vmatprep.subr.bf16.mxu0 0
        %2393 = vmatpush1.bf16.msra.mxu0 0
        %2394 = vmatprep.subr.bf16.mxu0 0
        %2395 = vmatpush1.bf16.msra.mxu0 0
        %2396 = vmatprep.subr.bf16.mxu0 0
        %2397 = vmatpush1.bf16.msra.mxu0 0
        %2398 = vmatprep.subr.bf16.mxu0 0
        %2399 = vmatpush1.bf16.msra.mxu0 0
        %2400 = vmatprep.subr.bf16.mxu0 0
        %2401 = vmatpush1.bf16.msra.mxu0 0
        %2402 = vmatprep.subr.bf16.mxu0 0
        %2403 = vmatpush1.bf16.msra.mxu0 0
        %2404 = vmatprep.subr.bf16.mxu0 0
        %2405 = vmatpush1.bf16.msra.mxu0 0
        %2406 = vmatprep.subr.bf16.mxu0 0
        %2407 = vmatpush1.bf16.msra.mxu0 0
        %2408 = vmatprep.subr.bf16.mxu0 0
        %2409 = vmatpush1.bf16.msra.mxu0 0
        %2410 = vmatprep.subr.bf16.mxu0 0
        %2411 = vmatpush1.bf16.msra.mxu0 0
        %2412 = vmatprep.subr.bf16.mxu0 0
        %2413 = vmatpush1.bf16.msra.mxu0 0
        %2414 = vmatprep.subr.bf16.mxu0 0
        %2415 = vmatpush1.bf16.msra.mxu0 0
        %2416 = vmatprep.subr.bf16.mxu0 0
        %2417 = vmatpush1.bf16.msra.mxu0 0
        %2418 = vmatprep.subr.bf16.mxu0 0
        %2419 = vmatpush1.bf16.msra.mxu0 0
        %2420 = vmatprep.subr.bf16.mxu0 0
        %2421 = vmatpush1.bf16.msra.mxu0 0
        %2422 = vmatprep.mubr.bf16.mxu0 0
        %2423 = vmatmul.mubr.bf16.gmra.mrb[0].mxu0 %v830
        %v2424 = vpop.f32.mrb[0].mxu0
        %v2425 = vadd.f32 0.0, %v2424
        %v2426 = vpop.f32.mrb[0].mxu0
        %v2427 = vpop.f32.mrb[0].mxu0
        %v2428 = vadd.f32 0.0, %v2427
        %v2429 = vpop.f32.mrb[0].mxu0
        %2430 = vmatprep.mubr.bf16.mxu0 0
        %2431 = vmatmul.mubr.bf16.gmra.mrb[0].mxu0 %v833
        %v2432 = vpop.f32.mrb[0].mxu0
        %v2433 = vadd.f32 0.0, %v2432
        %v2434 = vpop.f32.mrb[0].mxu0
        %v2435 = vpop.f32.mrb[0].mxu0
        %v2436 = vadd.f32 0.0, %v2435
        %v2437 = vpop.f32.mrb[0].mxu0
        %2438 = vmatprep.mubr.bf16.mxu0 0
        %2439 = vmatmul.mubr.bf16.gmra.mrb[0].mxu0 %v836
        %v2440 = vpop.f32.mrb[0].mxu0
        %v2441 = vadd.f32 0.0, %v2440
        %v2442 = vpop.f32.mrb[0].mxu0
        %v2443 = vpop.f32.mrb[0].mxu0
        %v2444 = vadd.f32 0.0, %v2443
        %v2445 = vpop.f32.mrb[0].mxu0
        %2446 = vmatprep.mubr.bf16.mxu0 0
        %2447 = vmatmul.mubr.bf16.gmra.mrb[0].mxu0 %v839
        %v2448 = vpop.f32.mrb[0].mxu0
        %v2449 = vadd.f32 0.0, %v2448
        %v2450 = vpop.f32.mrb[0].mxu0
        %v2451 = vpop.f32.mrb[0].mxu0
        %v2452 = vadd.f32 0.0, %v2451
        %v2453 = vpop.f32.mrb[0].mxu0
        %2454 = vmatprep.mubr.bf16.mxu0 0
        %2455 = vmatmul.mubr.bf16.gmra.mrb[0].mxu0 %v842
        %v2456 = vpop.f32.mrb[0].mxu0
        %v2457 = vadd.f32 0.0, %v2456
        %v2458 = vpop.f32.mrb[0].mxu0
        %v2459 = vpop.f32.mrb[0].mxu0
        %v2460 = vadd.f32 0.0, %v2459
        %v2461 = vpop.f32.mrb[0].mxu0
        %2462 = vmatprep.mubr.bf16.mxu0 0
        %2463 = vmatmul.mubr.bf16.gmra.mrb[0].mxu0 %v845
        %v2464 = vpop.f32.mrb[0].mxu0
        %v2465 = vadd.f32 0.0, %v2464
        %v2466 = vpop.f32.mrb[0].mxu0
        %v2467 = vpop.f32.mrb[0].mxu0
        %v2468 = vadd.f32 0.0, %v2467
        %v2469 = vpop.f32.mrb[0].mxu0
        %2470 = vmatprep.mubr.bf16.mxu0 0
        %2471 = vmatmul.mubr.bf16.gmra.mrb[0].mxu0 %v1659
        %v2472 = vpop.f32.mrb[0].mxu0
        %v2473 = vadd.f32 0.0, %v2472
        %v2474 = vpop.f32.mrb[0].mxu0
        %v2475 = vpop.f32.mrb[0].mxu0
        %v2476 = vadd.f32 0.0, %v2475
        %v2477 = vpop.f32.mrb[0].mxu0
        %2478 = vmatprep.mubr.bf16.mxu0 0
        %2479 = vmatmul.mubr.bf16.gmra.mrb[0].mxu0 %v2385
        %v2480 = vpop.f32.mrb[0].mxu0
        %v2481 = vadd.f32 0.0, %v2480
        %v2482 = vpop.f32.mrb[0].mxu0
        %v2483 = vpop.f32.mrb[0].mxu0
        %v2484 = vadd.f32 0.0, %v2483
        %v2485 = vpop.f32.mrb[0].mxu0
        %2486 = vdwg.mxu0
        %v2487 = vadd.f32 %v2355, %v2425
        %v2488 = vadd.f32 %v2356, %v2428
        %v2489 = vadd.f32 %v2357, %v2433
        %v2490 = vadd.f32 %v2358, %v2436
        %v2491 = vadd.f32 %v2359, %v2441
        %v2492 = vadd.f32 %v2360, %v2444
        %v2493 = vadd.f32 %v2361, %v2449
        %v2494 = vadd.f32 %v2362, %v2452
        %v2495 = vadd.f32 %v2363, %v2457
        %v2496 = vadd.f32 %v2364, %v2460
        %v2497 = vadd.f32 %v2365, %v2465
        %v2498 = vadd.f32 %v2366, %v2468
        %v2499 = vadd.f32 %v2367, %v2473
        %v2500 = vadd.f32 %v2368, %v2476
        %v2501 = vadd.f32 %v2369, %v2481
        %v2502 = vadd.f32 %v2370, %v2484
        %v2504 = vlaneseq
        %v2505 = vshrl.u32 %v2504, 7
        %v2506 = vsub.s32 0, %v2505
        %v2507 = vrot.slane %v215, %v2506
        %v2509 = vadd.f32 %v1307, %v2507
        %v2510 = vadd.f32 %v1308, %v2507
        %v2511 = vadd.f32 %v1309, %v2507
        %v2512 = vadd.f32 %v1310, %v2507
        %v2513 = vadd.f32 %v1311, %v2507
        %v2514 = vadd.f32 %v1312, %v2507
        %v2515 = vadd.f32 %v1313, %v2507
        %v2516 = vadd.f32 %v1314, %v2507
        %v2517 = vadd.f32 %v1315, %v2507
        %v2518 = vadd.f32 %v1316, %v2507
        %v2519 = vadd.f32 %v1317, %v2507
        %v2520 = vadd.f32 %v1318, %v2507
        %v2521 = vadd.f32 %v1319, %v2507
        %v2522 = vadd.f32 %v1320, %v2507
        %v2523 = vadd.f32 %v1321, %v2507
        %v2524 = vadd.f32 %v1322, %v2507
        %2525 = vst.msk [vmem:[%s173] sm:$0xff] %vm438, %v2509
        %2526 = vst.msk [vmem:[%s173 + $0x8] sm:$0xff] %vm438, %v2510
        %2527 = vst.msk [vmem:[%s173 + $0x10] sm:$0xff] %vm438, %v2511
        %2528 = vst.msk [vmem:[%s173 + $0x18] sm:$0xff] %vm438, %v2512
        %2529 = vst.msk [vmem:[%s173 + $0x20] sm:$0xff] %vm438, %v2513
        %2530 = vst.msk [vmem:[%s173 + $0x28] sm:$0xff] %vm438, %v2514
        %2531 = vst.msk [vmem:[%s173 + $0x30] sm:$0xff] %vm438, %v2515
        %2532 = vst.msk [vmem:[%s173 + $0x38] sm:$0xff] %vm438, %v2516
        %2533 = vst.msk [vmem:[%s173 + $0x40] sm:$0xff] %vm438, %v2517
        %2534 = vst.msk [vmem:[%s173 + $0x48] sm:$0xff] %vm438, %v2518
        %2535 = vst.msk [vmem:[%s173 + $0x50] sm:$0xff] %vm438, %v2519
        %2536 = vst.msk [vmem:[%s173 + $0x58] sm:$0xff] %vm438, %v2520
        %2537 = vst.msk [vmem:[%s173 + $0x60] sm:$0xff] %vm438, %v2521
        %2538 = vst.msk [vmem:[%s173 + $0x68] sm:$0xff] %vm438, %v2522
        %2539 = vst.msk [vmem:[%s173 + $0x70] sm:$0xff] %vm438, %v2523
        %2540 = vst.msk [vmem:[%s173 + $0x78] sm:$0xff] %vm438, %v2524
        %v2541 = vadd.f32 %v1761, %v2507
        %v2542 = vadd.f32 %v1762, %v2507
        %v2543 = vadd.f32 %v1763, %v2507
        %v2544 = vadd.f32 %v1764, %v2507
        %v2545 = vadd.f32 %v1765, %v2507
        %v2546 = vadd.f32 %v1766, %v2507
        %v2547 = vadd.f32 %v1767, %v2507
        %v2548 = vadd.f32 %v1768, %v2507
        %v2549 = vadd.f32 %v1769, %v2507
        %v2550 = vadd.f32 %v1770, %v2507
        %v2551 = vadd.f32 %v1771, %v2507
        %v2552 = vadd.f32 %v1772, %v2507
        %v2553 = vadd.f32 %v1773, %v2507
        %v2554 = vadd.f32 %v1774, %v2507
        %v2555 = vadd.f32 %v1775, %v2507
        %v2556 = vadd.f32 %v1776, %v2507
        %s2557 = scalar_lea.vmem %s173, 128 [#allocation2]
        %2558 = vst.msk [vmem:[%s2557] sm:$0xff] %vm438, %v2541
        %2559 = vst.msk [vmem:[%s2557 + $0x8] sm:$0xff] %vm438, %v2542
        %2560 = vst.msk [vmem:[%s2557 + $0x10] sm:$0xff] %vm438, %v2543
        %2561 = vst.msk [vmem:[%s2557 + $0x18] sm:$0xff] %vm438, %v2544
        %2562 = vst.msk [vmem:[%s2557 + $0x20] sm:$0xff] %vm438, %v2545
        %2563 = vst.msk [vmem:[%s2557 + $0x28] sm:$0xff] %vm438, %v2546
        %2564 = vst.msk [vmem:[%s2557 + $0x30] sm:$0xff] %vm438, %v2547
        %2565 = vst.msk [vmem:[%s2557 + $0x38] sm:$0xff] %vm438, %v2548
        %2566 = vst.msk [vmem:[%s2557 + $0x40] sm:$0xff] %vm438, %v2549
        %2567 = vst.msk [vmem:[%s2557 + $0x48] sm:$0xff] %vm438, %v2550
        %2568 = vst.msk [vmem:[%s2557 + $0x50] sm:$0xff] %vm438, %v2551
        %2569 = vst.msk [vmem:[%s2557 + $0x58] sm:$0xff] %vm438, %v2552
        %2570 = vst.msk [vmem:[%s2557 + $0x60] sm:$0xff] %vm438, %v2553
        %2571 = vst.msk [vmem:[%s2557 + $0x68] sm:$0xff] %vm438, %v2554
        %2572 = vst.msk [vmem:[%s2557 + $0x70] sm:$0xff] %vm438, %v2555
        %2573 = vst.msk [vmem:[%s2557 + $0x78] sm:$0xff] %vm438, %v2556
        %v2574 = vadd.f32 %v2237, %v2507
        %v2575 = vadd.f32 %v2238, %v2507
        %v2576 = vadd.f32 %v2239, %v2507
        %v2577 = vadd.f32 %v2240, %v2507
        %v2578 = vadd.f32 %v2241, %v2507
        %v2579 = vadd.f32 %v2242, %v2507
        %v2580 = vadd.f32 %v2243, %v2507
        %v2581 = vadd.f32 %v2244, %v2507
        %v2582 = vadd.f32 %v2245, %v2507
        %v2583 = vadd.f32 %v2246, %v2507
        %v2584 = vadd.f32 %v2247, %v2507
        %v2585 = vadd.f32 %v2248, %v2507
        %v2586 = vadd.f32 %v2249, %v2507
        %v2587 = vadd.f32 %v2250, %v2507
        %v2588 = vadd.f32 %v2251, %v2507
        %v2589 = vadd.f32 %v2252, %v2507
        %s2590 = scalar_lea.vmem %s173, 256 [#allocation2]
        %2591 = vst.msk [vmem:[%s2590] sm:$0xff] %vm438, %v2574
        %2592 = vst.msk [vmem:[%s2590 + $0x8] sm:$0xff] %vm438, %v2575
        %2593 = vst.msk [vmem:[%s2590 + $0x10] sm:$0xff] %vm438, %v2576
        %2594 = vst.msk [vmem:[%s2590 + $0x18] sm:$0xff] %vm438, %v2577
        %2595 = vst.msk [vmem:[%s2590 + $0x20] sm:$0xff] %vm438, %v2578
        %2596 = vst.msk [vmem:[%s2590 + $0x28] sm:$0xff] %vm438, %v2579
        %2597 = vst.msk [vmem:[%s2590 + $0x30] sm:$0xff] %vm438, %v2580
        %2598 = vst.msk [vmem:[%s2590 + $0x38] sm:$0xff] %vm438, %v2581
        %2599 = vst.msk [vmem:[%s2590 + $0x40] sm:$0xff] %vm438, %v2582
        %2600 = vst.msk [vmem:[%s2590 + $0x48] sm:$0xff] %vm438, %v2583
        %2601 = vst.msk [vmem:[%s2590 + $0x50] sm:$0xff] %vm438, %v2584
        %2602 = vst.msk [vmem:[%s2590 + $0x58] sm:$0xff] %vm438, %v2585
        %2603 = vst.msk [vmem:[%s2590 + $0x60] sm:$0xff] %vm438, %v2586
        %2604 = vst.msk [vmem:[%s2590 + $0x68] sm:$0xff] %vm438, %v2587
        %2605 = vst.msk [vmem:[%s2590 + $0x70] sm:$0xff] %vm438, %v2588
        %2606 = vst.msk [vmem:[%s2590 + $0x78] sm:$0xff] %vm438, %v2589
        %v2607 = vadd.f32 %v2487, %v2507
        %v2608 = vadd.f32 %v2488, %v2507
        %v2609 = vadd.f32 %v2489, %v2507
        %v2610 = vadd.f32 %v2490, %v2507
        %v2611 = vadd.f32 %v2491, %v2507
        %v2612 = vadd.f32 %v2492, %v2507
        %v2613 = vadd.f32 %v2493, %v2507
        %v2614 = vadd.f32 %v2494, %v2507
        %v2615 = vadd.f32 %v2495, %v2507
        %v2616 = vadd.f32 %v2496, %v2507
        %v2617 = vadd.f32 %v2497, %v2507
        %v2618 = vadd.f32 %v2498, %v2507
        %v2619 = vadd.f32 %v2499, %v2507
        %v2620 = vadd.f32 %v2500, %v2507
        %v2621 = vadd.f32 %v2501, %v2507
        %v2622 = vadd.f32 %v2502, %v2507
        %s2623 = scalar_lea.vmem %s173, 384 [#allocation2]
        %2624 = vst.msk [vmem:[%s2623] sm:$0xff] %vm438, %v2607
        %2625 = vst.msk [vmem:[%s2623 + $0x8] sm:$0xff] %vm438, %v2608
        %2626 = vst.msk [vmem:[%s2623 + $0x10] sm:$0xff] %vm438, %v2609
        %2627 = vst.msk [vmem:[%s2623 + $0x18] sm:$0xff] %vm438, %v2610
        %2628 = vst.msk [vmem:[%s2623 + $0x20] sm:$0xff] %vm438, %v2611
        %2629 = vst.msk [vmem:[%s2623 + $0x28] sm:$0xff] %vm438, %v2612
        %2630 = vst.msk [vmem:[%s2623 + $0x30] sm:$0xff] %vm438, %v2613
        %2631 = vst.msk [vmem:[%s2623 + $0x38] sm:$0xff] %vm438, %v2614
        %2632 = vst.msk [vmem:[%s2623 + $0x40] sm:$0xff] %vm438, %v2615
        %2633 = vst.msk [vmem:[%s2623 + $0x48] sm:$0xff] %vm438, %v2616
        %2634 = vst.msk [vmem:[%s2623 + $0x50] sm:$0xff] %vm438, %v2617
        %2635 = vst.msk [vmem:[%s2623 + $0x58] sm:$0xff] %vm438, %v2618
        %2636 = vst.msk [vmem:[%s2623 + $0x60] sm:$0xff] %vm438, %v2619
        %2637 = vst.msk [vmem:[%s2623 + $0x68] sm:$0xff] %vm438, %v2620
        %2638 = vst.msk [vmem:[%s2623 + $0x70] sm:$0xff] %vm438, %v2621
        %2639 = vst.msk [vmem:[%s2623 + $0x78] sm:$0xff] %vm438, %v2622
        %s2640 = sand.u32 %s104, 1
        %s2641 = sand.u32 %s104, 1
        %s2642 = smul.addr %s2641, 512
        %s2643 = scalar_lea.vmem [#allocation2], %s2642
        // Predicated region
        $region33: #{upsample_forward.1} parent=31 // pred_check
          %p2644 = pneg %p114
        $region34: #{upsample_forward.1} parent=31 // pred_check_branch
          %2646 = sbr.rel (%p2644) target = $region36
        $region35: #{upsample_forward.1} parent=31 // pred_region
          %s2647 = smul.u32 16, %s19
          %s2648 = smul.addr %s18, 128
          %s2649 = sadd.s32 %s2647, %s2648
          %s2650 = smul.addr %s2649, 8
          %s2651 = scalar_lea.vmem %s3, %s2650
          // Predicated region
          $region37: #{upsample_forward.1} parent=35 // pred_check
            _
          $region38: #{upsample_forward.1} parent=35 // pred_check_branch
            %2653 = sbr.rel (0) target = $region40
          $region39: #{upsample_forward.1} parent=35 // pred_region
            // Predicated region
            $region41: #{upsample_forward.1} parent=39 // pred_check
              _
            $region42: #{upsample_forward.1} parent=39 // pred_check_branch
              %2655 = sbr.rel (0) target = $region44
            $region43: #{upsample_forward.1} parent=39 // pred_region
              // Predicated region
              $region56: #{upsample_forward.1} parent=43 // pred_check
                _
              $region57: #{upsample_forward.1} parent=43 // pred_check_branch
                %2796 = sbr.rel (0) target = $region59
              $region58: #{upsample_forward.1} parent=43 // pred_region
                loop: start=0, step=1, limit=1
                $region60: #{upsample_forward.1} parent=58 // loop_pre_header
                  _
                $region61: #{upsample_forward.1} parent=58 // loop_header
                  %s2798 = sphi 0, %s2802
                  %p2799 = scmp.ge.s32.totalorder %s2798, 1
                  %s2803 = sphi %s2643, %s2643
                  %s2804 = sphi %s2651, %s2651
                $region62: #{upsample_forward.1} parent=58 // loop_header_branch
                  %2801 = sbr.rel (%p2799) target = $region66
                $region63: #{upsample_forward.1} parent=58 // loop_body
                  %v2805 = vld [vmem:[%s2803] sm:$0xff]
                  %2806 = vst [vmem:[%s2804] sm:$0xff] %v2805
                  %v2807 = vld [vmem:[%s2803 + $0x8] sm:$0xff]
                  %2808 = vst [vmem:[%s2804 + $0x8] sm:$0xff] %v2807
                  %v2809 = vld [vmem:[%s2803 + $0x10] sm:$0xff]
                  %2810 = vst [vmem:[%s2804 + $0x10] sm:$0xff] %v2809
                  %v2811 = vld [vmem:[%s2803 + $0x18] sm:$0xff]
                  %2812 = vst [vmem:[%s2804 + $0x18] sm:$0xff] %v2811
                  %v2813 = vld [vmem:[%s2803 + $0x20] sm:$0xff]
                  %2814 = vst [vmem:[%s2804 + $0x20] sm:$0xff] %v2813
                  %v2815 = vld [vmem:[%s2803 + $0x28] sm:$0xff]
                  %2816 = vst [vmem:[%s2804 + $0x28] sm:$0xff] %v2815
                  %v2817 = vld [vmem:[%s2803 + $0x30] sm:$0xff]
                  %2818 = vst [vmem:[%s2804 + $0x30] sm:$0xff] %v2817
                  %v2819 = vld [vmem:[%s2803 + $0x38] sm:$0xff]
                  %2820 = vst [vmem:[%s2804 + $0x38] sm:$0xff] %v2819
                  %v2821 = vld [vmem:[%s2803 + $0x40] sm:$0xff]
                  %2822 = vst [vmem:[%s2804 + $0x40] sm:$0xff] %v2821
                  %v2823 = vld [vmem:[%s2803 + $0x48] sm:$0xff]
                  %2824 = vst [vmem:[%s2804 + $0x48] sm:$0xff] %v2823
                  %v2825 = vld [vmem:[%s2803 + $0x50] sm:$0xff]
                  %2826 = vst [vmem:[%s2804 + $0x50] sm:$0xff] %v2825
                  %v2827 = vld [vmem:[%s2803 + $0x58] sm:$0xff]
                  %2828 = vst [vmem:[%s2804 + $0x58] sm:$0xff] %v2827
                  %v2829 = vld [vmem:[%s2803 + $0x60] sm:$0xff]
                  %2830 = vst [vmem:[%s2804 + $0x60] sm:$0xff] %v2829
                  %v2831 = vld [vmem:[%s2803 + $0x68] sm:$0xff]
                  %2832 = vst [vmem:[%s2804 + $0x68] sm:$0xff] %v2831
                  %v2833 = vld [vmem:[%s2803 + $0x70] sm:$0xff]
                  %2834 = vst [vmem:[%s2804 + $0x70] sm:$0xff] %v2833
                  %v2835 = vld [vmem:[%s2803 + $0x78] sm:$0xff]
                  %2836 = vst [vmem:[%s2804 + $0x78] sm:$0xff] %v2835
                  %v2837 = vld [vmem:[%s2803 + $0x80] sm:$0xff]
                  %2838 = vst [vmem:[%s2804 + $0x100] sm:$0xff] %v2837
                  %v2839 = vld [vmem:[%s2803 + $0x88] sm:$0xff]
                  %2840 = vst [vmem:[%s2804 + $0x108] sm:$0xff] %v2839
                  %v2841 = vld [vmem:[%s2803 + $0x90] sm:$0xff]
                  %2842 = vst [vmem:[%s2804 + $0x110] sm:$0xff] %v2841
                  %v2843 = vld [vmem:[%s2803 + $0x98] sm:$0xff]
                  %2844 = vst [vmem:[%s2804 + $0x118] sm:$0xff] %v2843
                  %v2845 = vld [vmem:[%s2803 + $0xa0] sm:$0xff]
                  %2846 = vst [vmem:[%s2804 + $0x120] sm:$0xff] %v2845
                  %v2847 = vld [vmem:[%s2803 + $0xa8] sm:$0xff]
                  %2848 = vst [vmem:[%s2804 + $0x128] sm:$0xff] %v2847
                  %v2849 = vld [vmem:[%s2803 + $0xb0] sm:$0xff]
                  %2850 = vst [vmem:[%s2804 + $0x130] sm:$0xff] %v2849
                  %v2851 = vld [vmem:[%s2803 + $0xb8] sm:$0xff]
                  %2852 = vst [vmem:[%s2804 + $0x138] sm:$0xff] %v2851
                  %v2853 = vld [vmem:[%s2803 + $0xc0] sm:$0xff]
                  %2854 = vst [vmem:[%s2804 + $0x140] sm:$0xff] %v2853
                  %v2855 = vld [vmem:[%s2803 + $0xc8] sm:$0xff]
                  %2856 = vst [vmem:[%s2804 + $0x148] sm:$0xff] %v2855
                  %v2857 = vld [vmem:[%s2803 + $0xd0] sm:$0xff]
                  %2858 = vst [vmem:[%s2804 + $0x150] sm:$0xff] %v2857
                  %v2859 = vld [vmem:[%s2803 + $0xd8] sm:$0xff]
                  %2860 = vst [vmem:[%s2804 + $0x158] sm:$0xff] %v2859
                  %v2861 = vld [vmem:[%s2803 + $0xe0] sm:$0xff]
                  %2862 = vst [vmem:[%s2804 + $0x160] sm:$0xff] %v2861
                  %v2863 = vld [vmem:[%s2803 + $0xe8] sm:$0xff]
                  %2864 = vst [vmem:[%s2804 + $0x168] sm:$0xff] %v2863
                  %v2865 = vld [vmem:[%s2803 + $0xf0] sm:$0xff]
                  %2866 = vst [vmem:[%s2804 + $0x170] sm:$0xff] %v2865
                  %v2867 = vld [vmem:[%s2803 + $0xf8] sm:$0xff]
                  %2868 = vst [vmem:[%s2804 + $0x178] sm:$0xff] %v2867
                  %v2869 = vld [vmem:[%s2803 + $0x100] sm:$0xff]
                  %2870 = vst [vmem:[%s2804 + $0x200] sm:$0xff] %v2869
                  %v2871 = vld [vmem:[%s2803 + $0x108] sm:$0xff]
                  %2872 = vst [vmem:[%s2804 + $0x208] sm:$0xff] %v2871
                  %v2873 = vld [vmem:[%s2803 + $0x110] sm:$0xff]
                  %2874 = vst [vmem:[%s2804 + $0x210] sm:$0xff] %v2873
                  %v2875 = vld [vmem:[%s2803 + $0x118] sm:$0xff]
                  %2876 = vst [vmem:[%s2804 + $0x218] sm:$0xff] %v2875
                  %v2877 = vld [vmem:[%s2803 + $0x120] sm:$0xff]
                  %2878 = vst [vmem:[%s2804 + $0x220] sm:$0xff] %v2877
                  %v2879 = vld [vmem:[%s2803 + $0x128] sm:$0xff]
                  %2880 = vst [vmem:[%s2804 + $0x228] sm:$0xff] %v2879
                  %v2881 = vld [vmem:[%s2803 + $0x130] sm:$0xff]
                  %2882 = vst [vmem:[%s2804 + $0x230] sm:$0xff] %v2881
                  %v2883 = vld [vmem:[%s2803 + $0x138] sm:$0xff]
                  %2884 = vst [vmem:[%s2804 + $0x238] sm:$0xff] %v2883
                  %v2885 = vld [vmem:[%s2803 + $0x140] sm:$0xff]
                  %2886 = vst [vmem:[%s2804 + $0x240] sm:$0xff] %v2885
                  %v2887 = vld [vmem:[%s2803 + $0x148] sm:$0xff]
                  %2888 = vst [vmem:[%s2804 + $0x248] sm:$0xff] %v2887
                  %v2889 = vld [vmem:[%s2803 + $0x150] sm:$0xff]
                  %2890 = vst [vmem:[%s2804 + $0x250] sm:$0xff] %v2889
                  %v2891 = vld [vmem:[%s2803 + $0x158] sm:$0xff]
                  %2892 = vst [vmem:[%s2804 + $0x258] sm:$0xff] %v2891
                  %v2893 = vld [vmem:[%s2803 + $0x160] sm:$0xff]
                  %2894 = vst [vmem:[%s2804 + $0x260] sm:$0xff] %v2893
                  %v2895 = vld [vmem:[%s2803 + $0x168] sm:$0xff]
                  %2896 = vst [vmem:[%s2804 + $0x268] sm:$0xff] %v2895
                  %v2897 = vld [vmem:[%s2803 + $0x170] sm:$0xff]
                  %2898 = vst [vmem:[%s2804 + $0x270] sm:$0xff] %v2897
                  %v2899 = vld [vmem:[%s2803 + $0x178] sm:$0xff]
                  %2900 = vst [vmem:[%s2804 + $0x278] sm:$0xff] %v2899
                  %v2901 = vld [vmem:[%s2803 + $0x180] sm:$0xff]
                  %2902 = vst [vmem:[%s2804 + $0x300] sm:$0xff] %v2901
                  %v2903 = vld [vmem:[%s2803 + $0x188] sm:$0xff]
                  %2904 = vst [vmem:[%s2804 + $0x308] sm:$0xff] %v2903
                  %v2905 = vld [vmem:[%s2803 + $0x190] sm:$0xff]
                  %2906 = vst [vmem:[%s2804 + $0x310] sm:$0xff] %v2905
                  %v2907 = vld [vmem:[%s2803 + $0x198] sm:$0xff]
                  %2908 = vst [vmem:[%s2804 + $0x318] sm:$0xff] %v2907
                  %v2909 = vld [vmem:[%s2803 + $0x1a0] sm:$0xff]
                  %2910 = vst [vmem:[%s2804 + $0x320] sm:$0xff] %v2909
                  %v2911 = vld [vmem:[%s2803 + $0x1a8] sm:$0xff]
                  %2912 = vst [vmem:[%s2804 + $0x328] sm:$0xff] %v2911
                  %v2913 = vld [vmem:[%s2803 + $0x1b0] sm:$0xff]
                  %2914 = vst [vmem:[%s2804 + $0x330] sm:$0xff] %v2913
                  %v2915 = vld [vmem:[%s2803 + $0x1b8] sm:$0xff]
                  %2916 = vst [vmem:[%s2804 + $0x338] sm:$0xff] %v2915
                  %v2917 = vld [vmem:[%s2803 + $0x1c0] sm:$0xff]
                  %2918 = vst [vmem:[%s2804 + $0x340] sm:$0xff] %v2917
                  %v2919 = vld [vmem:[%s2803 + $0x1c8] sm:$0xff]
                  %2920 = vst [vmem:[%s2804 + $0x348] sm:$0xff] %v2919
                  %v2921 = vld [vmem:[%s2803 + $0x1d0] sm:$0xff]
                  %2922 = vst [vmem:[%s2804 + $0x350] sm:$0xff] %v2921
                  %v2923 = vld [vmem:[%s2803 + $0x1d8] sm:$0xff]
                  %2924 = vst [vmem:[%s2804 + $0x358] sm:$0xff] %v2923
                  %v2925 = vld [vmem:[%s2803 + $0x1e0] sm:$0xff]
                  %2926 = vst [vmem:[%s2804 + $0x360] sm:$0xff] %v2925
                  %v2927 = vld [vmem:[%s2803 + $0x1e8] sm:$0xff]
                  %2928 = vst [vmem:[%s2804 + $0x368] sm:$0xff] %v2927
                  %v2929 = vld [vmem:[%s2803 + $0x1f0] sm:$0xff]
                  %2930 = vst [vmem:[%s2804 + $0x370] sm:$0xff] %v2929
                  %v2931 = vld [vmem:[%s2803 + $0x1f8] sm:$0xff]
                  %2932 = vst [vmem:[%s2804 + $0x378] sm:$0xff] %v2931
                $region64: #{upsample_forward.1} parent=58 // loop_footer
                  %s2802 = sadd.s32 1, %s2798
                $region65: #{upsample_forward.1} parent=58 // loop_footer_branch
                  %2797 = sbr.rel target = $region61
                $region66: #{upsample_forward.1} parent=58 // loop_exit
                  _
              $region59: #{upsample_forward.1} parent=43 // pred_fallthru
                _
              // Predicated region
              $region67: #{upsample_forward.1} parent=43 // pred_check
                _
              $region68: #{upsample_forward.1} parent=43 // pred_check_branch
                %2934 = sbr.rel target = $region70
              $region69: #{upsample_forward.1} parent=43 // pred_region
                _
              $region70: #{upsample_forward.1} parent=43 // pred_fallthru
                _
            $region44: #{upsample_forward.1} parent=39 // pred_fallthru
              _
            // Predicated region
            $region45: #{upsample_forward.1} parent=39 // pred_check
              _
            $region46: #{upsample_forward.1} parent=39 // pred_check_branch
              %2657 = sbr.rel target = $region48
            $region47: #{upsample_forward.1} parent=39 // pred_region
              loop: start=0, step=1, limit=1
              $region49: #{upsample_forward.1} parent=47 // loop_pre_header
                _
              $region50: #{upsample_forward.1} parent=47 // loop_header
                %s2660 = sphi 0, %s2664
                %p2661 = scmp.ge.s32.totalorder %s2660, 1
                %s2665 = sphi %s2643, %s2643
                %s2666 = sphi %s2651, %s2651
              $region51: #{upsample_forward.1} parent=47 // loop_header_branch
                %2663 = sbr.rel (%p2661) target = $region55
              $region52: #{upsample_forward.1} parent=47 // loop_body
                %v2667 = vld [vmem:[%s2665] sm:$0xff]
                %2668 = vst [vmem:[%s2666] sm:$0xff] %v2667
                %v2669 = vld [vmem:[%s2665 + $0x8] sm:$0xff]
                %2670 = vst [vmem:[%s2666 + $0x8] sm:$0xff] %v2669
                %v2671 = vld [vmem:[%s2665 + $0x10] sm:$0xff]
                %2672 = vst [vmem:[%s2666 + $0x10] sm:$0xff] %v2671
                %v2673 = vld [vmem:[%s2665 + $0x18] sm:$0xff]
                %2674 = vst [vmem:[%s2666 + $0x18] sm:$0xff] %v2673
                %v2675 = vld [vmem:[%s2665 + $0x20] sm:$0xff]
                %2676 = vst [vmem:[%s2666 + $0x20] sm:$0xff] %v2675
                %v2677 = vld [vmem:[%s2665 + $0x28] sm:$0xff]
                %2678 = vst [vmem:[%s2666 + $0x28] sm:$0xff] %v2677
                %v2679 = vld [vmem:[%s2665 + $0x30] sm:$0xff]
                %2680 = vst [vmem:[%s2666 + $0x30] sm:$0xff] %v2679
                %v2681 = vld [vmem:[%s2665 + $0x38] sm:$0xff]
                %2682 = vst [vmem:[%s2666 + $0x38] sm:$0xff] %v2681
                %v2683 = vld [vmem:[%s2665 + $0x40] sm:$0xff]
                %2684 = vst [vmem:[%s2666 + $0x40] sm:$0xff] %v2683
                %v2685 = vld [vmem:[%s2665 + $0x48] sm:$0xff]
                %2686 = vst [vmem:[%s2666 + $0x48] sm:$0xff] %v2685
                %v2687 = vld [vmem:[%s2665 + $0x50] sm:$0xff]
                %2688 = vst [vmem:[%s2666 + $0x50] sm:$0xff] %v2687
                %v2689 = vld [vmem:[%s2665 + $0x58] sm:$0xff]
                %2690 = vst [vmem:[%s2666 + $0x58] sm:$0xff] %v2689
                %v2691 = vld [vmem:[%s2665 + $0x60] sm:$0xff]
                %2692 = vst [vmem:[%s2666 + $0x60] sm:$0xff] %v2691
                %v2693 = vld [vmem:[%s2665 + $0x68] sm:$0xff]
                %2694 = vst [vmem:[%s2666 + $0x68] sm:$0xff] %v2693
                %v2695 = vld [vmem:[%s2665 + $0x70] sm:$0xff]
                %2696 = vst [vmem:[%s2666 + $0x70] sm:$0xff] %v2695
                %v2697 = vld [vmem:[%s2665 + $0x78] sm:$0xff]
                %2698 = vst [vmem:[%s2666 + $0x78] sm:$0xff] %v2697
                %v2699 = vld [vmem:[%s2665 + $0x80] sm:$0xff]
                %2700 = vst [vmem:[%s2666 + $0x100] sm:$0xff] %v2699
                %v2701 = vld [vmem:[%s2665 + $0x88] sm:$0xff]
                %2702 = vst [vmem:[%s2666 + $0x108] sm:$0xff] %v2701
                %v2703 = vld [vmem:[%s2665 + $0x90] sm:$0xff]
                %2704 = vst [vmem:[%s2666 + $0x110] sm:$0xff] %v2703
                %v2705 = vld [vmem:[%s2665 + $0x98] sm:$0xff]
                %2706 = vst [vmem:[%s2666 + $0x118] sm:$0xff] %v2705
                %v2707 = vld [vmem:[%s2665 + $0xa0] sm:$0xff]
                %2708 = vst [vmem:[%s2666 + $0x120] sm:$0xff] %v2707
                %v2709 = vld [vmem:[%s2665 + $0xa8] sm:$0xff]
                %2710 = vst [vmem:[%s2666 + $0x128] sm:$0xff] %v2709
                %v2711 = vld [vmem:[%s2665 + $0xb0] sm:$0xff]
                %2712 = vst [vmem:[%s2666 + $0x130] sm:$0xff] %v2711
                %v2713 = vld [vmem:[%s2665 + $0xb8] sm:$0xff]
                %2714 = vst [vmem:[%s2666 + $0x138] sm:$0xff] %v2713
                %v2715 = vld [vmem:[%s2665 + $0xc0] sm:$0xff]
                %2716 = vst [vmem:[%s2666 + $0x140] sm:$0xff] %v2715
                %v2717 = vld [vmem:[%s2665 + $0xc8] sm:$0xff]
                %2718 = vst [vmem:[%s2666 + $0x148] sm:$0xff] %v2717
                %v2719 = vld [vmem:[%s2665 + $0xd0] sm:$0xff]
                %2720 = vst [vmem:[%s2666 + $0x150] sm:$0xff] %v2719
                %v2721 = vld [vmem:[%s2665 + $0xd8] sm:$0xff]
                %2722 = vst [vmem:[%s2666 + $0x158] sm:$0xff] %v2721
                %v2723 = vld [vmem:[%s2665 + $0xe0] sm:$0xff]
                %2724 = vst [vmem:[%s2666 + $0x160] sm:$0xff] %v2723
                %v2725 = vld [vmem:[%s2665 + $0xe8] sm:$0xff]
                %2726 = vst [vmem:[%s2666 + $0x168] sm:$0xff] %v2725
                %v2727 = vld [vmem:[%s2665 + $0xf0] sm:$0xff]
                %2728 = vst [vmem:[%s2666 + $0x170] sm:$0xff] %v2727
                %v2729 = vld [vmem:[%s2665 + $0xf8] sm:$0xff]
                %2730 = vst [vmem:[%s2666 + $0x178] sm:$0xff] %v2729
                %v2731 = vld [vmem:[%s2665 + $0x100] sm:$0xff]
                %2732 = vst [vmem:[%s2666 + $0x200] sm:$0xff] %v2731
                %v2733 = vld [vmem:[%s2665 + $0x108] sm:$0xff]
                %2734 = vst [vmem:[%s2666 + $0x208] sm:$0xff] %v2733
                %v2735 = vld [vmem:[%s2665 + $0x110] sm:$0xff]
                %2736 = vst [vmem:[%s2666 + $0x210] sm:$0xff] %v2735
                %v2737 = vld [vmem:[%s2665 + $0x118] sm:$0xff]
                %2738 = vst [vmem:[%s2666 + $0x218] sm:$0xff] %v2737
                %v2739 = vld [vmem:[%s2665 + $0x120] sm:$0xff]
                %2740 = vst [vmem:[%s2666 + $0x220] sm:$0xff] %v2739
                %v2741 = vld [vmem:[%s2665 + $0x128] sm:$0xff]
                %2742 = vst [vmem:[%s2666 + $0x228] sm:$0xff] %v2741
                %v2743 = vld [vmem:[%s2665 + $0x130] sm:$0xff]
                %2744 = vst [vmem:[%s2666 + $0x230] sm:$0xff] %v2743
                %v2745 = vld [vmem:[%s2665 + $0x138] sm:$0xff]
                %2746 = vst [vmem:[%s2666 + $0x238] sm:$0xff] %v2745
                %v2747 = vld [vmem:[%s2665 + $0x140] sm:$0xff]
                %2748 = vst [vmem:[%s2666 + $0x240] sm:$0xff] %v2747
                %v2749 = vld [vmem:[%s2665 + $0x148] sm:$0xff]
                %2750 = vst [vmem:[%s2666 + $0x248] sm:$0xff] %v2749
                %v2751 = vld [vmem:[%s2665 + $0x150] sm:$0xff]
                %2752 = vst [vmem:[%s2666 + $0x250] sm:$0xff] %v2751
                %v2753 = vld [vmem:[%s2665 + $0x158] sm:$0xff]
                %2754 = vst [vmem:[%s2666 + $0x258] sm:$0xff] %v2753
                %v2755 = vld [vmem:[%s2665 + $0x160] sm:$0xff]
                %2756 = vst [vmem:[%s2666 + $0x260] sm:$0xff] %v2755
                %v2757 = vld [vmem:[%s2665 + $0x168] sm:$0xff]
                %2758 = vst [vmem:[%s2666 + $0x268] sm:$0xff] %v2757
                %v2759 = vld [vmem:[%s2665 + $0x170] sm:$0xff]
                %2760 = vst [vmem:[%s2666 + $0x270] sm:$0xff] %v2759
                %v2761 = vld [vmem:[%s2665 + $0x178] sm:$0xff]
                %2762 = vst [vmem:[%s2666 + $0x278] sm:$0xff] %v2761
                %v2763 = vld [vmem:[%s2665 + $0x180] sm:$0xff]
                %2764 = vst [vmem:[%s2666 + $0x300] sm:$0xff] %v2763
                %v2765 = vld [vmem:[%s2665 + $0x188] sm:$0xff]
                %2766 = vst [vmem:[%s2666 + $0x308] sm:$0xff] %v2765
                %v2767 = vld [vmem:[%s2665 + $0x190] sm:$0xff]
                %2768 = vst [vmem:[%s2666 + $0x310] sm:$0xff] %v2767
                %v2769 = vld [vmem:[%s2665 + $0x198] sm:$0xff]
                %2770 = vst [vmem:[%s2666 + $0x318] sm:$0xff] %v2769
                %v2771 = vld [vmem:[%s2665 + $0x1a0] sm:$0xff]
                %2772 = vst [vmem:[%s2666 + $0x320] sm:$0xff] %v2771
                %v2773 = vld [vmem:[%s2665 + $0x1a8] sm:$0xff]
                %2774 = vst [vmem:[%s2666 + $0x328] sm:$0xff] %v2773
                %v2775 = vld [vmem:[%s2665 + $0x1b0] sm:$0xff]
                %2776 = vst [vmem:[%s2666 + $0x330] sm:$0xff] %v2775
                %v2777 = vld [vmem:[%s2665 + $0x1b8] sm:$0xff]
                %2778 = vst [vmem:[%s2666 + $0x338] sm:$0xff] %v2777
                %v2779 = vld [vmem:[%s2665 + $0x1c0] sm:$0xff]
                %2780 = vst [vmem:[%s2666 + $0x340] sm:$0xff] %v2779
                %v2781 = vld [vmem:[%s2665 + $0x1c8] sm:$0xff]
                %2782 = vst [vmem:[%s2666 + $0x348] sm:$0xff] %v2781
                %v2783 = vld [vmem:[%s2665 + $0x1d0] sm:$0xff]
                %2784 = vst [vmem:[%s2666 + $0x350] sm:$0xff] %v2783
                %v2785 = vld [vmem:[%s2665 + $0x1d8] sm:$0xff]
                %2786 = vst [vmem:[%s2666 + $0x358] sm:$0xff] %v2785
                %v2787 = vld [vmem:[%s2665 + $0x1e0] sm:$0xff]
                %2788 = vst [vmem:[%s2666 + $0x360] sm:$0xff] %v2787
                %v2789 = vld [vmem:[%s2665 + $0x1e8] sm:$0xff]
                %2790 = vst [vmem:[%s2666 + $0x368] sm:$0xff] %v2789
                %v2791 = vld [vmem:[%s2665 + $0x1f0] sm:$0xff]
                %2792 = vst [vmem:[%s2666 + $0x370] sm:$0xff] %v2791
                %v2793 = vld [vmem:[%s2665 + $0x1f8] sm:$0xff]
                %2794 = vst [vmem:[%s2666 + $0x378] sm:$0xff] %v2793
              $region53: #{upsample_forward.1} parent=47 // loop_footer
                %s2664 = sadd.s32 1, %s2660
              $region54: #{upsample_forward.1} parent=47 // loop_footer_branch
                %2659 = sbr.rel target = $region50
              $region55: #{upsample_forward.1} parent=47 // loop_exit
                _
            $region48: #{upsample_forward.1} parent=39 // pred_fallthru
              _
          $region40: #{upsample_forward.1} parent=35 // pred_fallthru
            _
          %2935 = vnop
        $region36: #{upsample_forward.1} parent=31 // pred_fallthru
          _
      $region32: #{upsample_forward.1} parent=5 // pred_fallthru
        _
      %p2936 = scmp.le.s32.totalorder 2, %s9
      // Predicated region
      $region71: #{upsample_forward.1} parent=5 // pred_check
        %p2937 = pneg %p2936
      $region72: #{upsample_forward.1} parent=5 // pred_check_branch
        %2939 = sbr.rel (%p2937) target = $region74
      $region73: #{upsample_forward.1} parent=5 // pred_region
        %s2940 = ssub.s32 %s9, 2
        // Predicated region
        $region75: #{upsample_forward.1} parent=73 // pred_check
          %p2941 = pneg %p120
        $region76: #{upsample_forward.1} parent=73 // pred_check_branch
          %2943 = sbr.rel (%p2941) target = $region78
        $region77: #{upsample_forward.1} parent=73 // pred_region
          %s2944 = sand.u32 %s105, 1
          %s2945 = sand.u32 %s105, 1
          %s2946 = smul.addr %s2945, 512
          %s2947 = scalar_lea.vmem [#allocation2], %s2946
        $region78: #{upsample_forward.1} parent=73 // pred_fallthru
          _
      $region74: #{upsample_forward.1} parent=5 // pred_fallthru
        _
    $region6: #{upsample_forward.1} parent=1 // loop_footer
      %s13 = sadd.s32 1, %s9
    $region7: #{upsample_forward.1} parent=1 // loop_footer_branch
      %8 = sbr.rel target = $region3
    $region8: #{upsample_forward.1} parent=1 // loop_exit
      _

</llo_original>
